<compile_context>
chip_gen: v7x
topology: tpu7x:2x2x1
jax: 0.10.0
libtpu: 0.0.40
codegen_flags: <defaults>
</compile_context>

<pallas_src>
import functools

import jax
import jax.numpy as jnp
from jax.experimental import pallas as pl
from jax.experimental.pallas import tpu as pltpu

HIDDEN_DIM = 600
KERNEL_H = 4
KERNEL_W = 600   # == HIDDEN_DIM -> conv output width 1, flatten keeps NUM_FILTERS features
NUM_CLASSES = 3
NUM_FILTERS = 600


def simple_cnn_kernel(x_ref, wc_ref, bc_ref, w1_ref, b1_ref, w2_ref, b2_ref, out_ref,
                      *, batch, max_rlen):
    """Whole forward pass, batched across B (all operands resident in VMEM).

    x_ref  : (B*max_rlen, HIDDEN_DIM)              bf16  (row r = (b, h), r = b*max_rlen + h)
    wc_ref : (HIDDEN_DIM, KERNEL_H*NUM_FILTERS)    bf16  (N-block kh*F:(kh+1)*F = conv tap kh)
    bc_ref : (1, NUM_FILTERS)                      f32
    w1_ref : (NUM_FILTERS, max_rlen)               f32
    b1_ref : (1, max_rlen)                         f32
    w2_ref : (max_rlen, NUM_CLASSES)               f32
    b2_ref : (1, NUM_CLASSES)                      f32
    out_ref: (B, NUM_CLASSES)                      f32
    """
    h_out = max_rlen - KERNEL_H + 1
    x = x_ref[...]                                             # (B*max_rlen, D) bf16

    # Conv2d(1, F, (KERNEL_H, D)): ONE fused MXU matmul covering all KERNEL_H taps and all
    # batch rows (M = B*max_rlen, N = KERNEL_H*F).  f32 accumulation on the MXU.
    proj = jnp.dot(x, wc_ref[...], preferred_element_type=jnp.float32)
    proj = proj.reshape(batch, max_rlen, KERNEL_H * NUM_FILTERS)   # free: max_rlen % 8 == 0

    # conv[b, h, :] = sum_kh proj[b, h + kh, kh*F:(kh+1)*F]  — running-sum accumulator
    # (single live buffer), batched over B (no per-batch Python loop).
    conv = proj[:, 0:h_out, 0:NUM_FILTERS]                     # (B, h_out, F) f32
    for kh in range(1, KERNEL_H):
        conv = conv + proj[:, kh:kh + h_out,
                           kh * NUM_FILTERS:(kh + 1) * NUM_FILTERS]

    # Max-pool over h BEFORE bias + ReLU: valid because the conv bias is h-invariant and
    # ReLU is monotone, so ReLU(max_h(conv) + bias) == max_h(ReLU(conv + bias)).
    pooled = jnp.max(conv, axis=1)                             # (B, F)
    pooled = jnp.maximum(pooled + bc_ref[...], 0.0)            # conv bias added once, ReLU

    # Flatten is a no-op (conv output width is 1); Dropout is eval-mode identity.
    # fc1 + ReLU, fc2 — single batched matmuls, single batched output store.
    h1 = jnp.maximum(
        jnp.dot(pooled, w1_ref[...], preferred_element_type=jnp.float32) + b1_ref[...],
        0.0)                                                   # (B, max_rlen)
    out_ref[...] = (jnp.dot(h1, w2_ref[...], preferred_element_type=jnp.float32)
                    + b2_ref[...])                             # (B, NUM_CLASSES)


def simple_cnn_forward(x, wc, bc, w1, b1, w2, b2, *, max_rlen):
    """x: (B, max_rlen, HIDDEN_DIM) (channel dim of the NCHW input already squeezed).

    wc is the (KERNEL_H, HIDDEN_DIM, NUM_FILTERS) conv weight; it is fused here (one-time
    wrapper-side layout prep) so the kernel sees a single (D, KERNEL_H*F) matmul operand.
    """
    batch = x.shape[0]
    x2 = x.reshape(batch * max_rlen, HIDDEN_DIM)               # zero-cost row-major collapse
    # (D, KERNEL_H, F) -> (D, KERNEL_H*F): column kh*F + f holds wc[kh, :, f].
    wc_fused = jnp.transpose(wc, (1, 0, 2)).reshape(HIDDEN_DIM, KERNEL_H * NUM_FILTERS)

    kernel = functools.partial(simple_cnn_kernel, batch=batch, max_rlen=max_rlen)
    # No grid: each operand is mapped whole into VMEM once (single-buffered; ~4 MiB total
    # incl. lane padding).  For large batches, tile the batch with grid=(pl.cdiv(B, TB),),
    # dimension_semantics=("parallel",) (v7x megacore) and constant index_maps for
    # wc/w1/w2 so weights stay VMEM-resident across steps; also switch the (B, 3) output
    # to a lane-padded (B, 128) slab and slice [:, :3] in the wrapper.
    return pl.pallas_call(
        kernel,
        out_shape=jax.ShapeDtypeStruct((batch, NUM_CLASSES), jnp.float32),
        compiler_params=pltpu.CompilerParams(vmem_limit_bytes=16 * 1024 * 1024),
    )(x2, wc_fused, bc, w1, b1, w2, b2)


def reference_forward(x, wc, bc, w1, b1, w2, b2, *, max_rlen):
    """Pure-JAX reference with identical math (eval-mode dropout), original Wc layout."""
    h_out = max_rlen - KERNEL_H + 1
    conv = jnp.stack(
        [sum(x[:, h + kh, :] @ wc[kh] for kh in range(KERNEL_H)) for h in range(h_out)],
        axis=1,
    ) + bc                                     # (B, h_out, F)
    conv = jnp.maximum(conv, 0.0)
    pooled = jnp.max(conv, axis=1)             # (B, F)
    h1 = jnp.maximum(pooled @ w1 + b1, 0.0)    # (B, max_rlen)
    return h1 @ w2 + b2                        # (B, NUM_CLASSES)


if __name__ == "__main__":
    max_rlen = 8
    batch = 2

    key = jax.random.PRNGKey(0)
    kx, kwc, kbc, kw1, kb1, kw2, kb2 = jax.random.split(key, 7)

    # PyTorch-style NCHW input (B, 1, max_rlen, HIDDEN_DIM); channel squeezed for the kernel.
    x_nchw = jax.random.normal(kx, (batch, 1, max_rlen, HIDDEN_DIM), jnp.float32)
    x = x_nchw[:, 0, :, :].astype(jnp.bfloat16)                # (B, max_rlen, HIDDEN_DIM)

    # Conv weight stored bf16 (dominant HBM traffic); biases / small fc weights stay f32.
    wc = (0.02 * jax.random.normal(kwc, (KERNEL_H, HIDDEN_DIM, NUM_FILTERS),
                                   jnp.float32)).astype(jnp.bfloat16)
    bc = 0.02 * jax.random.normal(kbc, (1, NUM_FILTERS), jnp.float32)
    w1 = 0.02 * jax.random.normal(kw1, (NUM_FILTERS, max_rlen), jnp.float32)
    b1 = 0.02 * jax.random.normal(kb1, (1, max_rlen), jnp.float32)
    w2 = 0.02 * jax.random.normal(kw2, (max_rlen, NUM_CLASSES), jnp.float32)
    b2 = 0.02 * jax.random.normal(kb2, (1, NUM_CLASSES), jnp.float32)

    out = simple_cnn_forward(x, wc, bc, w1, b1, w2, b2, max_rlen=max_rlen)
    out = jax.block_until_ready(out)

    # Reference uses the same bf16-rounded x/Wc (cast up) so only accumulation order
    # differs from the MXU bf16 path.
    ref = reference_forward(x.astype(jnp.float32), wc.astype(jnp.float32),
                            bc, w1, b1, w2, b2, max_rlen=max_rlen)
    assert out.shape == (batch, NUM_CLASSES)
    assert jnp.allclose(out, ref, rtol=1e-2, atol=1e-2), "mismatch vs JAX reference"

    print("KERNEL_OK")
</pallas_src>

<mosaic_0001>
module attributes {stable_mosaic.version = 11 : i64} {
  func.func @simple_cnn_kernel(%arg0: memref<16x600xbf16, #tpu.memory_space<vmem>>, %arg1: memref<600x2400xbf16, #tpu.memory_space<vmem>>, %arg2: memref<1x600xf32, #tpu.memory_space<vmem>>, %arg3: memref<600x8xf32, #tpu.memory_space<vmem>>, %arg4: memref<1x8xf32, #tpu.memory_space<vmem>>, %arg5: memref<8x3xf32, #tpu.memory_space<vmem>>, %arg6: memref<1x3xf32, #tpu.memory_space<vmem>>, %arg7: memref<2x3xf32, #tpu.memory_space<vmem>>) attributes {dimension_semantics = [], scalar_prefetch = 0 : i64, scratch_operands = 0 : i64, tpu.core_type = #tpu.core_type<tc>} {
    %c0 = arith.constant 0 : index
    %c0_0 = arith.constant 0 : index
    %0 = vector.load %arg0[%c0, %c0_0] : memref<16x600xbf16, #tpu.memory_space<vmem>>, vector<16x600xbf16>
    %c0_1 = arith.constant 0 : index
    %c0_2 = arith.constant 0 : index
    %1 = vector.load %arg1[%c0_1, %c0_2] : memref<600x2400xbf16, #tpu.memory_space<vmem>>, vector<600x2400xbf16>
    %cst = arith.constant dense<0.000000e+00> : vector<16x2400xf32>
    %2 = tpu.matmul %0, %1, %cst {dimension_numbers = #tpu.dot_dimension_numbers<[1], [0], [0], [1], [0, 0, 1, 1], [], []>} : vector<16x600xbf16>, vector<600x2400xbf16>, vector<16x2400xf32> -> vector<16x2400xf32>
    %3 = vector.shape_cast %2 : vector<16x2400xf32> to vector<2x8x2400xf32>
    %4 = vector.extract_strided_slice %3 {offsets = [0, 0, 0], sizes = [2, 5, 600], strides = [1, 1, 1]} : vector<2x8x2400xf32> to vector<2x5x600xf32>
    %5 = vector.extract_strided_slice %3 {offsets = [0, 1, 600], sizes = [2, 5, 600], strides = [1, 1, 1]} : vector<2x8x2400xf32> to vector<2x5x600xf32>
    %6 = arith.addf %4, %5 : vector<2x5x600xf32>
    %7 = vector.extract_strided_slice %3 {offsets = [0, 2, 1200], sizes = [2, 5, 600], strides = [1, 1, 1]} : vector<2x8x2400xf32> to vector<2x5x600xf32>
    %8 = arith.addf %6, %7 : vector<2x5x600xf32>
    %9 = vector.extract_strided_slice %3 {offsets = [0, 3, 1800], sizes = [2, 5, 600], strides = [1, 1, 1]} : vector<2x8x2400xf32> to vector<2x5x600xf32>
    %10 = arith.addf %8, %9 : vector<2x5x600xf32>
    %cst_3 = arith.constant dense<0xFF800000> : vector<2x600xf32>
    %11 = vector.multi_reduction <maximumf>, %10, %cst_3 [1] : vector<2x5x600xf32> to vector<2x600xf32>
    %c0_4 = arith.constant 0 : index
    %c0_5 = arith.constant 0 : index
    %12 = vector.load %arg2[%c0_4, %c0_5] : memref<1x600xf32, #tpu.memory_space<vmem>>, vector<1x600xf32>
    %13 = vector.broadcast %12 : vector<1x600xf32> to vector<2x600xf32>
    %14 = arith.addf %11, %13 : vector<2x600xf32>
    %cst_6 = arith.constant 0.000000e+00 : f32
    %15 = vector.broadcast %cst_6 : f32 to vector<2x600xf32>
    %16 = arith.maximumf %14, %15 : vector<2x600xf32>
    %c0_7 = arith.constant 0 : index
    %c0_8 = arith.constant 0 : index
    %17 = vector.load %arg3[%c0_7, %c0_8] : memref<600x8xf32, #tpu.memory_space<vmem>>, vector<600x8xf32>
    %cst_9 = arith.constant dense<0.000000e+00> : vector<2x8xf32>
    %18 = tpu.matmul %16, %17, %cst_9 {dimension_numbers = #tpu.dot_dimension_numbers<[1], [0], [0], [1], [0, 0, 1, 1], [], []>} : vector<2x600xf32>, vector<600x8xf32>, vector<2x8xf32> -> vector<2x8xf32>
    %c0_10 = arith.constant 0 : index
    %c0_11 = arith.constant 0 : index
    %19 = vector.load %arg4[%c0_10, %c0_11] : memref<1x8xf32, #tpu.memory_space<vmem>>, vector<1x8xf32>
    %20 = vector.broadcast %19 : vector<1x8xf32> to vector<2x8xf32>
    %21 = arith.addf %18, %20 : vector<2x8xf32>
    %cst_12 = arith.constant 0.000000e+00 : f32
    %22 = vector.broadcast %cst_12 : f32 to vector<2x8xf32>
    %23 = arith.maximumf %21, %22 : vector<2x8xf32>
    %c0_13 = arith.constant 0 : index
    %c0_14 = arith.constant 0 : index
    %24 = vector.load %arg5[%c0_13, %c0_14] : memref<8x3xf32, #tpu.memory_space<vmem>>, vector<8x3xf32>
    %cst_15 = arith.constant dense<0.000000e+00> : vector<2x3xf32>
    %25 = tpu.matmul %23, %24, %cst_15 {dimension_numbers = #tpu.dot_dimension_numbers<[1], [0], [0], [1], [0, 0, 1, 1], [], []>} : vector<2x8xf32>, vector<8x3xf32>, vector<2x3xf32> -> vector<2x3xf32>
    %c0_16 = arith.constant 0 : index
    %c0_17 = arith.constant 0 : index
    %26 = vector.load %arg6[%c0_16, %c0_17] : memref<1x3xf32, #tpu.memory_space<vmem>>, vector<1x3xf32>
    %27 = vector.broadcast %26 : vector<1x3xf32> to vector<2x3xf32>
    %28 = arith.addf %25, %27 : vector<2x3xf32>
    %c0_18 = arith.constant 0 : index
    %c0_19 = arith.constant 0 : index
    %29 = vector.load %arg7[%c0_18, %c0_19] : memref<2x3xf32, #tpu.memory_space<vmem>>, vector<2x3xf32>
    tpu.vector_store %arg7[%c0_18, %c0_19], %28 {strides = array<i32>} : memref<2x3xf32, #tpu.memory_space<vmem>>, vector<2x3xf32>,
    return
  }
}

</mosaic_0001>

<llo_original>
// kernel: tpu_custom_call.1
$region0: #{tpu_custom_call.1}
  #allocation0 [shape = 'u32[]', space=smem, size = 0x4, offset = 0x4, fixed_abs, tag = 'smem constant byte address 0x4 - core index']
  #allocation1 [shape = 'u32[144,128]{1,0:T(1,128)}', space=vmem, size = 0x12000, scoped, tag = 'internal scratch']
  %s0 = inlined_call_operand.hbm [shape: bf16[16,600], index: 0, kind: input, shape index: {}]
  %s1 = inlined_call_operand.hbm [shape: bf16[600,2400], index: 1, kind: input, shape index: {}]
  %s2 = inlined_call_operand.hbm [shape: f32[1,600], index: 2, kind: input, shape index: {}]
  %s3 = inlined_call_operand.vmem [shape: f32[600,8], index: 3, kind: input, shape index: {}]
  %s4 = inlined_call_operand.hbm [shape: f32[1,8], index: 4, kind: input, shape index: {}]
  %s5 = inlined_call_operand.vmem [shape: f32[8,3], index: 5, kind: input, shape index: {}]
  %s6 = inlined_call_operand.hbm [shape: f32[1,3], index: 6, kind: input, shape index: {}]
  %s7 = inlined_call_operand.hbm [shape: f32[2,3], index: 7, kind: output, shape index: {}]
  %s8 = sld [smem:[#allocation0]]
  $region58: #{tpu_custom_call.1} parent=0
    _
  %s10 = ssub.s32 1, %s8
  %s11 = scalar_select 0, %s10, %s8
  $region1: #{tpu_custom_call.1} parent=0
    #allocation2 [shape = 'u8[20480]{0}', space=vmem, size = 0x5000, scoped, tag = 'input window, operand 0, single buffered']
    #allocation3 [shape = 's32[1]{0}', space=sflag, size = 0x4, scoped, tag = 'scoped memory for tpu_custom_call.1']
    #allocation4 [shape = 's32[1]{0}', space=sflag, size = 0x4, scoped, tag = 'scoped memory for tpu_custom_call.1']
    #allocation5 [shape = 'u8[2918400]{0}', space=vmem, size = 0x2c8800, scoped, tag = 'input window, operand 1, single buffered']
    #allocation6 [shape = 's32[1]{0}', space=sflag, size = 0x4, scoped, tag = 'scoped memory for tpu_custom_call.1']
    #allocation7 [shape = 'u8[2560]{0}', space=vmem, size = 0xc00, scoped, tag = 'input window, operand 2, single buffered']
    #allocation8 [shape = 'u8[512]{0}', space=vmem, size = 0x400, scoped, tag = 'input window, operand 4, single buffered']
    #allocation9 [shape = 's32[1]{0}', space=sflag, size = 0x4, scoped, tag = 'scoped memory for tpu_custom_call.1']
    #allocation10 [shape = 'u8[512]{0}', space=vmem, size = 0x400, scoped, tag = 'input window, operand 6, single buffered']
    #allocation11 [shape = 'u8[1024]{0}', space=vmem, size = 0x400, scoped, tag = 'output window, operand 0, single buffered']
    %12 = vsyncpa [#allocation3], 0
    %13 = vsyncpa [#allocation6], 0
    %14 = vsyncpa [#allocation9], 0
    %15 = vsyncpa [#allocation4], 0
    // Predicated region
    $region2: #{tpu_custom_call.1} parent=1 // pred_check
      _
    $region3: #{tpu_custom_call.1} parent=1 // pred_check_branch
      %17 = sbr.rel (0) target = $region5
    $region4: #{tpu_custom_call.1} parent=1 // pred_region
      %s19 = ssub.s32 640, 640
      %20 = vsyncadd [#allocation3], %s19
      %s21 = sshll.u32 [#allocation2], 4
      %s22 = int_to_ptr.vmem [resolvable:$true] %s21
      %27 = dma.hbm_to_vmem [thread:$0]  %s0, 640, %s22, [#allocation3], 320, 320, 20
    $region5: #{tpu_custom_call.1} parent=1 // pred_fallthru
      _
    // Predicated region
    $region6: #{tpu_custom_call.1} parent=1 // pred_check
      _
    $region7: #{tpu_custom_call.1} parent=1 // pred_check_branch
      %29 = sbr.rel (0) target = $region9
    $region8: #{tpu_custom_call.1} parent=1 // pred_region
      %s31 = ssub.s32 91200, 91200
      %32 = vsyncadd [#allocation6], %s31
      %s33 = sshll.u32 [#allocation5], 4
      %s34 = int_to_ptr.vmem [resolvable:$true] %s33
      %39 = dma.hbm_to_vmem [thread:$0]  %s1, 91200, %s34, [#allocation6], 1216, 1216, 76
    $region9: #{tpu_custom_call.1} parent=1 // pred_fallthru
      _
    // Predicated region
    $region10: #{tpu_custom_call.1} parent=1 // pred_check
      _
    $region11: #{tpu_custom_call.1} parent=1 // pred_check_branch
      %41 = sbr.rel (0) target = $region13
    $region12: #{tpu_custom_call.1} parent=1 // pred_region
      %s43 = ssub.s32 80, 80
      %44 = vsyncadd [#allocation6], %s43
      %s46 = sshll.u32 [#allocation7], 4
      %s47 = int_to_ptr.vmem [resolvable:$true] %s46
      %49 = dma.hbm_to_vmem [thread:$0]  %s2, 80, %s47, [#allocation6]
    $region13: #{tpu_custom_call.1} parent=1 // pred_fallthru
      _
    // Predicated region
    $region14: #{tpu_custom_call.1} parent=1 // pred_check
      _
    $region15: #{tpu_custom_call.1} parent=1 // pred_check_branch
      %51 = sbr.rel (0) target = $region17
    $region16: #{tpu_custom_call.1} parent=1 // pred_region
      _
    $region17: #{tpu_custom_call.1} parent=1 // pred_fallthru
      _
    // Predicated region
    $region18: #{tpu_custom_call.1} parent=1 // pred_check
      _
    $region19: #{tpu_custom_call.1} parent=1 // pred_check_branch
      %53 = sbr.rel (0) target = $region21
    $region20: #{tpu_custom_call.1} parent=1 // pred_region
      %s55 = ssub.s32 16, 16
      %56 = vsyncadd [#allocation9], %s55
      %s58 = sshll.u32 [#allocation8], 4
      %s59 = int_to_ptr.vmem [resolvable:$true] %s58
      %61 = dma.hbm_to_vmem [thread:$0]  %s4, 16, %s59, [#allocation9]
    $region21: #{tpu_custom_call.1} parent=1 // pred_fallthru
      _
    // Predicated region
    $region22: #{tpu_custom_call.1} parent=1 // pred_check
      _
    $region23: #{tpu_custom_call.1} parent=1 // pred_check_branch
      %63 = sbr.rel (0) target = $region25
    $region24: #{tpu_custom_call.1} parent=1 // pred_region
      _
    $region25: #{tpu_custom_call.1} parent=1 // pred_fallthru
      _
    // Predicated region
    $region26: #{tpu_custom_call.1} parent=1 // pred_check
      _
    $region27: #{tpu_custom_call.1} parent=1 // pred_check_branch
      %65 = sbr.rel (0) target = $region29
    $region28: #{tpu_custom_call.1} parent=1 // pred_region
      %s67 = ssub.s32 16, 16
      %68 = vsyncadd [#allocation9], %s67
      %s70 = sshll.u32 [#allocation10], 4
      %s71 = int_to_ptr.vmem [resolvable:$true] %s70
      %73 = dma.hbm_to_vmem [thread:$0]  %s6, 16, %s71, [#allocation9]
    $region29: #{tpu_custom_call.1} parent=1 // pred_fallthru
      _
    // Predicated region
    $region30: #{tpu_custom_call.1} parent=1 // pred_check
      _
    $region31: #{tpu_custom_call.1} parent=1 // pred_check_branch
      %75 = sbr.rel (0) target = $region33
    $region32: #{tpu_custom_call.1} parent=1 // pred_region
      %76 = dma.done [#allocation3], 640
    $region33: #{tpu_custom_call.1} parent=1 // pred_fallthru
      _
    // Predicated region
    $region34: #{tpu_custom_call.1} parent=1 // pred_check
      _
    $region35: #{tpu_custom_call.1} parent=1 // pred_check_branch
      %78 = sbr.rel (0) target = $region37
    $region36: #{tpu_custom_call.1} parent=1 // pred_region
      %79 = dma.done [#allocation6], 91200
    $region37: #{tpu_custom_call.1} parent=1 // pred_fallthru
      _
    // Predicated region
    $region38: #{tpu_custom_call.1} parent=1 // pred_check
      _
    $region39: #{tpu_custom_call.1} parent=1 // pred_check_branch
      %81 = sbr.rel (0) target = $region41
    $region40: #{tpu_custom_call.1} parent=1 // pred_region
      %82 = dma.done [#allocation6], 80
    $region41: #{tpu_custom_call.1} parent=1 // pred_fallthru
      _
    // Predicated region
    $region42: #{tpu_custom_call.1} parent=1 // pred_check
      _
    $region43: #{tpu_custom_call.1} parent=1 // pred_check_branch
      %84 = sbr.rel (0) target = $region45
    $region44: #{tpu_custom_call.1} parent=1 // pred_region
      %85 = dma.done [#allocation9], 16
    $region45: #{tpu_custom_call.1} parent=1 // pred_fallthru
      _
    // Predicated region
    $region46: #{tpu_custom_call.1} parent=1 // pred_check
      _
    $region47: #{tpu_custom_call.1} parent=1 // pred_check_branch
      %87 = sbr.rel (0) target = $region49
    $region48: #{tpu_custom_call.1} parent=1 // pred_region
      %88 = dma.done [#allocation9], 16
    $region49: #{tpu_custom_call.1} parent=1 // pred_fallthru
      _
    %v90 = vld [vmem:[#allocation2] sm:$0xff]
    %v91 = vld [vmem:[#allocation2 + $0x8] sm:$0xff]
    %v92 = vld [vmem:[#allocation2 + $0x10] sm:$0xf]
    %v93 = vld [vmem:[#allocation2 + $0x14] sm:$0xff]
    %v94 = vld [vmem:[#allocation2 + $0x1c] sm:$0xff]
    %v95 = vld [vmem:[#allocation2 + $0x24] sm:$0xf]
    %v96 = vld [vmem:[#allocation5] sm:$0xff]
    %v97 = vld [vmem:[#allocation5 + $0x8] sm:$0xff]
    %v98 = vld [vmem:[#allocation5 + $0x10] sm:$0xff]
    %v99 = vld [vmem:[#allocation5 + $0x18] sm:$0xff]
    %v100 = vld [vmem:[#allocation5 + $0x20] sm:$0xff]
    %v101 = vld [vmem:[#allocation5 + $0x28] sm:$0xff]
    %v102 = vld [vmem:[#allocation5 + $0x30] sm:$0xff]
    %v103 = vld [vmem:[#allocation5 + $0x38] sm:$0xff]
    %v104 = vld [vmem:[#allocation5 + $0x40] sm:$0xff]
    %v105 = vld [vmem:[#allocation5 + $0x48] sm:$0xf]
    %v106 = vld [vmem:[#allocation5 + $0x4c] sm:$0xff]
    %v107 = vld [vmem:[#allocation5 + $0x54] sm:$0xff]
    %v108 = vld [vmem:[#allocation5 + $0x5c] sm:$0xff]
    %v109 = vld [vmem:[#allocation5 + $0x64] sm:$0xff]
    %v110 = vld [vmem:[#allocation5 + $0x6c] sm:$0xff]
    %v111 = vld [vmem:[#allocation5 + $0x74] sm:$0xff]
    %v112 = vld [vmem:[#allocation5 + $0x7c] sm:$0xff]
    %v113 = vld [vmem:[#allocation5 + $0x84] sm:$0xff]
    %v114 = vld [vmem:[#allocation5 + $0x8c] sm:$0xff]
    %v115 = vld [vmem:[#allocation5 + $0x94] sm:$0xf]
    %v116 = vld [vmem:[#allocation5 + $0x98] sm:$0xff]
    %v117 = vld [vmem:[#allocation5 + $0xa0] sm:$0xff]
    %v118 = vld [vmem:[#allocation5 + $0xa8] sm:$0xff]
    %v119 = vld [vmem:[#allocation5 + $0xb0] sm:$0xff]
    %v120 = vld [vmem:[#allocation5 + $0xb8] sm:$0xff]
    %v121 = vld [vmem:[#allocation5 + $0xc0] sm:$0xff]
    %v122 = vld [vmem:[#allocation5 + $0xc8] sm:$0xff]
    %v123 = vld [vmem:[#allocation5 + $0xd0] sm:$0xff]
    %v124 = vld [vmem:[#allocation5 + $0xd8] sm:$0xff]
    %v125 = vld [vmem:[#allocation5 + $0xe0] sm:$0xf]
    %v126 = vld [vmem:[#allocation5 + $0xe4] sm:$0xff]
    %v127 = vld [vmem:[#allocation5 + $0xec] sm:$0xff]
    %v128 = vld [vmem:[#allocation5 + $0xf4] sm:$0xff]
    %v129 = vld [vmem:[#allocation5 + $0xfc] sm:$0xff]
    %v130 = vld [vmem:[#allocation5 + $0x104] sm:$0xff]
    %v131 = vld [vmem:[#allocation5 + $0x10c] sm:$0xff]
    %v132 = vld [vmem:[#allocation5 + $0x114] sm:$0xff]
    %v133 = vld [vmem:[#allocation5 + $0x11c] sm:$0xff]
    %v134 = vld [vmem:[#allocation5 + $0x124] sm:$0xff]
    %v135 = vld [vmem:[#allocation5 + $0x12c] sm:$0xf]
    %v136 = vld [vmem:[#allocation5 + $0x130] sm:$0xff]
    %v137 = vld [vmem:[#allocation5 + $0x138] sm:$0xff]
    %v138 = vld [vmem:[#allocation5 + $0x140] sm:$0xff]
    %v139 = vld [vmem:[#allocation5 + $0x148] sm:$0xff]
    %v140 = vld [vmem:[#allocation5 + $0x150] sm:$0xff]
    %v141 = vld [vmem:[#allocation5 + $0x158] sm:$0xff]
    %v142 = vld [vmem:[#allocation5 + $0x160] sm:$0xff]
    %v143 = vld [vmem:[#allocation5 + $0x168] sm:$0xff]
    %v144 = vld [vmem:[#allocation5 + $0x170] sm:$0xff]
    %v145 = vld [vmem:[#allocation5 + $0x178] sm:$0xf]
    %v146 = vld [vmem:[#allocation5 + $0x17c] sm:$0xff]
    %v147 = vld [vmem:[#allocation5 + $0x184] sm:$0xff]
    %v148 = vld [vmem:[#allocation5 + $0x18c] sm:$0xff]
    %v149 = vld [vmem:[#allocation5 + $0x194] sm:$0xff]
    %v150 = vld [vmem:[#allocation5 + $0x19c] sm:$0xff]
    %v151 = vld [vmem:[#allocation5 + $0x1a4] sm:$0xff]
    %v152 = vld [vmem:[#allocation5 + $0x1ac] sm:$0xff]
    %v153 = vld [vmem:[#allocation5 + $0x1b4] sm:$0xff]
    %v154 = vld [vmem:[#allocation5 + $0x1bc] sm:$0xff]
    %v155 = vld [vmem:[#allocation5 + $0x1c4] sm:$0xf]
    %v156 = vld [vmem:[#allocation5 + $0x1c8] sm:$0xff]
    %v157 = vld [vmem:[#allocation5 + $0x1d0] sm:$0xff]
    %v158 = vld [vmem:[#allocation5 + $0x1d8] sm:$0xff]
    %v159 = vld [vmem:[#allocation5 + $0x1e0] sm:$0xff]
    %v160 = vld [vmem:[#allocation5 + $0x1e8] sm:$0xff]
    %v161 = vld [vmem:[#allocation5 + $0x1f0] sm:$0xff]
    %v162 = vld [vmem:[#allocation5 + $0x1f8] sm:$0xff]
    %v163 = vld [vmem:[#allocation5 + $0x200] sm:$0xff]
    %v164 = vld [vmem:[#allocation5 + $0x208] sm:$0xff]
    %v165 = vld [vmem:[#allocation5 + $0x210] sm:$0xf]
    %v166 = vld [vmem:[#allocation5 + $0x214] sm:$0xff]
    %v167 = vld [vmem:[#allocation5 + $0x21c] sm:$0xff]
    %v168 = vld [vmem:[#allocation5 + $0x224] sm:$0xff]
    %v169 = vld [vmem:[#allocation5 + $0x22c] sm:$0xff]
    %v170 = vld [vmem:[#allocation5 + $0x234] sm:$0xff]
    %v171 = vld [vmem:[#allocation5 + $0x23c] sm:$0xff]
    %v172 = vld [vmem:[#allocation5 + $0x244] sm:$0xff]
    %v173 = vld [vmem:[#allocation5 + $0x24c] sm:$0xff]
    %v174 = vld [vmem:[#allocation5 + $0x254] sm:$0xff]
    %v175 = vld [vmem:[#allocation5 + $0x25c] sm:$0xf]
    %v176 = vld [vmem:[#allocation5 + $0x260] sm:$0xff]
    %v177 = vld [vmem:[#allocation5 + $0x268] sm:$0xff]
    %v178 = vld [vmem:[#allocation5 + $0x270] sm:$0xff]
    %v179 = vld [vmem:[#allocation5 + $0x278] sm:$0xff]
    %v180 = vld [vmem:[#allocation5 + $0x280] sm:$0xff]
    %v181 = vld [vmem:[#allocation5 + $0x288] sm:$0xff]
    %v182 = vld [vmem:[#allocation5 + $0x290] sm:$0xff]
    %v183 = vld [vmem:[#allocation5 + $0x298] sm:$0xff]
    %v184 = vld [vmem:[#allocation5 + $0x2a0] sm:$0xff]
    %v185 = vld [vmem:[#allocation5 + $0x2a8] sm:$0xf]
    %v186 = vld [vmem:[#allocation5 + $0x2ac] sm:$0xff]
    %v187 = vld [vmem:[#allocation5 + $0x2b4] sm:$0xff]
    %v188 = vld [vmem:[#allocation5 + $0x2bc] sm:$0xff]
    %v189 = vld [vmem:[#allocation5 + $0x2c4] sm:$0xff]
    %v190 = vld [vmem:[#allocation5 + $0x2cc] sm:$0xff]
    %v191 = vld [vmem:[#allocation5 + $0x2d4] sm:$0xff]
    %v192 = vld [vmem:[#allocation5 + $0x2dc] sm:$0xff]
    %v193 = vld [vmem:[#allocation5 + $0x2e4] sm:$0xff]
    %v194 = vld [vmem:[#allocation5 + $0x2ec] sm:$0xff]
    %v195 = vld [vmem:[#allocation5 + $0x2f4] sm:$0xf]
    %v196 = vld [vmem:[#allocation5 + $0x2f8] sm:$0xff]
    %v197 = vld [vmem:[#allocation5 + $0x300] sm:$0xff]
    %v198 = vld [vmem:[#allocation5 + $0x308] sm:$0xff]
    %v199 = vld [vmem:[#allocation5 + $0x310] sm:$0xff]
    %v200 = vld [vmem:[#allocation5 + $0x318] sm:$0xff]
    %v201 = vld [vmem:[#allocation5 + $0x320] sm:$0xff]
    %v202 = vld [vmem:[#allocation5 + $0x328] sm:$0xff]
    %v203 = vld [vmem:[#allocation5 + $0x330] sm:$0xff]
    %v204 = vld [vmem:[#allocation5 + $0x338] sm:$0xff]
    %v205 = vld [vmem:[#allocation5 + $0x340] sm:$0xf]
    %v206 = vld [vmem:[#allocation5 + $0x344] sm:$0xff]
    %v207 = vld [vmem:[#allocation5 + $0x34c] sm:$0xff]
    %v208 = vld [vmem:[#allocation5 + $0x354] sm:$0xff]
    %v209 = vld [vmem:[#allocation5 + $0x35c] sm:$0xff]
    %v210 = vld [vmem:[#allocation5 + $0x364] sm:$0xff]
    %v211 = vld [vmem:[#allocation5 + $0x36c] sm:$0xff]
    %v212 = vld [vmem:[#allocation5 + $0x374] sm:$0xff]
    %v213 = vld [vmem:[#allocation5 + $0x37c] sm:$0xff]
    %v214 = vld [vmem:[#allocation5 + $0x384] sm:$0xff]
    %v215 = vld [vmem:[#allocation5 + $0x38c] sm:$0xf]
    %v216 = vld [vmem:[#allocation5 + $0x390] sm:$0xff]
    %v217 = vld [vmem:[#allocation5 + $0x398] sm:$0xff]
    %v218 = vld [vmem:[#allocation5 + $0x3a0] sm:$0xff]
    %v219 = vld [vmem:[#allocation5 + $0x3a8] sm:$0xff]
    %v220 = vld [vmem:[#allocation5 + $0x3b0] sm:$0xff]
    %v221 = vld [vmem:[#allocation5 + $0x3b8] sm:$0xff]
    %v222 = vld [vmem:[#allocation5 + $0x3c0] sm:$0xff]
    %v223 = vld [vmem:[#allocation5 + $0x3c8] sm:$0xff]
    %v224 = vld [vmem:[#allocation5 + $0x3d0] sm:$0xff]
    %v225 = vld [vmem:[#allocation5 + $0x3d8] sm:$0xf]
    %v226 = vld [vmem:[#allocation5 + $0x3dc] sm:$0xff]
    %v227 = vld [vmem:[#allocation5 + $0x3e4] sm:$0xff]
    %v228 = vld [vmem:[#allocation5 + $0x3ec] sm:$0xff]
    %v229 = vld [vmem:[#allocation5 + $0x3f4] sm:$0xff]
    %v230 = vld [vmem:[#allocation5 + $0x3fc] sm:$0xff]
    %v231 = vld [vmem:[#allocation5 + $0x404] sm:$0xff]
    %v232 = vld [vmem:[#allocation5 + $0x40c] sm:$0xff]
    %v233 = vld [vmem:[#allocation5 + $0x414] sm:$0xff]
    %v234 = vld [vmem:[#allocation5 + $0x41c] sm:$0xff]
    %v235 = vld [vmem:[#allocation5 + $0x424] sm:$0xf]
    %v236 = vld [vmem:[#allocation5 + $0x428] sm:$0xff]
    %v237 = vld [vmem:[#allocation5 + $0x430] sm:$0xff]
    %v238 = vld [vmem:[#allocation5 + $0x438] sm:$0xff]
    %v239 = vld [vmem:[#allocation5 + $0x440] sm:$0xff]
    %v240 = vld [vmem:[#allocation5 + $0x448] sm:$0xff]
    %v241 = vld [vmem:[#allocation5 + $0x450] sm:$0xff]
    %v242 = vld [vmem:[#allocation5 + $0x458] sm:$0xff]
    %v243 = vld [vmem:[#allocation5 + $0x460] sm:$0xff]
    %v244 = vld [vmem:[#allocation5 + $0x468] sm:$0xff]
    %v245 = vld [vmem:[#allocation5 + $0x470] sm:$0xf]
    %v246 = vld [vmem:[#allocation5 + $0x474] sm:$0xff]
    %v247 = vld [vmem:[#allocation5 + $0x47c] sm:$0xff]
    %v248 = vld [vmem:[#allocation5 + $0x484] sm:$0xff]
    %v249 = vld [vmem:[#allocation5 + $0x48c] sm:$0xff]
    %v250 = vld [vmem:[#allocation5 + $0x494] sm:$0xff]
    %v251 = vld [vmem:[#allocation5 + $0x49c] sm:$0xff]
    %v252 = vld [vmem:[#allocation5 + $0x4a4] sm:$0xff]
    %v253 = vld [vmem:[#allocation5 + $0x4ac] sm:$0xff]
    %v254 = vld [vmem:[#allocation5 + $0x4b4] sm:$0xff]
    %v255 = vld [vmem:[#allocation5 + $0x4bc] sm:$0xf]
    %v256 = vld [vmem:[#allocation5 + $0x4c0] sm:$0xff]
    %v257 = vld [vmem:[#allocation5 + $0x4c8] sm:$0xff]
    %v258 = vld [vmem:[#allocation5 + $0x4d0] sm:$0xff]
    %v259 = vld [vmem:[#allocation5 + $0x4d8] sm:$0xff]
    %v260 = vld [vmem:[#allocation5 + $0x4e0] sm:$0xff]
    %v261 = vld [vmem:[#allocation5 + $0x4e8] sm:$0xff]
    %v262 = vld [vmem:[#allocation5 + $0x4f0] sm:$0xff]
    %v263 = vld [vmem:[#allocation5 + $0x4f8] sm:$0xff]
    %v264 = vld [vmem:[#allocation5 + $0x500] sm:$0xff]
    %v265 = vld [vmem:[#allocation5 + $0x508] sm:$0xf]
    %v266 = vld [vmem:[#allocation5 + $0x50c] sm:$0xff]
    %v267 = vld [vmem:[#allocation5 + $0x514] sm:$0xff]
    %v268 = vld [vmem:[#allocation5 + $0x51c] sm:$0xff]
    %v269 = vld [vmem:[#allocation5 + $0x524] sm:$0xff]
    %v270 = vld [vmem:[#allocation5 + $0x52c] sm:$0xff]
    %v271 = vld [vmem:[#allocation5 + $0x534] sm:$0xff]
    %v272 = vld [vmem:[#allocation5 + $0x53c] sm:$0xff]
    %v273 = vld [vmem:[#allocation5 + $0x544] sm:$0xff]
    %v274 = vld [vmem:[#allocation5 + $0x54c] sm:$0xff]
    %v275 = vld [vmem:[#allocation5 + $0x554] sm:$0xf]
    %v276 = vld [vmem:[#allocation5 + $0x558] sm:$0xff]
    %v277 = vld [vmem:[#allocation5 + $0x560] sm:$0xff]
    %v278 = vld [vmem:[#allocation5 + $0x568] sm:$0xff]
    %v279 = vld [vmem:[#allocation5 + $0x570] sm:$0xff]
    %v280 = vld [vmem:[#allocation5 + $0x578] sm:$0xff]
    %v281 = vld [vmem:[#allocation5 + $0x580] sm:$0xff]
    %v282 = vld [vmem:[#allocation5 + $0x588] sm:$0xff]
    %v283 = vld [vmem:[#allocation5 + $0x590] sm:$0xff]
    %v284 = vld [vmem:[#allocation5 + $0x598] sm:$0xff]
    %v285 = vld [vmem:[#allocation5 + $0x5a0] sm:$0xf]
    %v286 = vld [vmem:[#allocation5 + $0x5a4] sm:$0xff]
    %v287 = vld [vmem:[#allocation5 + $0x5ac] sm:$0xff]
    %v288 = vld [vmem:[#allocation5 + $0x5b4] sm:$0xff]
    %v289 = vld [vmem:[#allocation5 + $0x5bc] sm:$0xff]
    %v290 = vld [vmem:[#allocation5 + $0x5c4] sm:$0xff]
    %v291 = vld [vmem:[#allocation5 + $0x5cc] sm:$0xff]
    %v292 = vld [vmem:[#allocation5 + $0x5d4] sm:$0xff]
    %v293 = vld [vmem:[#allocation5 + $0x5dc] sm:$0xff]
    %v294 = vld [vmem:[#allocation5 + $0x5e4] sm:$0xff]
    %v295 = vld [vmem:[#allocation5 + $0x5ec] sm:$0xf]
    %v296 = vld [vmem:[#allocation5 + $0x5f0] sm:$0xff]
    %v297 = vld [vmem:[#allocation5 + $0x5f8] sm:$0xff]
    %v298 = vld [vmem:[#allocation5 + $0x600] sm:$0xff]
    %v299 = vld [vmem:[#allocation5 + $0x608] sm:$0xff]
    %v300 = vld [vmem:[#allocation5 + $0x610] sm:$0xff]
    %v301 = vld [vmem:[#allocation5 + $0x618] sm:$0xff]
    %v302 = vld [vmem:[#allocation5 + $0x620] sm:$0xff]
    %v303 = vld [vmem:[#allocation5 + $0x628] sm:$0xff]
    %v304 = vld [vmem:[#allocation5 + $0x630] sm:$0xff]
    %v305 = vld [vmem:[#allocation5 + $0x638] sm:$0xf]
    %v306 = vld [vmem:[#allocation5 + $0x63c] sm:$0xff]
    %v307 = vld [vmem:[#allocation5 + $0x644] sm:$0xff]
    %v308 = vld [vmem:[#allocation5 + $0x64c] sm:$0xff]
    %v309 = vld [vmem:[#allocation5 + $0x654] sm:$0xff]
    %v310 = vld [vmem:[#allocation5 + $0x65c] sm:$0xff]
    %v311 = vld [vmem:[#allocation5 + $0x664] sm:$0xff]
    %v312 = vld [vmem:[#allocation5 + $0x66c] sm:$0xff]
    %v313 = vld [vmem:[#allocation5 + $0x674] sm:$0xff]
    %v314 = vld [vmem:[#allocation5 + $0x67c] sm:$0xff]
    %v315 = vld [vmem:[#allocation5 + $0x684] sm:$0xf]
    %v316 = vld [vmem:[#allocation5 + $0x688] sm:$0xff]
    %v317 = vld [vmem:[#allocation5 + $0x690] sm:$0xff]
    %v318 = vld [vmem:[#allocation5 + $0x698] sm:$0xff]
    %v319 = vld [vmem:[#allocation5 + $0x6a0] sm:$0xff]
    %v320 = vld [vmem:[#allocation5 + $0x6a8] sm:$0xff]
    %v321 = vld [vmem:[#allocation5 + $0x6b0] sm:$0xff]
    %v322 = vld [vmem:[#allocation5 + $0x6b8] sm:$0xff]
    %v323 = vld [vmem:[#allocation5 + $0x6c0] sm:$0xff]
    %v324 = vld [vmem:[#allocation5 + $0x6c8] sm:$0xff]
    %v325 = vld [vmem:[#allocation5 + $0x6d0] sm:$0xf]
    %v326 = vld [vmem:[#allocation5 + $0x6d4] sm:$0xff]
    %v327 = vld [vmem:[#allocation5 + $0x6dc] sm:$0xff]
    %v328 = vld [vmem:[#allocation5 + $0x6e4] sm:$0xff]
    %v329 = vld [vmem:[#allocation5 + $0x6ec] sm:$0xff]
    %v330 = vld [vmem:[#allocation5 + $0x6f4] sm:$0xff]
    %v331 = vld [vmem:[#allocation5 + $0x6fc] sm:$0xff]
    %v332 = vld [vmem:[#allocation5 + $0x704] sm:$0xff]
    %v333 = vld [vmem:[#allocation5 + $0x70c] sm:$0xff]
    %v334 = vld [vmem:[#allocation5 + $0x714] sm:$0xff]
    %v335 = vld [vmem:[#allocation5 + $0x71c] sm:$0xf]
    %v336 = vld [vmem:[#allocation5 + $0x720] sm:$0xff]
    %v337 = vld [vmem:[#allocation5 + $0x728] sm:$0xff]
    %v338 = vld [vmem:[#allocation5 + $0x730] sm:$0xff]
    %v339 = vld [vmem:[#allocation5 + $0x738] sm:$0xff]
    %v340 = vld [vmem:[#allocation5 + $0x740] sm:$0xff]
    %v341 = vld [vmem:[#allocation5 + $0x748] sm:$0xff]
    %v342 = vld [vmem:[#allocation5 + $0x750] sm:$0xff]
    %v343 = vld [vmem:[#allocation5 + $0x758] sm:$0xff]
    %v344 = vld [vmem:[#allocation5 + $0x760] sm:$0xff]
    %v345 = vld [vmem:[#allocation5 + $0x768] sm:$0xf]
    %v346 = vld [vmem:[#allocation5 + $0x76c] sm:$0xff]
    %v347 = vld [vmem:[#allocation5 + $0x774] sm:$0xff]
    %v348 = vld [vmem:[#allocation5 + $0x77c] sm:$0xff]
    %v349 = vld [vmem:[#allocation5 + $0x784] sm:$0xff]
    %v350 = vld [vmem:[#allocation5 + $0x78c] sm:$0xff]
    %v351 = vld [vmem:[#allocation5 + $0x794] sm:$0xff]
    %v352 = vld [vmem:[#allocation5 + $0x79c] sm:$0xff]
    %v353 = vld [vmem:[#allocation5 + $0x7a4] sm:$0xff]
    %v354 = vld [vmem:[#allocation5 + $0x7ac] sm:$0xff]
    %v355 = vld [vmem:[#allocation5 + $0x7b4] sm:$0xf]
    %v356 = vld [vmem:[#allocation5 + $0x7b8] sm:$0xff]
    %v357 = vld [vmem:[#allocation5 + $0x7c0] sm:$0xff]
    %v358 = vld [vmem:[#allocation5 + $0x7c8] sm:$0xff]
    %v359 = vld [vmem:[#allocation5 + $0x7d0] sm:$0xff]
    %v360 = vld [vmem:[#allocation5 + $0x7d8] sm:$0xff]
    %v361 = vld [vmem:[#allocation5 + $0x7e0] sm:$0xff]
    %v362 = vld [vmem:[#allocation5 + $0x7e8] sm:$0xff]
    %v363 = vld [vmem:[#allocation5 + $0x7f0] sm:$0xff]
    %v364 = vld [vmem:[#allocation5 + $0x7f8] sm:$0xff]
    %v365 = vld [vmem:[#allocation5 + $0x800] sm:$0xf]
    %v366 = vld [vmem:[#allocation5 + $0x804] sm:$0xff]
    %v367 = vld [vmem:[#allocation5 + $0x80c] sm:$0xff]
    %v368 = vld [vmem:[#allocation5 + $0x814] sm:$0xff]
    %v369 = vld [vmem:[#allocation5 + $0x81c] sm:$0xff]
    %v370 = vld [vmem:[#allocation5 + $0x824] sm:$0xff]
    %v371 = vld [vmem:[#allocation5 + $0x82c] sm:$0xff]
    %v372 = vld [vmem:[#allocation5 + $0x834] sm:$0xff]
    %v373 = vld [vmem:[#allocation5 + $0x83c] sm:$0xff]
    %v374 = vld [vmem:[#allocation5 + $0x844] sm:$0xff]
    %v375 = vld [vmem:[#allocation5 + $0x84c] sm:$0xf]
    %v376 = vld [vmem:[#allocation5 + $0x850] sm:$0xff]
    %v377 = vld [vmem:[#allocation5 + $0x858] sm:$0xff]
    %v378 = vld [vmem:[#allocation5 + $0x860] sm:$0xff]
    %v379 = vld [vmem:[#allocation5 + $0x868] sm:$0xff]
    %v380 = vld [vmem:[#allocation5 + $0x870] sm:$0xff]
    %v381 = vld [vmem:[#allocation5 + $0x878] sm:$0xff]
    %v382 = vld [vmem:[#allocation5 + $0x880] sm:$0xff]
    %v383 = vld [vmem:[#allocation5 + $0x888] sm:$0xff]
    %v384 = vld [vmem:[#allocation5 + $0x890] sm:$0xff]
    %v385 = vld [vmem:[#allocation5 + $0x898] sm:$0xf]
    %v386 = vld [vmem:[#allocation5 + $0x89c] sm:$0xff]
    %v387 = vld [vmem:[#allocation5 + $0x8a4] sm:$0xff]
    %v388 = vld [vmem:[#allocation5 + $0x8ac] sm:$0xff]
    %v389 = vld [vmem:[#allocation5 + $0x8b4] sm:$0xff]
    %v390 = vld [vmem:[#allocation5 + $0x8bc] sm:$0xff]
    %v391 = vld [vmem:[#allocation5 + $0x8c4] sm:$0xff]
    %v392 = vld [vmem:[#allocation5 + $0x8cc] sm:$0xff]
    %v393 = vld [vmem:[#allocation5 + $0x8d4] sm:$0xff]
    %v394 = vld [vmem:[#allocation5 + $0x8dc] sm:$0xff]
    %v395 = vld [vmem:[#allocation5 + $0x8e4] sm:$0xf]
    %v396 = vld [vmem:[#allocation5 + $0x8e8] sm:$0xff]
    %v397 = vld [vmem:[#allocation5 + $0x8f0] sm:$0xff]
    %v398 = vld [vmem:[#allocation5 + $0x8f8] sm:$0xff]
    %v399 = vld [vmem:[#allocation5 + $0x900] sm:$0xff]
    %v400 = vld [vmem:[#allocation5 + $0x908] sm:$0xff]
    %v401 = vld [vmem:[#allocation5 + $0x910] sm:$0xff]
    %v402 = vld [vmem:[#allocation5 + $0x918] sm:$0xff]
    %v403 = vld [vmem:[#allocation5 + $0x920] sm:$0xff]
    %v404 = vld [vmem:[#allocation5 + $0x928] sm:$0xff]
    %v405 = vld [vmem:[#allocation5 + $0x930] sm:$0xf]
    %v406 = vld [vmem:[#allocation5 + $0x934] sm:$0xff]
    %v407 = vld [vmem:[#allocation5 + $0x93c] sm:$0xff]
    %v408 = vld [vmem:[#allocation5 + $0x944] sm:$0xff]
    %v409 = vld [vmem:[#allocation5 + $0x94c] sm:$0xff]
    %v410 = vld [vmem:[#allocation5 + $0x954] sm:$0xff]
    %v411 = vld [vmem:[#allocation5 + $0x95c] sm:$0xff]
    %v412 = vld [vmem:[#allocation5 + $0x964] sm:$0xff]
    %v413 = vld [vmem:[#allocation5 + $0x96c] sm:$0xff]
    %v414 = vld [vmem:[#allocation5 + $0x974] sm:$0xff]
    %v415 = vld [vmem:[#allocation5 + $0x97c] sm:$0xf]
    %v416 = vld [vmem:[#allocation5 + $0x980] sm:$0xff]
    %v417 = vld [vmem:[#allocation5 + $0x988] sm:$0xff]
    %v418 = vld [vmem:[#allocation5 + $0x990] sm:$0xff]
    %v419 = vld [vmem:[#allocation5 + $0x998] sm:$0xff]
    %v420 = vld [vmem:[#allocation5 + $0x9a0] sm:$0xff]
    %v421 = vld [vmem:[#allocation5 + $0x9a8] sm:$0xff]
    %v422 = vld [vmem:[#allocation5 + $0x9b0] sm:$0xff]
    %v423 = vld [vmem:[#allocation5 + $0x9b8] sm:$0xff]
    %v424 = vld [vmem:[#allocation5 + $0x9c0] sm:$0xff]
    %v425 = vld [vmem:[#allocation5 + $0x9c8] sm:$0xf]
    %v426 = vld [vmem:[#allocation5 + $0x9cc] sm:$0xff]
    %v427 = vld [vmem:[#allocation5 + $0x9d4] sm:$0xff]
    %v428 = vld [vmem:[#allocation5 + $0x9dc] sm:$0xff]
    %v429 = vld [vmem:[#allocation5 + $0x9e4] sm:$0xff]
    %v430 = vld [vmem:[#allocation5 + $0x9ec] sm:$0xff]
    %v431 = vld [vmem:[#allocation5 + $0x9f4] sm:$0xff]
    %v432 = vld [vmem:[#allocation5 + $0x9fc] sm:$0xff]
    %v433 = vld [vmem:[#allocation5 + $0xa04] sm:$0xff]
    %v434 = vld [vmem:[#allocation5 + $0xa0c] sm:$0xff]
    %v435 = vld [vmem:[#allocation5 + $0xa14] sm:$0xf]
    %v436 = vld [vmem:[#allocation5 + $0xa18] sm:$0xff]
    %v437 = vld [vmem:[#allocation5 + $0xa20] sm:$0xff]
    %v438 = vld [vmem:[#allocation5 + $0xa28] sm:$0xff]
    %v439 = vld [vmem:[#allocation5 + $0xa30] sm:$0xff]
    %v440 = vld [vmem:[#allocation5 + $0xa38] sm:$0xff]
    %v441 = vld [vmem:[#allocation5 + $0xa40] sm:$0xff]
    %v442 = vld [vmem:[#allocation5 + $0xa48] sm:$0xff]
    %v443 = vld [vmem:[#allocation5 + $0xa50] sm:$0xff]
    %v444 = vld [vmem:[#allocation5 + $0xa58] sm:$0xff]
    %v445 = vld [vmem:[#allocation5 + $0xa60] sm:$0xf]
    %v446 = vld [vmem:[#allocation5 + $0xa64] sm:$0xff]
    %v447 = vld [vmem:[#allocation5 + $0xa6c] sm:$0xff]
    %v448 = vld [vmem:[#allocation5 + $0xa74] sm:$0xff]
    %v449 = vld [vmem:[#allocation5 + $0xa7c] sm:$0xff]
    %v450 = vld [vmem:[#allocation5 + $0xa84] sm:$0xff]
    %v451 = vld [vmem:[#allocation5 + $0xa8c] sm:$0xff]
    %v452 = vld [vmem:[#allocation5 + $0xa94] sm:$0xff]
    %v453 = vld [vmem:[#allocation5 + $0xa9c] sm:$0xff]
    %v454 = vld [vmem:[#allocation5 + $0xaa4] sm:$0xff]
    %v455 = vld [vmem:[#allocation5 + $0xaac] sm:$0xf]
    %v456 = vld [vmem:[#allocation5 + $0xab0] sm:$0xff]
    %v457 = vld [vmem:[#allocation5 + $0xab8] sm:$0xff]
    %v458 = vld [vmem:[#allocation5 + $0xac0] sm:$0xff]
    %v459 = vld [vmem:[#allocation5 + $0xac8] sm:$0xff]
    %v460 = vld [vmem:[#allocation5 + $0xad0] sm:$0xff]
    %v461 = vld [vmem:[#allocation5 + $0xad8] sm:$0xff]
    %v462 = vld [vmem:[#allocation5 + $0xae0] sm:$0xff]
    %v463 = vld [vmem:[#allocation5 + $0xae8] sm:$0xff]
    %v464 = vld [vmem:[#allocation5 + $0xaf0] sm:$0xff]
    %v465 = vld [vmem:[#allocation5 + $0xaf8] sm:$0xf]
    %v466 = vld [vmem:[#allocation5 + $0xafc] sm:$0xff]
    %v467 = vld [vmem:[#allocation5 + $0xb04] sm:$0xff]
    %v468 = vld [vmem:[#allocation5 + $0xb0c] sm:$0xff]
    %v469 = vld [vmem:[#allocation5 + $0xb14] sm:$0xff]
    %v470 = vld [vmem:[#allocation5 + $0xb1c] sm:$0xff]
    %v471 = vld [vmem:[#allocation5 + $0xb24] sm:$0xff]
    %v472 = vld [vmem:[#allocation5 + $0xb2c] sm:$0xff]
    %v473 = vld [vmem:[#allocation5 + $0xb34] sm:$0xff]
    %v474 = vld [vmem:[#allocation5 + $0xb3c] sm:$0xff]
    %v475 = vld [vmem:[#allocation5 + $0xb44] sm:$0xf]
    %v476 = vld [vmem:[#allocation5 + $0xb48] sm:$0xff]
    %v477 = vld [vmem:[#allocation5 + $0xb50] sm:$0xff]
    %v478 = vld [vmem:[#allocation5 + $0xb58] sm:$0xff]
    %v479 = vld [vmem:[#allocation5 + $0xb60] sm:$0xff]
    %v480 = vld [vmem:[#allocation5 + $0xb68] sm:$0xff]
    %v481 = vld [vmem:[#allocation5 + $0xb70] sm:$0xff]
    %v482 = vld [vmem:[#allocation5 + $0xb78] sm:$0xff]
    %v483 = vld [vmem:[#allocation5 + $0xb80] sm:$0xff]
    %v484 = vld [vmem:[#allocation5 + $0xb88] sm:$0xff]
    %v485 = vld [vmem:[#allocation5 + $0xb90] sm:$0xf]
    %v486 = vld [vmem:[#allocation5 + $0xb94] sm:$0xff]
    %v487 = vld [vmem:[#allocation5 + $0xb9c] sm:$0xff]
    %v488 = vld [vmem:[#allocation5 + $0xba4] sm:$0xff]
    %v489 = vld [vmem:[#allocation5 + $0xbac] sm:$0xff]
    %v490 = vld [vmem:[#allocation5 + $0xbb4] sm:$0xff]
    %v491 = vld [vmem:[#allocation5 + $0xbbc] sm:$0xff]
    %v492 = vld [vmem:[#allocation5 + $0xbc4] sm:$0xff]
    %v493 = vld [vmem:[#allocation5 + $0xbcc] sm:$0xff]
    %v494 = vld [vmem:[#allocation5 + $0xbd4] sm:$0xff]
    %v495 = vld [vmem:[#allocation5 + $0xbdc] sm:$0xf]
    %v496 = vld [vmem:[#allocation5 + $0xbe0] sm:$0xff]
    %v497 = vld [vmem:[#allocation5 + $0xbe8] sm:$0xff]
    %v498 = vld [vmem:[#allocation5 + $0xbf0] sm:$0xff]
    %v499 = vld [vmem:[#allocation5 + $0xbf8] sm:$0xff]
    %v500 = vld [vmem:[#allocation5 + $0xc00] sm:$0xff]
    %v501 = vld [vmem:[#allocation5 + $0xc08] sm:$0xff]
    %v502 = vld [vmem:[#allocation5 + $0xc10] sm:$0xff]
    %v503 = vld [vmem:[#allocation5 + $0xc18] sm:$0xff]
    %v504 = vld [vmem:[#allocation5 + $0xc20] sm:$0xff]
    %v505 = vld [vmem:[#allocation5 + $0xc28] sm:$0xf]
    %v506 = vld [vmem:[#allocation5 + $0xc2c] sm:$0xff]
    %v507 = vld [vmem:[#allocation5 + $0xc34] sm:$0xff]
    %v508 = vld [vmem:[#allocation5 + $0xc3c] sm:$0xff]
    %v509 = vld [vmem:[#allocation5 + $0xc44] sm:$0xff]
    %v510 = vld [vmem:[#allocation5 + $0xc4c] sm:$0xff]
    %v511 = vld [vmem:[#allocation5 + $0xc54] sm:$0xff]
    %v512 = vld [vmem:[#allocation5 + $0xc5c] sm:$0xff]
    %v513 = vld [vmem:[#allocation5 + $0xc64] sm:$0xff]
    %v514 = vld [vmem:[#allocation5 + $0xc6c] sm:$0xff]
    %v515 = vld [vmem:[#allocation5 + $0xc74] sm:$0xf]
    %v516 = vld [vmem:[#allocation5 + $0xc78] sm:$0xff]
    %v517 = vld [vmem:[#allocation5 + $0xc80] sm:$0xff]
    %v518 = vld [vmem:[#allocation5 + $0xc88] sm:$0xff]
    %v519 = vld [vmem:[#allocation5 + $0xc90] sm:$0xff]
    %v520 = vld [vmem:[#allocation5 + $0xc98] sm:$0xff]
    %v521 = vld [vmem:[#allocation5 + $0xca0] sm:$0xff]
    %v522 = vld [vmem:[#allocation5 + $0xca8] sm:$0xff]
    %v523 = vld [vmem:[#allocation5 + $0xcb0] sm:$0xff]
    %v524 = vld [vmem:[#allocation5 + $0xcb8] sm:$0xff]
    %v525 = vld [vmem:[#allocation5 + $0xcc0] sm:$0xf]
    %v526 = vld [vmem:[#allocation5 + $0xcc4] sm:$0xff]
    %v527 = vld [vmem:[#allocation5 + $0xccc] sm:$0xff]
    %v528 = vld [vmem:[#allocation5 + $0xcd4] sm:$0xff]
    %v529 = vld [vmem:[#allocation5 + $0xcdc] sm:$0xff]
    %v530 = vld [vmem:[#allocation5 + $0xce4] sm:$0xff]
    %v531 = vld [vmem:[#allocation5 + $0xcec] sm:$0xff]
    %v532 = vld [vmem:[#allocation5 + $0xcf4] sm:$0xff]
    %v533 = vld [vmem:[#allocation5 + $0xcfc] sm:$0xff]
    %v534 = vld [vmem:[#allocation5 + $0xd04] sm:$0xff]
    %v535 = vld [vmem:[#allocation5 + $0xd0c] sm:$0xf]
    %v536 = vld [vmem:[#allocation5 + $0xd10] sm:$0xff]
    %v537 = vld [vmem:[#allocation5 + $0xd18] sm:$0xff]
    %v538 = vld [vmem:[#allocation5 + $0xd20] sm:$0xff]
    %v539 = vld [vmem:[#allocation5 + $0xd28] sm:$0xff]
    %v540 = vld [vmem:[#allocation5 + $0xd30] sm:$0xff]
    %v541 = vld [vmem:[#allocation5 + $0xd38] sm:$0xff]
    %v542 = vld [vmem:[#allocation5 + $0xd40] sm:$0xff]
    %v543 = vld [vmem:[#allocation5 + $0xd48] sm:$0xff]
    %v544 = vld [vmem:[#allocation5 + $0xd50] sm:$0xff]
    %v545 = vld [vmem:[#allocation5 + $0xd58] sm:$0xf]
    %v546 = vld [vmem:[#allocation5 + $0xd5c] sm:$0xff]
    %v547 = vld [vmem:[#allocation5 + $0xd64] sm:$0xff]
    %v548 = vld [vmem:[#allocation5 + $0xd6c] sm:$0xff]
    %v549 = vld [vmem:[#allocation5 + $0xd74] sm:$0xff]
    %v550 = vld [vmem:[#allocation5 + $0xd7c] sm:$0xff]
    %v551 = vld [vmem:[#allocation5 + $0xd84] sm:$0xff]
    %v552 = vld [vmem:[#allocation5 + $0xd8c] sm:$0xff]
    %v553 = vld [vmem:[#allocation5 + $0xd94] sm:$0xff]
    %v554 = vld [vmem:[#allocation5 + $0xd9c] sm:$0xff]
    %v555 = vld [vmem:[#allocation5 + $0xda4] sm:$0xf]
    %v556 = vld [vmem:[#allocation5 + $0xda8] sm:$0xff]
    %v557 = vld [vmem:[#allocation5 + $0xdb0] sm:$0xff]
    %v558 = vld [vmem:[#allocation5 + $0xdb8] sm:$0xff]
    %v559 = vld [vmem:[#allocation5 + $0xdc0] sm:$0xff]
    %v560 = vld [vmem:[#allocation5 + $0xdc8] sm:$0xff]
    %v561 = vld [vmem:[#allocation5 + $0xdd0] sm:$0xff]
    %v562 = vld [vmem:[#allocation5 + $0xdd8] sm:$0xff]
    %v563 = vld [vmem:[#allocation5 + $0xde0] sm:$0xff]
    %v564 = vld [vmem:[#allocation5 + $0xde8] sm:$0xff]
    %v565 = vld [vmem:[#allocation5 + $0xdf0] sm:$0xf]
    %v566 = vld [vmem:[#allocation5 + $0xdf4] sm:$0xff]
    %v567 = vld [vmem:[#allocation5 + $0xdfc] sm:$0xff]
    %v568 = vld [vmem:[#allocation5 + $0xe04] sm:$0xff]
    %v569 = vld [vmem:[#allocation5 + $0xe0c] sm:$0xff]
    %v570 = vld [vmem:[#allocation5 + $0xe14] sm:$0xff]
    %v571 = vld [vmem:[#allocation5 + $0xe1c] sm:$0xff]
    %v572 = vld [vmem:[#allocation5 + $0xe24] sm:$0xff]
    %v573 = vld [vmem:[#allocation5 + $0xe2c] sm:$0xff]
    %v574 = vld [vmem:[#allocation5 + $0xe34] sm:$0xff]
    %v575 = vld [vmem:[#allocation5 + $0xe3c] sm:$0xf]
    %v576 = vld [vmem:[#allocation5 + $0xe40] sm:$0xff]
    %v577 = vld [vmem:[#allocation5 + $0xe48] sm:$0xff]
    %v578 = vld [vmem:[#allocation5 + $0xe50] sm:$0xff]
    %v579 = vld [vmem:[#allocation5 + $0xe58] sm:$0xff]
    %v580 = vld [vmem:[#allocation5 + $0xe60] sm:$0xff]
    %v581 = vld [vmem:[#allocation5 + $0xe68] sm:$0xff]
    %v582 = vld [vmem:[#allocation5 + $0xe70] sm:$0xff]
    %v583 = vld [vmem:[#allocation5 + $0xe78] sm:$0xff]
    %v584 = vld [vmem:[#allocation5 + $0xe80] sm:$0xff]
    %v585 = vld [vmem:[#allocation5 + $0xe88] sm:$0xf]
    %v586 = vld [vmem:[#allocation5 + $0xe8c] sm:$0xff]
    %v587 = vld [vmem:[#allocation5 + $0xe94] sm:$0xff]
    %v588 = vld [vmem:[#allocation5 + $0xe9c] sm:$0xff]
    %v589 = vld [vmem:[#allocation5 + $0xea4] sm:$0xff]
    %v590 = vld [vmem:[#allocation5 + $0xeac] sm:$0xff]
    %v591 = vld [vmem:[#allocation5 + $0xeb4] sm:$0xff]
    %v592 = vld [vmem:[#allocation5 + $0xebc] sm:$0xff]
    %v593 = vld [vmem:[#allocation5 + $0xec4] sm:$0xff]
    %v594 = vld [vmem:[#allocation5 + $0xecc] sm:$0xff]
    %v595 = vld [vmem:[#allocation5 + $0xed4] sm:$0xf]
    %v596 = vld [vmem:[#allocation5 + $0xed8] sm:$0xff]
    %v597 = vld [vmem:[#allocation5 + $0xee0] sm:$0xff]
    %v598 = vld [vmem:[#allocation5 + $0xee8] sm:$0xff]
    %v599 = vld [vmem:[#allocation5 + $0xef0] sm:$0xff]
    %v600 = vld [vmem:[#allocation5 + $0xef8] sm:$0xff]
    %v601 = vld [vmem:[#allocation5 + $0xf00] sm:$0xff]
    %v602 = vld [vmem:[#allocation5 + $0xf08] sm:$0xff]
    %v603 = vld [vmem:[#allocation5 + $0xf10] sm:$0xff]
    %v604 = vld [vmem:[#allocation5 + $0xf18] sm:$0xff]
    %v605 = vld [vmem:[#allocation5 + $0xf20] sm:$0xf]
    %v606 = vld [vmem:[#allocation5 + $0xf24] sm:$0xff]
    %v607 = vld [vmem:[#allocation5 + $0xf2c] sm:$0xff]
    %v608 = vld [vmem:[#allocation5 + $0xf34] sm:$0xff]
    %v609 = vld [vmem:[#allocation5 + $0xf3c] sm:$0xff]
    %v610 = vld [vmem:[#allocation5 + $0xf44] sm:$0xff]
    %v611 = vld [vmem:[#allocation5 + $0xf4c] sm:$0xff]
    %v612 = vld [vmem:[#allocation5 + $0xf54] sm:$0xff]
    %v613 = vld [vmem:[#allocation5 + $0xf5c] sm:$0xff]
    %v614 = vld [vmem:[#allocation5 + $0xf64] sm:$0xff]
    %v615 = vld [vmem:[#allocation5 + $0xf6c] sm:$0xf]
    %v616 = vld [vmem:[#allocation5 + $0xf70] sm:$0xff]
    %v617 = vld [vmem:[#allocation5 + $0xf78] sm:$0xff]
    %v618 = vld [vmem:[#allocation5 + $0xf80] sm:$0xff]
    %v619 = vld [vmem:[#allocation5 + $0xf88] sm:$0xff]
    %v620 = vld [vmem:[#allocation5 + $0xf90] sm:$0xff]
    %v621 = vld [vmem:[#allocation5 + $0xf98] sm:$0xff]
    %v622 = vld [vmem:[#allocation5 + $0xfa0] sm:$0xff]
    %v623 = vld [vmem:[#allocation5 + $0xfa8] sm:$0xff]
    %v624 = vld [vmem:[#allocation5 + $0xfb0] sm:$0xff]
    %v625 = vld [vmem:[#allocation5 + $0xfb8] sm:$0xf]
    %v626 = vld [vmem:[#allocation5 + $0xfbc] sm:$0xff]
    %v627 = vld [vmem:[#allocation5 + $0xfc4] sm:$0xff]
    %v628 = vld [vmem:[#allocation5 + $0xfcc] sm:$0xff]
    %v629 = vld [vmem:[#allocation5 + $0xfd4] sm:$0xff]
    %v630 = vld [vmem:[#allocation5 + $0xfdc] sm:$0xff]
    %v631 = vld [vmem:[#allocation5 + $0xfe4] sm:$0xff]
    %v632 = vld [vmem:[#allocation5 + $0xfec] sm:$0xff]
    %v633 = vld [vmem:[#allocation5 + $0xff4] sm:$0xff]
    %v634 = vld [vmem:[#allocation5 + $0xffc] sm:$0xff]
    %v635 = vld [vmem:[#allocation5 + $0x1004] sm:$0xf]
    %v636 = vld [vmem:[#allocation5 + $0x1008] sm:$0xff]
    %v637 = vld [vmem:[#allocation5 + $0x1010] sm:$0xff]
    %v638 = vld [vmem:[#allocation5 + $0x1018] sm:$0xff]
    %v639 = vld [vmem:[#allocation5 + $0x1020] sm:$0xff]
    %v640 = vld [vmem:[#allocation5 + $0x1028] sm:$0xff]
    %v641 = vld [vmem:[#allocation5 + $0x1030] sm:$0xff]
    %v642 = vld [vmem:[#allocation5 + $0x1038] sm:$0xff]
    %v643 = vld [vmem:[#allocation5 + $0x1040] sm:$0xff]
    %v644 = vld [vmem:[#allocation5 + $0x1048] sm:$0xff]
    %v645 = vld [vmem:[#allocation5 + $0x1050] sm:$0xf]
    %v646 = vld [vmem:[#allocation5 + $0x1054] sm:$0xff]
    %v647 = vld [vmem:[#allocation5 + $0x105c] sm:$0xff]
    %v648 = vld [vmem:[#allocation5 + $0x1064] sm:$0xff]
    %v649 = vld [vmem:[#allocation5 + $0x106c] sm:$0xff]
    %v650 = vld [vmem:[#allocation5 + $0x1074] sm:$0xff]
    %v651 = vld [vmem:[#allocation5 + $0x107c] sm:$0xff]
    %v652 = vld [vmem:[#allocation5 + $0x1084] sm:$0xff]
    %v653 = vld [vmem:[#allocation5 + $0x108c] sm:$0xff]
    %v654 = vld [vmem:[#allocation5 + $0x1094] sm:$0xff]
    %v655 = vld [vmem:[#allocation5 + $0x109c] sm:$0xf]
    %v656 = vld [vmem:[#allocation5 + $0x10a0] sm:$0xff]
    %v657 = vld [vmem:[#allocation5 + $0x10a8] sm:$0xff]
    %v658 = vld [vmem:[#allocation5 + $0x10b0] sm:$0xff]
    %v659 = vld [vmem:[#allocation5 + $0x10b8] sm:$0xff]
    %v660 = vld [vmem:[#allocation5 + $0x10c0] sm:$0xff]
    %v661 = vld [vmem:[#allocation5 + $0x10c8] sm:$0xff]
    %v662 = vld [vmem:[#allocation5 + $0x10d0] sm:$0xff]
    %v663 = vld [vmem:[#allocation5 + $0x10d8] sm:$0xff]
    %v664 = vld [vmem:[#allocation5 + $0x10e0] sm:$0xff]
    %v665 = vld [vmem:[#allocation5 + $0x10e8] sm:$0xf]
    %v666 = vld [vmem:[#allocation5 + $0x10ec] sm:$0xff]
    %v667 = vld [vmem:[#allocation5 + $0x10f4] sm:$0xff]
    %v668 = vld [vmem:[#allocation5 + $0x10fc] sm:$0xff]
    %v669 = vld [vmem:[#allocation5 + $0x1104] sm:$0xff]
    %v670 = vld [vmem:[#allocation5 + $0x110c] sm:$0xff]
    %v671 = vld [vmem:[#allocation5 + $0x1114] sm:$0xff]
    %v672 = vld [vmem:[#allocation5 + $0x111c] sm:$0xff]
    %v673 = vld [vmem:[#allocation5 + $0x1124] sm:$0xff]
    %v674 = vld [vmem:[#allocation5 + $0x112c] sm:$0xff]
    %v675 = vld [vmem:[#allocation5 + $0x1134] sm:$0xf]
    %v676 = vld [vmem:[#allocation5 + $0x1138] sm:$0xff]
    %v677 = vld [vmem:[#allocation5 + $0x1140] sm:$0xff]
    %v678 = vld [vmem:[#allocation5 + $0x1148] sm:$0xff]
    %v679 = vld [vmem:[#allocation5 + $0x1150] sm:$0xff]
    %v680 = vld [vmem:[#allocation5 + $0x1158] sm:$0xff]
    %v681 = vld [vmem:[#allocation5 + $0x1160] sm:$0xff]
    %v682 = vld [vmem:[#allocation5 + $0x1168] sm:$0xff]
    %v683 = vld [vmem:[#allocation5 + $0x1170] sm:$0xff]
    %v684 = vld [vmem:[#allocation5 + $0x1178] sm:$0xff]
    %v685 = vld [vmem:[#allocation5 + $0x1180] sm:$0xf]
    %v686 = vld [vmem:[#allocation5 + $0x1184] sm:$0xff]
    %v687 = vld [vmem:[#allocation5 + $0x118c] sm:$0xff]
    %v688 = vld [vmem:[#allocation5 + $0x1194] sm:$0xff]
    %v689 = vld [vmem:[#allocation5 + $0x119c] sm:$0xff]
    %v690 = vld [vmem:[#allocation5 + $0x11a4] sm:$0xff]
    %v691 = vld [vmem:[#allocation5 + $0x11ac] sm:$0xff]
    %v692 = vld [vmem:[#allocation5 + $0x11b4] sm:$0xff]
    %v693 = vld [vmem:[#allocation5 + $0x11bc] sm:$0xff]
    %v694 = vld [vmem:[#allocation5 + $0x11c4] sm:$0xff]
    %v695 = vld [vmem:[#allocation5 + $0x11cc] sm:$0xf]
    %v696 = vld [vmem:[#allocation5 + $0x11d0] sm:$0xff]
    %v697 = vld [vmem:[#allocation5 + $0x11d8] sm:$0xff]
    %v698 = vld [vmem:[#allocation5 + $0x11e0] sm:$0xff]
    %v699 = vld [vmem:[#allocation5 + $0x11e8] sm:$0xff]
    %v700 = vld [vmem:[#allocation5 + $0x11f0] sm:$0xff]
    %v701 = vld [vmem:[#allocation5 + $0x11f8] sm:$0xff]
    %v702 = vld [vmem:[#allocation5 + $0x1200] sm:$0xff]
    %v703 = vld [vmem:[#allocation5 + $0x1208] sm:$0xff]
    %v704 = vld [vmem:[#allocation5 + $0x1210] sm:$0xff]
    %v705 = vld [vmem:[#allocation5 + $0x1218] sm:$0xf]
    %v706 = vld [vmem:[#allocation5 + $0x121c] sm:$0xff]
    %v707 = vld [vmem:[#allocation5 + $0x1224] sm:$0xff]
    %v708 = vld [vmem:[#allocation5 + $0x122c] sm:$0xff]
    %v709 = vld [vmem:[#allocation5 + $0x1234] sm:$0xff]
    %v710 = vld [vmem:[#allocation5 + $0x123c] sm:$0xff]
    %v711 = vld [vmem:[#allocation5 + $0x1244] sm:$0xff]
    %v712 = vld [vmem:[#allocation5 + $0x124c] sm:$0xff]
    %v713 = vld [vmem:[#allocation5 + $0x1254] sm:$0xff]
    %v714 = vld [vmem:[#allocation5 + $0x125c] sm:$0xff]
    %v715 = vld [vmem:[#allocation5 + $0x1264] sm:$0xf]
    %v716 = vld [vmem:[#allocation5 + $0x1268] sm:$0xff]
    %v717 = vld [vmem:[#allocation5 + $0x1270] sm:$0xff]
    %v718 = vld [vmem:[#allocation5 + $0x1278] sm:$0xff]
    %v719 = vld [vmem:[#allocation5 + $0x1280] sm:$0xff]
    %v720 = vld [vmem:[#allocation5 + $0x1288] sm:$0xff]
    %v721 = vld [vmem:[#allocation5 + $0x1290] sm:$0xff]
    %v722 = vld [vmem:[#allocation5 + $0x1298] sm:$0xff]
    %v723 = vld [vmem:[#allocation5 + $0x12a0] sm:$0xff]
    %v724 = vld [vmem:[#allocation5 + $0x12a8] sm:$0xff]
    %v725 = vld [vmem:[#allocation5 + $0x12b0] sm:$0xf]
    %v726 = vld [vmem:[#allocation5 + $0x12b4] sm:$0xff]
    %v727 = vld [vmem:[#allocation5 + $0x12bc] sm:$0xff]
    %v728 = vld [vmem:[#allocation5 + $0x12c4] sm:$0xff]
    %v729 = vld [vmem:[#allocation5 + $0x12cc] sm:$0xff]
    %v730 = vld [vmem:[#allocation5 + $0x12d4] sm:$0xff]
    %v731 = vld [vmem:[#allocation5 + $0x12dc] sm:$0xff]
    %v732 = vld [vmem:[#allocation5 + $0x12e4] sm:$0xff]
    %v733 = vld [vmem:[#allocation5 + $0x12ec] sm:$0xff]
    %v734 = vld [vmem:[#allocation5 + $0x12f4] sm:$0xff]
    %v735 = vld [vmem:[#allocation5 + $0x12fc] sm:$0xf]
    %v736 = vld [vmem:[#allocation5 + $0x1300] sm:$0xff]
    %v737 = vld [vmem:[#allocation5 + $0x1308] sm:$0xff]
    %v738 = vld [vmem:[#allocation5 + $0x1310] sm:$0xff]
    %v739 = vld [vmem:[#allocation5 + $0x1318] sm:$0xff]
    %v740 = vld [vmem:[#allocation5 + $0x1320] sm:$0xff]
    %v741 = vld [vmem:[#allocation5 + $0x1328] sm:$0xff]
    %v742 = vld [vmem:[#allocation5 + $0x1330] sm:$0xff]
    %v743 = vld [vmem:[#allocation5 + $0x1338] sm:$0xff]
    %v744 = vld [vmem:[#allocation5 + $0x1340] sm:$0xff]
    %v745 = vld [vmem:[#allocation5 + $0x1348] sm:$0xf]
    %v746 = vld [vmem:[#allocation5 + $0x134c] sm:$0xff]
    %v747 = vld [vmem:[#allocation5 + $0x1354] sm:$0xff]
    %v748 = vld [vmem:[#allocation5 + $0x135c] sm:$0xff]
    %v749 = vld [vmem:[#allocation5 + $0x1364] sm:$0xff]
    %v750 = vld [vmem:[#allocation5 + $0x136c] sm:$0xff]
    %v751 = vld [vmem:[#allocation5 + $0x1374] sm:$0xff]
    %v752 = vld [vmem:[#allocation5 + $0x137c] sm:$0xff]
    %v753 = vld [vmem:[#allocation5 + $0x1384] sm:$0xff]
    %v754 = vld [vmem:[#allocation5 + $0x138c] sm:$0xff]
    %v755 = vld [vmem:[#allocation5 + $0x1394] sm:$0xf]
    %v756 = vld [vmem:[#allocation5 + $0x1398] sm:$0xff]
    %v757 = vld [vmem:[#allocation5 + $0x13a0] sm:$0xff]
    %v758 = vld [vmem:[#allocation5 + $0x13a8] sm:$0xff]
    %v759 = vld [vmem:[#allocation5 + $0x13b0] sm:$0xff]
    %v760 = vld [vmem:[#allocation5 + $0x13b8] sm:$0xff]
    %v761 = vld [vmem:[#allocation5 + $0x13c0] sm:$0xff]
    %v762 = vld [vmem:[#allocation5 + $0x13c8] sm:$0xff]
    %v763 = vld [vmem:[#allocation5 + $0x13d0] sm:$0xff]
    %v764 = vld [vmem:[#allocation5 + $0x13d8] sm:$0xff]
    %v765 = vld [vmem:[#allocation5 + $0x13e0] sm:$0xf]
    %v766 = vld [vmem:[#allocation5 + $0x13e4] sm:$0xff]
    %v767 = vld [vmem:[#allocation5 + $0x13ec] sm:$0xff]
    %v768 = vld [vmem:[#allocation5 + $0x13f4] sm:$0xff]
    %v769 = vld [vmem:[#allocation5 + $0x13fc] sm:$0xff]
    %v770 = vld [vmem:[#allocation5 + $0x1404] sm:$0xff]
    %v771 = vld [vmem:[#allocation5 + $0x140c] sm:$0xff]
    %v772 = vld [vmem:[#allocation5 + $0x1414] sm:$0xff]
    %v773 = vld [vmem:[#allocation5 + $0x141c] sm:$0xff]
    %v774 = vld [vmem:[#allocation5 + $0x1424] sm:$0xff]
    %v775 = vld [vmem:[#allocation5 + $0x142c] sm:$0xf]
    %v776 = vld [vmem:[#allocation5 + $0x1430] sm:$0xff]
    %v777 = vld [vmem:[#allocation5 + $0x1438] sm:$0xff]
    %v778 = vld [vmem:[#allocation5 + $0x1440] sm:$0xff]
    %v779 = vld [vmem:[#allocation5 + $0x1448] sm:$0xff]
    %v780 = vld [vmem:[#allocation5 + $0x1450] sm:$0xff]
    %v781 = vld [vmem:[#allocation5 + $0x1458] sm:$0xff]
    %v782 = vld [vmem:[#allocation5 + $0x1460] sm:$0xff]
    %v783 = vld [vmem:[#allocation5 + $0x1468] sm:$0xff]
    %v784 = vld [vmem:[#allocation5 + $0x1470] sm:$0xff]
    %v785 = vld [vmem:[#allocation5 + $0x1478] sm:$0xf]
    %v786 = vld [vmem:[#allocation5 + $0x147c] sm:$0xff]
    %v787 = vld [vmem:[#allocation5 + $0x1484] sm:$0xff]
    %v788 = vld [vmem:[#allocation5 + $0x148c] sm:$0xff]
    %v789 = vld [vmem:[#allocation5 + $0x1494] sm:$0xff]
    %v790 = vld [vmem:[#allocation5 + $0x149c] sm:$0xff]
    %v791 = vld [vmem:[#allocation5 + $0x14a4] sm:$0xff]
    %v792 = vld [vmem:[#allocation5 + $0x14ac] sm:$0xff]
    %v793 = vld [vmem:[#allocation5 + $0x14b4] sm:$0xff]
    %v794 = vld [vmem:[#allocation5 + $0x14bc] sm:$0xff]
    %v795 = vld [vmem:[#allocation5 + $0x14c4] sm:$0xf]
    %v796 = vld [vmem:[#allocation5 + $0x14c8] sm:$0xff]
    %v797 = vld [vmem:[#allocation5 + $0x14d0] sm:$0xff]
    %v798 = vld [vmem:[#allocation5 + $0x14d8] sm:$0xff]
    %v799 = vld [vmem:[#allocation5 + $0x14e0] sm:$0xff]
    %v800 = vld [vmem:[#allocation5 + $0x14e8] sm:$0xff]
    %v801 = vld [vmem:[#allocation5 + $0x14f0] sm:$0xff]
    %v802 = vld [vmem:[#allocation5 + $0x14f8] sm:$0xff]
    %v803 = vld [vmem:[#allocation5 + $0x1500] sm:$0xff]
    %v804 = vld [vmem:[#allocation5 + $0x1508] sm:$0xff]
    %v805 = vld [vmem:[#allocation5 + $0x1510] sm:$0xf]
    %v806 = vld [vmem:[#allocation5 + $0x1514] sm:$0xff]
    %v807 = vld [vmem:[#allocation5 + $0x151c] sm:$0xff]
    %v808 = vld [vmem:[#allocation5 + $0x1524] sm:$0xff]
    %v809 = vld [vmem:[#allocation5 + $0x152c] sm:$0xff]
    %v810 = vld [vmem:[#allocation5 + $0x1534] sm:$0xff]
    %v811 = vld [vmem:[#allocation5 + $0x153c] sm:$0xff]
    %v812 = vld [vmem:[#allocation5 + $0x1544] sm:$0xff]
    %v813 = vld [vmem:[#allocation5 + $0x154c] sm:$0xff]
    %v814 = vld [vmem:[#allocation5 + $0x1554] sm:$0xff]
    %v815 = vld [vmem:[#allocation5 + $0x155c] sm:$0xf]
    %v816 = vld [vmem:[#allocation5 + $0x1560] sm:$0xff]
    %v817 = vld [vmem:[#allocation5 + $0x1568] sm:$0xff]
    %v818 = vld [vmem:[#allocation5 + $0x1570] sm:$0xff]
    %v819 = vld [vmem:[#allocation5 + $0x1578] sm:$0xff]
    %v820 = vld [vmem:[#allocation5 + $0x1580] sm:$0xff]
    %v821 = vld [vmem:[#allocation5 + $0x1588] sm:$0xff]
    %v822 = vld [vmem:[#allocation5 + $0x1590] sm:$0xff]
    %v823 = vld [vmem:[#allocation5 + $0x1598] sm:$0xff]
    %v824 = vld [vmem:[#allocation5 + $0x15a0] sm:$0xff]
    %v825 = vld [vmem:[#allocation5 + $0x15a8] sm:$0xf]
    %v826 = vld [vmem:[#allocation5 + $0x15ac] sm:$0xff]
    %v827 = vld [vmem:[#allocation5 + $0x15b4] sm:$0xff]
    %v828 = vld [vmem:[#allocation5 + $0x15bc] sm:$0xff]
    %v829 = vld [vmem:[#allocation5 + $0x15c4] sm:$0xff]
    %v830 = vld [vmem:[#allocation5 + $0x15cc] sm:$0xff]
    %v831 = vld [vmem:[#allocation5 + $0x15d4] sm:$0xff]
    %v832 = vld [vmem:[#allocation5 + $0x15dc] sm:$0xff]
    %v833 = vld [vmem:[#allocation5 + $0x15e4] sm:$0xff]
    %v834 = vld [vmem:[#allocation5 + $0x15ec] sm:$0xff]
    %v835 = vld [vmem:[#allocation5 + $0x15f4] sm:$0xf]
    %v836 = vld [vmem:[#allocation5 + $0x15f8] sm:$0xff]
    %v837 = vld [vmem:[#allocation5 + $0x1600] sm:$0xff]
    %v838 = vld [vmem:[#allocation5 + $0x1608] sm:$0xff]
    %v839 = vld [vmem:[#allocation5 + $0x1610] sm:$0xff]
    %v840 = vld [vmem:[#allocation5 + $0x1618] sm:$0xff]
    %v841 = vld [vmem:[#allocation5 + $0x1620] sm:$0xff]
    %v842 = vld [vmem:[#allocation5 + $0x1628] sm:$0xff]
    %v843 = vld [vmem:[#allocation5 + $0x1630] sm:$0xff]
    %v844 = vld [vmem:[#allocation5 + $0x1638] sm:$0xff]
    %v845 = vld [vmem:[#allocation5 + $0x1640] sm:$0xf]
    %v852 = vunpack.c.l.b16 %v90
    %v853 = vunpack.c.h.b16 %v90
    %v854 = vunpack.c.l.b16 %v91
    %v855 = vunpack.c.h.b16 %v91
    %v856 = vunpack.c.l.b16 %v92
    %v857 = vunpack.c.l.b16 %v93
    %v858 = vunpack.c.h.b16 %v93
    %v859 = vunpack.c.l.b16 %v94
    %v860 = vunpack.c.h.b16 %v94
    %v861 = vunpack.c.l.b16 %v95
    %v862 = vpack.c.b16 %v857, %v852
    %v863 = vpack.c.b16 %v858, %v853
    %v864 = vpack.c.b16 %v859, %v854
    %v865 = vpack.c.b16 %v860, %v855
    %v866 = vpack.c.b16 %v861, %v856
    %v1621 = vunpack.c.l.b16 %v96
    %v1622 = vunpack.c.h.b16 %v96
    %v1623 = vunpack.c.l.b16 %v97
    %v1624 = vunpack.c.h.b16 %v97
    %v1625 = vunpack.c.l.b16 %v98
    %v1626 = vunpack.c.h.b16 %v98
    %v1627 = vunpack.c.l.b16 %v99
    %v1628 = vunpack.c.h.b16 %v99
    %v1629 = vunpack.c.l.b16 %v100
    %v1630 = vunpack.c.h.b16 %v100
    %v1631 = vunpack.c.l.b16 %v101
    %v1632 = vunpack.c.h.b16 %v101
    %v1633 = vunpack.c.l.b16 %v102
    %v1634 = vunpack.c.h.b16 %v102
    %v1635 = vunpack.c.l.b16 %v103
    %v1636 = vunpack.c.h.b16 %v103
    %v1637 = vunpack.c.l.b16 %v104
    %v1638 = vunpack.c.h.b16 %v104
    %v1639 = vunpack.c.l.b16 %v105
    %v1640 = vunpack.c.l.b16 %v106
    %v1641 = vunpack.c.h.b16 %v106
    %v1642 = vunpack.c.l.b16 %v107
    %v1643 = vunpack.c.h.b16 %v107
    %v1644 = vunpack.c.l.b16 %v108
    %v1645 = vunpack.c.h.b16 %v108
    %v1646 = vunpack.c.l.b16 %v109
    %v1647 = vunpack.c.h.b16 %v109
    %v1648 = vunpack.c.l.b16 %v110
    %v1649 = vunpack.c.h.b16 %v110
    %v1650 = vunpack.c.l.b16 %v111
    %v1651 = vunpack.c.h.b16 %v111
    %v1652 = vunpack.c.l.b16 %v112
    %v1653 = vunpack.c.h.b16 %v112
    %v1654 = vunpack.c.l.b16 %v113
    %v1655 = vunpack.c.h.b16 %v113
    %v1656 = vunpack.c.l.b16 %v114
    %v1657 = vunpack.c.h.b16 %v114
    %v1658 = vunpack.c.l.b16 %v115
    %v1659 = vunpack.c.l.b16 %v116
    %v1660 = vunpack.c.h.b16 %v116
    %v1661 = vunpack.c.l.b16 %v117
    %v1662 = vunpack.c.h.b16 %v117
    %v1663 = vunpack.c.l.b16 %v118
    %v1664 = vunpack.c.h.b16 %v118
    %v1665 = vunpack.c.l.b16 %v119
    %v1666 = vunpack.c.h.b16 %v119
    %v1667 = vunpack.c.l.b16 %v120
    %v1668 = vunpack.c.h.b16 %v120
    %v1669 = vunpack.c.l.b16 %v121
    %v1670 = vunpack.c.h.b16 %v121
    %v1671 = vunpack.c.l.b16 %v122
    %v1672 = vunpack.c.h.b16 %v122
    %v1673 = vunpack.c.l.b16 %v123
    %v1674 = vunpack.c.h.b16 %v123
    %v1675 = vunpack.c.l.b16 %v124
    %v1676 = vunpack.c.h.b16 %v124
    %v1677 = vunpack.c.l.b16 %v125
    %v1678 = vunpack.c.l.b16 %v126
    %v1679 = vunpack.c.h.b16 %v126
    %v1680 = vunpack.c.l.b16 %v127
    %v1681 = vunpack.c.h.b16 %v127
    %v1682 = vunpack.c.l.b16 %v128
    %v1683 = vunpack.c.h.b16 %v128
    %v1684 = vunpack.c.l.b16 %v129
    %v1685 = vunpack.c.h.b16 %v129
    %v1686 = vunpack.c.l.b16 %v130
    %v1687 = vunpack.c.h.b16 %v130
    %v1688 = vunpack.c.l.b16 %v131
    %v1689 = vunpack.c.h.b16 %v131
    %v1690 = vunpack.c.l.b16 %v132
    %v1691 = vunpack.c.h.b16 %v132
    %v1692 = vunpack.c.l.b16 %v133
    %v1693 = vunpack.c.h.b16 %v133
    %v1694 = vunpack.c.l.b16 %v134
    %v1695 = vunpack.c.h.b16 %v134
    %v1696 = vunpack.c.l.b16 %v135
    %v1697 = vunpack.c.l.b16 %v136
    %v1698 = vunpack.c.h.b16 %v136
    %v1699 = vunpack.c.l.b16 %v137
    %v1700 = vunpack.c.h.b16 %v137
    %v1701 = vunpack.c.l.b16 %v138
    %v1702 = vunpack.c.h.b16 %v138
    %v1703 = vunpack.c.l.b16 %v139
    %v1704 = vunpack.c.h.b16 %v139
    %v1705 = vunpack.c.l.b16 %v140
    %v1706 = vunpack.c.h.b16 %v140
    %v1707 = vunpack.c.l.b16 %v141
    %v1708 = vunpack.c.h.b16 %v141
    %v1709 = vunpack.c.l.b16 %v142
    %v1710 = vunpack.c.h.b16 %v142
    %v1711 = vunpack.c.l.b16 %v143
    %v1712 = vunpack.c.h.b16 %v143
    %v1713 = vunpack.c.l.b16 %v144
    %v1714 = vunpack.c.h.b16 %v144
    %v1715 = vunpack.c.l.b16 %v145
    %v1716 = vunpack.c.l.b16 %v146
    %v1717 = vunpack.c.h.b16 %v146
    %v1718 = vunpack.c.l.b16 %v147
    %v1719 = vunpack.c.h.b16 %v147
    %v1720 = vunpack.c.l.b16 %v148
    %v1721 = vunpack.c.h.b16 %v148
    %v1722 = vunpack.c.l.b16 %v149
    %v1723 = vunpack.c.h.b16 %v149
    %v1724 = vunpack.c.l.b16 %v150
    %v1725 = vunpack.c.h.b16 %v150
    %v1726 = vunpack.c.l.b16 %v151
    %v1727 = vunpack.c.h.b16 %v151
    %v1728 = vunpack.c.l.b16 %v152
    %v1729 = vunpack.c.h.b16 %v152
    %v1730 = vunpack.c.l.b16 %v153
    %v1731 = vunpack.c.h.b16 %v153
    %v1732 = vunpack.c.l.b16 %v154
    %v1733 = vunpack.c.h.b16 %v154
    %v1734 = vunpack.c.l.b16 %v155
    %v1735 = vunpack.c.l.b16 %v156
    %v1736 = vunpack.c.h.b16 %v156
    %v1737 = vunpack.c.l.b16 %v157
    %v1738 = vunpack.c.h.b16 %v157
    %v1739 = vunpack.c.l.b16 %v158
    %v1740 = vunpack.c.h.b16 %v158
    %v1741 = vunpack.c.l.b16 %v159
    %v1742 = vunpack.c.h.b16 %v159
    %v1743 = vunpack.c.l.b16 %v160
    %v1744 = vunpack.c.h.b16 %v160
    %v1745 = vunpack.c.l.b16 %v161
    %v1746 = vunpack.c.h.b16 %v161
    %v1747 = vunpack.c.l.b16 %v162
    %v1748 = vunpack.c.h.b16 %v162
    %v1749 = vunpack.c.l.b16 %v163
    %v1750 = vunpack.c.h.b16 %v163
    %v1751 = vunpack.c.l.b16 %v164
    %v1752 = vunpack.c.h.b16 %v164
    %v1753 = vunpack.c.l.b16 %v165
    %v1754 = vunpack.c.l.b16 %v166
    %v1755 = vunpack.c.h.b16 %v166
    %v1756 = vunpack.c.l.b16 %v167
    %v1757 = vunpack.c.h.b16 %v167
    %v1758 = vunpack.c.l.b16 %v168
    %v1759 = vunpack.c.h.b16 %v168
    %v1760 = vunpack.c.l.b16 %v169
    %v1761 = vunpack.c.h.b16 %v169
    %v1762 = vunpack.c.l.b16 %v170
    %v1763 = vunpack.c.h.b16 %v170
    %v1764 = vunpack.c.l.b16 %v171
    %v1765 = vunpack.c.h.b16 %v171
    %v1766 = vunpack.c.l.b16 %v172
    %v1767 = vunpack.c.h.b16 %v172
    %v1768 = vunpack.c.l.b16 %v173
    %v1769 = vunpack.c.h.b16 %v173
    %v1770 = vunpack.c.l.b16 %v174
    %v1771 = vunpack.c.h.b16 %v174
    %v1772 = vunpack.c.l.b16 %v175
    %v1773 = vunpack.c.l.b16 %v176
    %v1774 = vunpack.c.h.b16 %v176
    %v1775 = vunpack.c.l.b16 %v177
    %v1776 = vunpack.c.h.b16 %v177
    %v1777 = vunpack.c.l.b16 %v178
    %v1778 = vunpack.c.h.b16 %v178
    %v1779 = vunpack.c.l.b16 %v179
    %v1780 = vunpack.c.h.b16 %v179
    %v1781 = vunpack.c.l.b16 %v180
    %v1782 = vunpack.c.h.b16 %v180
    %v1783 = vunpack.c.l.b16 %v181
    %v1784 = vunpack.c.h.b16 %v181
    %v1785 = vunpack.c.l.b16 %v182
    %v1786 = vunpack.c.h.b16 %v182
    %v1787 = vunpack.c.l.b16 %v183
    %v1788 = vunpack.c.h.b16 %v183
    %v1789 = vunpack.c.l.b16 %v184
    %v1790 = vunpack.c.h.b16 %v184
    %v1791 = vunpack.c.l.b16 %v185
    %v1792 = vunpack.c.l.b16 %v186
    %v1793 = vunpack.c.h.b16 %v186
    %v1794 = vunpack.c.l.b16 %v187
    %v1795 = vunpack.c.h.b16 %v187
    %v1796 = vunpack.c.l.b16 %v188
    %v1797 = vunpack.c.h.b16 %v188
    %v1798 = vunpack.c.l.b16 %v189
    %v1799 = vunpack.c.h.b16 %v189
    %v1800 = vunpack.c.l.b16 %v190
    %v1801 = vunpack.c.h.b16 %v190
    %v1802 = vunpack.c.l.b16 %v191
    %v1803 = vunpack.c.h.b16 %v191
    %v1804 = vunpack.c.l.b16 %v192
    %v1805 = vunpack.c.h.b16 %v192
    %v1806 = vunpack.c.l.b16 %v193
    %v1807 = vunpack.c.h.b16 %v193
    %v1808 = vunpack.c.l.b16 %v194
    %v1809 = vunpack.c.h.b16 %v194
    %v1810 = vunpack.c.l.b16 %v195
    %v1811 = vunpack.c.l.b16 %v196
    %v1812 = vunpack.c.h.b16 %v196
    %v1813 = vunpack.c.l.b16 %v197
    %v1814 = vunpack.c.h.b16 %v197
    %v1815 = vunpack.c.l.b16 %v198
    %v1816 = vunpack.c.h.b16 %v198
    %v1817 = vunpack.c.l.b16 %v199
    %v1818 = vunpack.c.h.b16 %v199
    %v1819 = vunpack.c.l.b16 %v200
    %v1820 = vunpack.c.h.b16 %v200
    %v1821 = vunpack.c.l.b16 %v201
    %v1822 = vunpack.c.h.b16 %v201
    %v1823 = vunpack.c.l.b16 %v202
    %v1824 = vunpack.c.h.b16 %v202
    %v1825 = vunpack.c.l.b16 %v203
    %v1826 = vunpack.c.h.b16 %v203
    %v1827 = vunpack.c.l.b16 %v204
    %v1828 = vunpack.c.h.b16 %v204
    %v1829 = vunpack.c.l.b16 %v205
    %v1830 = vunpack.c.l.b16 %v206
    %v1831 = vunpack.c.h.b16 %v206
    %v1832 = vunpack.c.l.b16 %v207
    %v1833 = vunpack.c.h.b16 %v207
    %v1834 = vunpack.c.l.b16 %v208
    %v1835 = vunpack.c.h.b16 %v208
    %v1836 = vunpack.c.l.b16 %v209
    %v1837 = vunpack.c.h.b16 %v209
    %v1838 = vunpack.c.l.b16 %v210
    %v1839 = vunpack.c.h.b16 %v210
    %v1840 = vunpack.c.l.b16 %v211
    %v1841 = vunpack.c.h.b16 %v211
    %v1842 = vunpack.c.l.b16 %v212
    %v1843 = vunpack.c.h.b16 %v212
    %v1844 = vunpack.c.l.b16 %v213
    %v1845 = vunpack.c.h.b16 %v213
    %v1846 = vunpack.c.l.b16 %v214
    %v1847 = vunpack.c.h.b16 %v214
    %v1848 = vunpack.c.l.b16 %v215
    %v1849 = vunpack.c.l.b16 %v216
    %v1850 = vunpack.c.h.b16 %v216
    %v1851 = vunpack.c.l.b16 %v217
    %v1852 = vunpack.c.h.b16 %v217
    %v1853 = vunpack.c.l.b16 %v218
    %v1854 = vunpack.c.h.b16 %v218
    %v1855 = vunpack.c.l.b16 %v219
    %v1856 = vunpack.c.h.b16 %v219
    %v1857 = vunpack.c.l.b16 %v220
    %v1858 = vunpack.c.h.b16 %v220
    %v1859 = vunpack.c.l.b16 %v221
    %v1860 = vunpack.c.h.b16 %v221
    %v1861 = vunpack.c.l.b16 %v222
    %v1862 = vunpack.c.h.b16 %v222
    %v1863 = vunpack.c.l.b16 %v223
    %v1864 = vunpack.c.h.b16 %v223
    %v1865 = vunpack.c.l.b16 %v224
    %v1866 = vunpack.c.h.b16 %v224
    %v1867 = vunpack.c.l.b16 %v225
    %v1868 = vunpack.c.l.b16 %v226
    %v1869 = vunpack.c.h.b16 %v226
    %v1870 = vunpack.c.l.b16 %v227
    %v1871 = vunpack.c.h.b16 %v227
    %v1872 = vunpack.c.l.b16 %v228
    %v1873 = vunpack.c.h.b16 %v228
    %v1874 = vunpack.c.l.b16 %v229
    %v1875 = vunpack.c.h.b16 %v229
    %v1876 = vunpack.c.l.b16 %v230
    %v1877 = vunpack.c.h.b16 %v230
    %v1878 = vunpack.c.l.b16 %v231
    %v1879 = vunpack.c.h.b16 %v231
    %v1880 = vunpack.c.l.b16 %v232
    %v1881 = vunpack.c.h.b16 %v232
    %v1882 = vunpack.c.l.b16 %v233
    %v1883 = vunpack.c.h.b16 %v233
    %v1884 = vunpack.c.l.b16 %v234
    %v1885 = vunpack.c.h.b16 %v234
    %v1886 = vunpack.c.l.b16 %v235
    %v1887 = vunpack.c.l.b16 %v236
    %v1888 = vunpack.c.h.b16 %v236
    %v1889 = vunpack.c.l.b16 %v237
    %v1890 = vunpack.c.h.b16 %v237
    %v1891 = vunpack.c.l.b16 %v238
    %v1892 = vunpack.c.h.b16 %v238
    %v1893 = vunpack.c.l.b16 %v239
    %v1894 = vunpack.c.h.b16 %v239
    %v1895 = vunpack.c.l.b16 %v240
    %v1896 = vunpack.c.h.b16 %v240
    %v1897 = vunpack.c.l.b16 %v241
    %v1898 = vunpack.c.h.b16 %v241
    %v1899 = vunpack.c.l.b16 %v242
    %v1900 = vunpack.c.h.b16 %v242
    %v1901 = vunpack.c.l.b16 %v243
    %v1902 = vunpack.c.h.b16 %v243
    %v1903 = vunpack.c.l.b16 %v244
    %v1904 = vunpack.c.h.b16 %v244
    %v1905 = vunpack.c.l.b16 %v245
    %v1906 = vunpack.c.l.b16 %v246
    %v1907 = vunpack.c.h.b16 %v246
    %v1908 = vunpack.c.l.b16 %v247
    %v1909 = vunpack.c.h.b16 %v247
    %v1910 = vunpack.c.l.b16 %v248
    %v1911 = vunpack.c.h.b16 %v248
    %v1912 = vunpack.c.l.b16 %v249
    %v1913 = vunpack.c.h.b16 %v249
    %v1914 = vunpack.c.l.b16 %v250
    %v1915 = vunpack.c.h.b16 %v250
    %v1916 = vunpack.c.l.b16 %v251
    %v1917 = vunpack.c.h.b16 %v251
    %v1918 = vunpack.c.l.b16 %v252
    %v1919 = vunpack.c.h.b16 %v252
    %v1920 = vunpack.c.l.b16 %v253
    %v1921 = vunpack.c.h.b16 %v253
    %v1922 = vunpack.c.l.b16 %v254
    %v1923 = vunpack.c.h.b16 %v254
    %v1924 = vunpack.c.l.b16 %v255
    %v1925 = vunpack.c.l.b16 %v256
    %v1926 = vunpack.c.h.b16 %v256
    %v1927 = vunpack.c.l.b16 %v257
    %v1928 = vunpack.c.h.b16 %v257
    %v1929 = vunpack.c.l.b16 %v258
    %v1930 = vunpack.c.h.b16 %v258
    %v1931 = vunpack.c.l.b16 %v259
    %v1932 = vunpack.c.h.b16 %v259
    %v1933 = vunpack.c.l.b16 %v260
    %v1934 = vunpack.c.h.b16 %v260
    %v1935 = vunpack.c.l.b16 %v261
    %v1936 = vunpack.c.h.b16 %v261
    %v1937 = vunpack.c.l.b16 %v262
    %v1938 = vunpack.c.h.b16 %v262
    %v1939 = vunpack.c.l.b16 %v263
    %v1940 = vunpack.c.h.b16 %v263
    %v1941 = vunpack.c.l.b16 %v264
    %v1942 = vunpack.c.h.b16 %v264
    %v1943 = vunpack.c.l.b16 %v265
    %v1944 = vunpack.c.l.b16 %v266
    %v1945 = vunpack.c.h.b16 %v266
    %v1946 = vunpack.c.l.b16 %v267
    %v1947 = vunpack.c.h.b16 %v267
    %v1948 = vunpack.c.l.b16 %v268
    %v1949 = vunpack.c.h.b16 %v268
    %v1950 = vunpack.c.l.b16 %v269
    %v1951 = vunpack.c.h.b16 %v269
    %v1952 = vunpack.c.l.b16 %v270
    %v1953 = vunpack.c.h.b16 %v270
    %v1954 = vunpack.c.l.b16 %v271
    %v1955 = vunpack.c.h.b16 %v271
    %v1956 = vunpack.c.l.b16 %v272
    %v1957 = vunpack.c.h.b16 %v272
    %v1958 = vunpack.c.l.b16 %v273
    %v1959 = vunpack.c.h.b16 %v273
    %v1960 = vunpack.c.l.b16 %v274
    %v1961 = vunpack.c.h.b16 %v274
    %v1962 = vunpack.c.l.b16 %v275
    %v1963 = vunpack.c.l.b16 %v276
    %v1964 = vunpack.c.h.b16 %v276
    %v1965 = vunpack.c.l.b16 %v277
    %v1966 = vunpack.c.h.b16 %v277
    %v1967 = vunpack.c.l.b16 %v278
    %v1968 = vunpack.c.h.b16 %v278
    %v1969 = vunpack.c.l.b16 %v279
    %v1970 = vunpack.c.h.b16 %v279
    %v1971 = vunpack.c.l.b16 %v280
    %v1972 = vunpack.c.h.b16 %v280
    %v1973 = vunpack.c.l.b16 %v281
    %v1974 = vunpack.c.h.b16 %v281
    %v1975 = vunpack.c.l.b16 %v282
    %v1976 = vunpack.c.h.b16 %v282
    %v1977 = vunpack.c.l.b16 %v283
    %v1978 = vunpack.c.h.b16 %v283
    %v1979 = vunpack.c.l.b16 %v284
    %v1980 = vunpack.c.h.b16 %v284
    %v1981 = vunpack.c.l.b16 %v285
    %v1982 = vunpack.c.l.b16 %v286
    %v1983 = vunpack.c.h.b16 %v286
    %v1984 = vunpack.c.l.b16 %v287
    %v1985 = vunpack.c.h.b16 %v287
    %v1986 = vunpack.c.l.b16 %v288
    %v1987 = vunpack.c.h.b16 %v288
    %v1988 = vunpack.c.l.b16 %v289
    %v1989 = vunpack.c.h.b16 %v289
    %v1990 = vunpack.c.l.b16 %v290
    %v1991 = vunpack.c.h.b16 %v290
    %v1992 = vunpack.c.l.b16 %v291
    %v1993 = vunpack.c.h.b16 %v291
    %v1994 = vunpack.c.l.b16 %v292
    %v1995 = vunpack.c.h.b16 %v292
    %v1996 = vunpack.c.l.b16 %v293
    %v1997 = vunpack.c.h.b16 %v293
    %v1998 = vunpack.c.l.b16 %v294
    %v1999 = vunpack.c.h.b16 %v294
    %v2000 = vunpack.c.l.b16 %v295
    %v2001 = vunpack.c.l.b16 %v296
    %v2002 = vunpack.c.h.b16 %v296
    %v2003 = vunpack.c.l.b16 %v297
    %v2004 = vunpack.c.h.b16 %v297
    %v2005 = vunpack.c.l.b16 %v298
    %v2006 = vunpack.c.h.b16 %v298
    %v2007 = vunpack.c.l.b16 %v299
    %v2008 = vunpack.c.h.b16 %v299
    %v2009 = vunpack.c.l.b16 %v300
    %v2010 = vunpack.c.h.b16 %v300
    %v2011 = vunpack.c.l.b16 %v301
    %v2012 = vunpack.c.h.b16 %v301
    %v2013 = vunpack.c.l.b16 %v302
    %v2014 = vunpack.c.h.b16 %v302
    %v2015 = vunpack.c.l.b16 %v303
    %v2016 = vunpack.c.h.b16 %v303
    %v2017 = vunpack.c.l.b16 %v304
    %v2018 = vunpack.c.h.b16 %v304
    %v2019 = vunpack.c.l.b16 %v305
    %v2020 = vunpack.c.l.b16 %v306
    %v2021 = vunpack.c.h.b16 %v306
    %v2022 = vunpack.c.l.b16 %v307
    %v2023 = vunpack.c.h.b16 %v307
    %v2024 = vunpack.c.l.b16 %v308
    %v2025 = vunpack.c.h.b16 %v308
    %v2026 = vunpack.c.l.b16 %v309
    %v2027 = vunpack.c.h.b16 %v309
    %v2028 = vunpack.c.l.b16 %v310
    %v2029 = vunpack.c.h.b16 %v310
    %v2030 = vunpack.c.l.b16 %v311
    %v2031 = vunpack.c.h.b16 %v311
    %v2032 = vunpack.c.l.b16 %v312
    %v2033 = vunpack.c.h.b16 %v312
    %v2034 = vunpack.c.l.b16 %v313
    %v2035 = vunpack.c.h.b16 %v313
    %v2036 = vunpack.c.l.b16 %v314
    %v2037 = vunpack.c.h.b16 %v314
    %v2038 = vunpack.c.l.b16 %v315
    %v2039 = vunpack.c.l.b16 %v316
    %v2040 = vunpack.c.h.b16 %v316
    %v2041 = vunpack.c.l.b16 %v317
    %v2042 = vunpack.c.h.b16 %v317
    %v2043 = vunpack.c.l.b16 %v318
    %v2044 = vunpack.c.h.b16 %v318
    %v2045 = vunpack.c.l.b16 %v319
    %v2046 = vunpack.c.h.b16 %v319
    %v2047 = vunpack.c.l.b16 %v320
    %v2048 = vunpack.c.h.b16 %v320
    %v2049 = vunpack.c.l.b16 %v321
    %v2050 = vunpack.c.h.b16 %v321
    %v2051 = vunpack.c.l.b16 %v322
    %v2052 = vunpack.c.h.b16 %v322
    %v2053 = vunpack.c.l.b16 %v323
    %v2054 = vunpack.c.h.b16 %v323
    %v2055 = vunpack.c.l.b16 %v324
    %v2056 = vunpack.c.h.b16 %v324
    %v2057 = vunpack.c.l.b16 %v325
    %v2058 = vunpack.c.l.b16 %v326
    %v2059 = vunpack.c.h.b16 %v326
    %v2060 = vunpack.c.l.b16 %v327
    %v2061 = vunpack.c.h.b16 %v327
    %v2062 = vunpack.c.l.b16 %v328
    %v2063 = vunpack.c.h.b16 %v328
    %v2064 = vunpack.c.l.b16 %v329
    %v2065 = vunpack.c.h.b16 %v329
    %v2066 = vunpack.c.l.b16 %v330
    %v2067 = vunpack.c.h.b16 %v330
    %v2068 = vunpack.c.l.b16 %v331
    %v2069 = vunpack.c.h.b16 %v331
    %v2070 = vunpack.c.l.b16 %v332
    %v2071 = vunpack.c.h.b16 %v332
    %v2072 = vunpack.c.l.b16 %v333
    %v2073 = vunpack.c.h.b16 %v333
    %v2074 = vunpack.c.l.b16 %v334
    %v2075 = vunpack.c.h.b16 %v334
    %v2076 = vunpack.c.l.b16 %v335
    %v2077 = vunpack.c.l.b16 %v336
    %v2078 = vunpack.c.h.b16 %v336
    %v2079 = vunpack.c.l.b16 %v337
    %v2080 = vunpack.c.h.b16 %v337
    %v2081 = vunpack.c.l.b16 %v338
    %v2082 = vunpack.c.h.b16 %v338
    %v2083 = vunpack.c.l.b16 %v339
    %v2084 = vunpack.c.h.b16 %v339
    %v2085 = vunpack.c.l.b16 %v340
    %v2086 = vunpack.c.h.b16 %v340
    %v2087 = vunpack.c.l.b16 %v341
    %v2088 = vunpack.c.h.b16 %v341
    %v2089 = vunpack.c.l.b16 %v342
    %v2090 = vunpack.c.h.b16 %v342
    %v2091 = vunpack.c.l.b16 %v343
    %v2092 = vunpack.c.h.b16 %v343
    %v2093 = vunpack.c.l.b16 %v344
    %v2094 = vunpack.c.h.b16 %v344
    %v2095 = vunpack.c.l.b16 %v345
    %v2096 = vunpack.c.l.b16 %v346
    %v2097 = vunpack.c.h.b16 %v346
    %v2098 = vunpack.c.l.b16 %v347
    %v2099 = vunpack.c.h.b16 %v347
    %v2100 = vunpack.c.l.b16 %v348
    %v2101 = vunpack.c.h.b16 %v348
    %v2102 = vunpack.c.l.b16 %v349
    %v2103 = vunpack.c.h.b16 %v349
    %v2104 = vunpack.c.l.b16 %v350
    %v2105 = vunpack.c.h.b16 %v350
    %v2106 = vunpack.c.l.b16 %v351
    %v2107 = vunpack.c.h.b16 %v351
    %v2108 = vunpack.c.l.b16 %v352
    %v2109 = vunpack.c.h.b16 %v352
    %v2110 = vunpack.c.l.b16 %v353
    %v2111 = vunpack.c.h.b16 %v353
    %v2112 = vunpack.c.l.b16 %v354
    %v2113 = vunpack.c.h.b16 %v354
    %v2114 = vunpack.c.l.b16 %v355
    %v2115 = vunpack.c.l.b16 %v356
    %v2116 = vunpack.c.h.b16 %v356
    %v2117 = vunpack.c.l.b16 %v357
    %v2118 = vunpack.c.h.b16 %v357
    %v2119 = vunpack.c.l.b16 %v358
    %v2120 = vunpack.c.h.b16 %v358
    %v2121 = vunpack.c.l.b16 %v359
    %v2122 = vunpack.c.h.b16 %v359
    %v2123 = vunpack.c.l.b16 %v360
    %v2124 = vunpack.c.h.b16 %v360
    %v2125 = vunpack.c.l.b16 %v361
    %v2126 = vunpack.c.h.b16 %v361
    %v2127 = vunpack.c.l.b16 %v362
    %v2128 = vunpack.c.h.b16 %v362
    %v2129 = vunpack.c.l.b16 %v363
    %v2130 = vunpack.c.h.b16 %v363
    %v2131 = vunpack.c.l.b16 %v364
    %v2132 = vunpack.c.h.b16 %v364
    %v2133 = vunpack.c.l.b16 %v365
    %v2134 = vunpack.c.l.b16 %v366
    %v2135 = vunpack.c.h.b16 %v366
    %v2136 = vunpack.c.l.b16 %v367
    %v2137 = vunpack.c.h.b16 %v367
    %v2138 = vunpack.c.l.b16 %v368
    %v2139 = vunpack.c.h.b16 %v368
    %v2140 = vunpack.c.l.b16 %v369
    %v2141 = vunpack.c.h.b16 %v369
    %v2142 = vunpack.c.l.b16 %v370
    %v2143 = vunpack.c.h.b16 %v370
    %v2144 = vunpack.c.l.b16 %v371
    %v2145 = vunpack.c.h.b16 %v371
    %v2146 = vunpack.c.l.b16 %v372
    %v2147 = vunpack.c.h.b16 %v372
    %v2148 = vunpack.c.l.b16 %v373
    %v2149 = vunpack.c.h.b16 %v373
    %v2150 = vunpack.c.l.b16 %v374
    %v2151 = vunpack.c.h.b16 %v374
    %v2152 = vunpack.c.l.b16 %v375
    %v2153 = vunpack.c.l.b16 %v376
    %v2154 = vunpack.c.h.b16 %v376
    %v2155 = vunpack.c.l.b16 %v377
    %v2156 = vunpack.c.h.b16 %v377
    %v2157 = vunpack.c.l.b16 %v378
    %v2158 = vunpack.c.h.b16 %v378
    %v2159 = vunpack.c.l.b16 %v379
    %v2160 = vunpack.c.h.b16 %v379
    %v2161 = vunpack.c.l.b16 %v380
    %v2162 = vunpack.c.h.b16 %v380
    %v2163 = vunpack.c.l.b16 %v381
    %v2164 = vunpack.c.h.b16 %v381
    %v2165 = vunpack.c.l.b16 %v382
    %v2166 = vunpack.c.h.b16 %v382
    %v2167 = vunpack.c.l.b16 %v383
    %v2168 = vunpack.c.h.b16 %v383
    %v2169 = vunpack.c.l.b16 %v384
    %v2170 = vunpack.c.h.b16 %v384
    %v2171 = vunpack.c.l.b16 %v385
    %v2172 = vunpack.c.l.b16 %v386
    %v2173 = vunpack.c.h.b16 %v386
    %v2174 = vunpack.c.l.b16 %v387
    %v2175 = vunpack.c.h.b16 %v387
    %v2176 = vunpack.c.l.b16 %v388
    %v2177 = vunpack.c.h.b16 %v388
    %v2178 = vunpack.c.l.b16 %v389
    %v2179 = vunpack.c.h.b16 %v389
    %v2180 = vunpack.c.l.b16 %v390
    %v2181 = vunpack.c.h.b16 %v390
    %v2182 = vunpack.c.l.b16 %v391
    %v2183 = vunpack.c.h.b16 %v391
    %v2184 = vunpack.c.l.b16 %v392
    %v2185 = vunpack.c.h.b16 %v392
    %v2186 = vunpack.c.l.b16 %v393
    %v2187 = vunpack.c.h.b16 %v393
    %v2188 = vunpack.c.l.b16 %v394
    %v2189 = vunpack.c.h.b16 %v394
    %v2190 = vunpack.c.l.b16 %v395
    %v2191 = vunpack.c.l.b16 %v396
    %v2192 = vunpack.c.h.b16 %v396
    %v2193 = vunpack.c.l.b16 %v397
    %v2194 = vunpack.c.h.b16 %v397
    %v2195 = vunpack.c.l.b16 %v398
    %v2196 = vunpack.c.h.b16 %v398
    %v2197 = vunpack.c.l.b16 %v399
    %v2198 = vunpack.c.h.b16 %v399
    %v2199 = vunpack.c.l.b16 %v400
    %v2200 = vunpack.c.h.b16 %v400
    %v2201 = vunpack.c.l.b16 %v401
    %v2202 = vunpack.c.h.b16 %v401
    %v2203 = vunpack.c.l.b16 %v402
    %v2204 = vunpack.c.h.b16 %v402
    %v2205 = vunpack.c.l.b16 %v403
    %v2206 = vunpack.c.h.b16 %v403
    %v2207 = vunpack.c.l.b16 %v404
    %v2208 = vunpack.c.h.b16 %v404
    %v2209 = vunpack.c.l.b16 %v405
    %v2210 = vunpack.c.l.b16 %v406
    %v2211 = vunpack.c.h.b16 %v406
    %v2212 = vunpack.c.l.b16 %v407
    %v2213 = vunpack.c.h.b16 %v407
    %v2214 = vunpack.c.l.b16 %v408
    %v2215 = vunpack.c.h.b16 %v408
    %v2216 = vunpack.c.l.b16 %v409
    %v2217 = vunpack.c.h.b16 %v409
    %v2218 = vunpack.c.l.b16 %v410
    %v2219 = vunpack.c.h.b16 %v410
    %v2220 = vunpack.c.l.b16 %v411
    %v2221 = vunpack.c.h.b16 %v411
    %v2222 = vunpack.c.l.b16 %v412
    %v2223 = vunpack.c.h.b16 %v412
    %v2224 = vunpack.c.l.b16 %v413
    %v2225 = vunpack.c.h.b16 %v413
    %v2226 = vunpack.c.l.b16 %v414
    %v2227 = vunpack.c.h.b16 %v414
    %v2228 = vunpack.c.l.b16 %v415
    %v2229 = vunpack.c.l.b16 %v416
    %v2230 = vunpack.c.h.b16 %v416
    %v2231 = vunpack.c.l.b16 %v417
    %v2232 = vunpack.c.h.b16 %v417
    %v2233 = vunpack.c.l.b16 %v418
    %v2234 = vunpack.c.h.b16 %v418
    %v2235 = vunpack.c.l.b16 %v419
    %v2236 = vunpack.c.h.b16 %v419
    %v2237 = vunpack.c.l.b16 %v420
    %v2238 = vunpack.c.h.b16 %v420
    %v2239 = vunpack.c.l.b16 %v421
    %v2240 = vunpack.c.h.b16 %v421
    %v2241 = vunpack.c.l.b16 %v422
    %v2242 = vunpack.c.h.b16 %v422
    %v2243 = vunpack.c.l.b16 %v423
    %v2244 = vunpack.c.h.b16 %v423
    %v2245 = vunpack.c.l.b16 %v424
    %v2246 = vunpack.c.h.b16 %v424
    %v2247 = vunpack.c.l.b16 %v425
    %v2248 = vunpack.c.l.b16 %v426
    %v2249 = vunpack.c.h.b16 %v426
    %v2250 = vunpack.c.l.b16 %v427
    %v2251 = vunpack.c.h.b16 %v427
    %v2252 = vunpack.c.l.b16 %v428
    %v2253 = vunpack.c.h.b16 %v428
    %v2254 = vunpack.c.l.b16 %v429
    %v2255 = vunpack.c.h.b16 %v429
    %v2256 = vunpack.c.l.b16 %v430
    %v2257 = vunpack.c.h.b16 %v430
    %v2258 = vunpack.c.l.b16 %v431
    %v2259 = vunpack.c.h.b16 %v431
    %v2260 = vunpack.c.l.b16 %v432
    %v2261 = vunpack.c.h.b16 %v432
    %v2262 = vunpack.c.l.b16 %v433
    %v2263 = vunpack.c.h.b16 %v433
    %v2264 = vunpack.c.l.b16 %v434
    %v2265 = vunpack.c.h.b16 %v434
    %v2266 = vunpack.c.l.b16 %v435
    %v2267 = vunpack.c.l.b16 %v436
    %v2268 = vunpack.c.h.b16 %v436
    %v2269 = vunpack.c.l.b16 %v437
    %v2270 = vunpack.c.h.b16 %v437
    %v2271 = vunpack.c.l.b16 %v438
    %v2272 = vunpack.c.h.b16 %v438
    %v2273 = vunpack.c.l.b16 %v439
    %v2274 = vunpack.c.h.b16 %v439
    %v2275 = vunpack.c.l.b16 %v440
    %v2276 = vunpack.c.h.b16 %v440
    %v2277 = vunpack.c.l.b16 %v441
    %v2278 = vunpack.c.h.b16 %v441
    %v2279 = vunpack.c.l.b16 %v442
    %v2280 = vunpack.c.h.b16 %v442
    %v2281 = vunpack.c.l.b16 %v443
    %v2282 = vunpack.c.h.b16 %v443
    %v2283 = vunpack.c.l.b16 %v444
    %v2284 = vunpack.c.h.b16 %v444
    %v2285 = vunpack.c.l.b16 %v445
    %v2286 = vunpack.c.l.b16 %v446
    %v2287 = vunpack.c.h.b16 %v446
    %v2288 = vunpack.c.l.b16 %v447
    %v2289 = vunpack.c.h.b16 %v447
    %v2290 = vunpack.c.l.b16 %v448
    %v2291 = vunpack.c.h.b16 %v448
    %v2292 = vunpack.c.l.b16 %v449
    %v2293 = vunpack.c.h.b16 %v449
    %v2294 = vunpack.c.l.b16 %v450
    %v2295 = vunpack.c.h.b16 %v450
    %v2296 = vunpack.c.l.b16 %v451
    %v2297 = vunpack.c.h.b16 %v451
    %v2298 = vunpack.c.l.b16 %v452
    %v2299 = vunpack.c.h.b16 %v452
    %v2300 = vunpack.c.l.b16 %v453
    %v2301 = vunpack.c.h.b16 %v453
    %v2302 = vunpack.c.l.b16 %v454
    %v2303 = vunpack.c.h.b16 %v454
    %v2304 = vunpack.c.l.b16 %v455
    %v2305 = vunpack.c.l.b16 %v456
    %v2306 = vunpack.c.h.b16 %v456
    %v2307 = vunpack.c.l.b16 %v457
    %v2308 = vunpack.c.h.b16 %v457
    %v2309 = vunpack.c.l.b16 %v458
    %v2310 = vunpack.c.h.b16 %v458
    %v2311 = vunpack.c.l.b16 %v459
    %v2312 = vunpack.c.h.b16 %v459
    %v2313 = vunpack.c.l.b16 %v460
    %v2314 = vunpack.c.h.b16 %v460
    %v2315 = vunpack.c.l.b16 %v461
    %v2316 = vunpack.c.h.b16 %v461
    %v2317 = vunpack.c.l.b16 %v462
    %v2318 = vunpack.c.h.b16 %v462
    %v2319 = vunpack.c.l.b16 %v463
    %v2320 = vunpack.c.h.b16 %v463
    %v2321 = vunpack.c.l.b16 %v464
    %v2322 = vunpack.c.h.b16 %v464
    %v2323 = vunpack.c.l.b16 %v465
    %v2324 = vunpack.c.l.b16 %v466
    %v2325 = vunpack.c.h.b16 %v466
    %v2326 = vunpack.c.l.b16 %v467
    %v2327 = vunpack.c.h.b16 %v467
    %v2328 = vunpack.c.l.b16 %v468
    %v2329 = vunpack.c.h.b16 %v468
    %v2330 = vunpack.c.l.b16 %v469
    %v2331 = vunpack.c.h.b16 %v469
    %v2332 = vunpack.c.l.b16 %v470
    %v2333 = vunpack.c.h.b16 %v470
    %v2334 = vunpack.c.l.b16 %v471
    %v2335 = vunpack.c.h.b16 %v471
    %v2336 = vunpack.c.l.b16 %v472
    %v2337 = vunpack.c.h.b16 %v472
    %v2338 = vunpack.c.l.b16 %v473
    %v2339 = vunpack.c.h.b16 %v473
    %v2340 = vunpack.c.l.b16 %v474
    %v2341 = vunpack.c.h.b16 %v474
    %v2342 = vunpack.c.l.b16 %v475
    %v2343 = vunpack.c.l.b16 %v476
    %v2344 = vunpack.c.h.b16 %v476
    %v2345 = vunpack.c.l.b16 %v477
    %v2346 = vunpack.c.h.b16 %v477
    %v2347 = vunpack.c.l.b16 %v478
    %v2348 = vunpack.c.h.b16 %v478
    %v2349 = vunpack.c.l.b16 %v479
    %v2350 = vunpack.c.h.b16 %v479
    %v2351 = vunpack.c.l.b16 %v480
    %v2352 = vunpack.c.h.b16 %v480
    %v2353 = vunpack.c.l.b16 %v481
    %v2354 = vunpack.c.h.b16 %v481
    %v2355 = vunpack.c.l.b16 %v482
    %v2356 = vunpack.c.h.b16 %v482
    %v2357 = vunpack.c.l.b16 %v483
    %v2358 = vunpack.c.h.b16 %v483
    %v2359 = vunpack.c.l.b16 %v484
    %v2360 = vunpack.c.h.b16 %v484
    %v2361 = vunpack.c.l.b16 %v485
    %v2362 = vunpack.c.l.b16 %v486
    %v2363 = vunpack.c.h.b16 %v486
    %v2364 = vunpack.c.l.b16 %v487
    %v2365 = vunpack.c.h.b16 %v487
    %v2366 = vunpack.c.l.b16 %v488
    %v2367 = vunpack.c.h.b16 %v488
    %v2368 = vunpack.c.l.b16 %v489
    %v2369 = vunpack.c.h.b16 %v489
    %v2370 = vunpack.c.l.b16 %v490
    %v2371 = vunpack.c.h.b16 %v490
    %v2372 = vunpack.c.l.b16 %v491
    %v2373 = vunpack.c.h.b16 %v491
    %v2374 = vunpack.c.l.b16 %v492
    %v2375 = vunpack.c.h.b16 %v492
    %v2376 = vunpack.c.l.b16 %v493
    %v2377 = vunpack.c.h.b16 %v493
    %v2378 = vunpack.c.l.b16 %v494
    %v2379 = vunpack.c.h.b16 %v494
    %v2380 = vunpack.c.l.b16 %v495
    %v2381 = vunpack.c.l.b16 %v496
    %v2382 = vunpack.c.h.b16 %v496
    %v2383 = vunpack.c.l.b16 %v497
    %v2384 = vunpack.c.h.b16 %v497
    %v2385 = vunpack.c.l.b16 %v498
    %v2386 = vunpack.c.h.b16 %v498
    %v2387 = vunpack.c.l.b16 %v499
    %v2388 = vunpack.c.h.b16 %v499
    %v2389 = vunpack.c.l.b16 %v500
    %v2390 = vunpack.c.h.b16 %v500
    %v2391 = vunpack.c.l.b16 %v501
    %v2392 = vunpack.c.h.b16 %v501
    %v2393 = vunpack.c.l.b16 %v502
    %v2394 = vunpack.c.h.b16 %v502
    %v2395 = vunpack.c.l.b16 %v503
    %v2396 = vunpack.c.h.b16 %v503
    %v2397 = vunpack.c.l.b16 %v504
    %v2398 = vunpack.c.h.b16 %v504
    %v2399 = vunpack.c.l.b16 %v505
    %v2400 = vunpack.c.l.b16 %v506
    %v2401 = vunpack.c.h.b16 %v506
    %v2402 = vunpack.c.l.b16 %v507
    %v2403 = vunpack.c.h.b16 %v507
    %v2404 = vunpack.c.l.b16 %v508
    %v2405 = vunpack.c.h.b16 %v508
    %v2406 = vunpack.c.l.b16 %v509
    %v2407 = vunpack.c.h.b16 %v509
    %v2408 = vunpack.c.l.b16 %v510
    %v2409 = vunpack.c.h.b16 %v510
    %v2410 = vunpack.c.l.b16 %v511
    %v2411 = vunpack.c.h.b16 %v511
    %v2412 = vunpack.c.l.b16 %v512
    %v2413 = vunpack.c.h.b16 %v512
    %v2414 = vunpack.c.l.b16 %v513
    %v2415 = vunpack.c.h.b16 %v513
    %v2416 = vunpack.c.l.b16 %v514
    %v2417 = vunpack.c.h.b16 %v514
    %v2418 = vunpack.c.l.b16 %v515
    %v2419 = vunpack.c.l.b16 %v516
    %v2420 = vunpack.c.h.b16 %v516
    %v2421 = vunpack.c.l.b16 %v517
    %v2422 = vunpack.c.h.b16 %v517
    %v2423 = vunpack.c.l.b16 %v518
    %v2424 = vunpack.c.h.b16 %v518
    %v2425 = vunpack.c.l.b16 %v519
    %v2426 = vunpack.c.h.b16 %v519
    %v2427 = vunpack.c.l.b16 %v520
    %v2428 = vunpack.c.h.b16 %v520
    %v2429 = vunpack.c.l.b16 %v521
    %v2430 = vunpack.c.h.b16 %v521
    %v2431 = vunpack.c.l.b16 %v522
    %v2432 = vunpack.c.h.b16 %v522
    %v2433 = vunpack.c.l.b16 %v523
    %v2434 = vunpack.c.h.b16 %v523
    %v2435 = vunpack.c.l.b16 %v524
    %v2436 = vunpack.c.h.b16 %v524
    %v2437 = vunpack.c.l.b16 %v525
    %v2438 = vunpack.c.l.b16 %v526
    %v2439 = vunpack.c.h.b16 %v526
    %v2440 = vunpack.c.l.b16 %v527
    %v2441 = vunpack.c.h.b16 %v527
    %v2442 = vunpack.c.l.b16 %v528
    %v2443 = vunpack.c.h.b16 %v528
    %v2444 = vunpack.c.l.b16 %v529
    %v2445 = vunpack.c.h.b16 %v529
    %v2446 = vunpack.c.l.b16 %v530
    %v2447 = vunpack.c.h.b16 %v530
    %v2448 = vunpack.c.l.b16 %v531
    %v2449 = vunpack.c.h.b16 %v531
    %v2450 = vunpack.c.l.b16 %v532
    %v2451 = vunpack.c.h.b16 %v532
    %v2452 = vunpack.c.l.b16 %v533
    %v2453 = vunpack.c.h.b16 %v533
    %v2454 = vunpack.c.l.b16 %v534
    %v2455 = vunpack.c.h.b16 %v534
    %v2456 = vunpack.c.l.b16 %v535
    %v2457 = vunpack.c.l.b16 %v536
    %v2458 = vunpack.c.h.b16 %v536
    %v2459 = vunpack.c.l.b16 %v537
    %v2460 = vunpack.c.h.b16 %v537
    %v2461 = vunpack.c.l.b16 %v538
    %v2462 = vunpack.c.h.b16 %v538
    %v2463 = vunpack.c.l.b16 %v539
    %v2464 = vunpack.c.h.b16 %v539
    %v2465 = vunpack.c.l.b16 %v540
    %v2466 = vunpack.c.h.b16 %v540
    %v2467 = vunpack.c.l.b16 %v541
    %v2468 = vunpack.c.h.b16 %v541
    %v2469 = vunpack.c.l.b16 %v542
    %v2470 = vunpack.c.h.b16 %v542
    %v2471 = vunpack.c.l.b16 %v543
    %v2472 = vunpack.c.h.b16 %v543
    %v2473 = vunpack.c.l.b16 %v544
    %v2474 = vunpack.c.h.b16 %v544
    %v2475 = vunpack.c.l.b16 %v545
    %v2476 = vunpack.c.l.b16 %v546
    %v2477 = vunpack.c.h.b16 %v546
    %v2478 = vunpack.c.l.b16 %v547
    %v2479 = vunpack.c.h.b16 %v547
    %v2480 = vunpack.c.l.b16 %v548
    %v2481 = vunpack.c.h.b16 %v548
    %v2482 = vunpack.c.l.b16 %v549
    %v2483 = vunpack.c.h.b16 %v549
    %v2484 = vunpack.c.l.b16 %v550
    %v2485 = vunpack.c.h.b16 %v550
    %v2486 = vunpack.c.l.b16 %v551
    %v2487 = vunpack.c.h.b16 %v551
    %v2488 = vunpack.c.l.b16 %v552
    %v2489 = vunpack.c.h.b16 %v552
    %v2490 = vunpack.c.l.b16 %v553
    %v2491 = vunpack.c.h.b16 %v553
    %v2492 = vunpack.c.l.b16 %v554
    %v2493 = vunpack.c.h.b16 %v554
    %v2494 = vunpack.c.l.b16 %v555
    %v2495 = vunpack.c.l.b16 %v556
    %v2496 = vunpack.c.h.b16 %v556
    %v2497 = vunpack.c.l.b16 %v557
    %v2498 = vunpack.c.h.b16 %v557
    %v2499 = vunpack.c.l.b16 %v558
    %v2500 = vunpack.c.h.b16 %v558
    %v2501 = vunpack.c.l.b16 %v559
    %v2502 = vunpack.c.h.b16 %v559
    %v2503 = vunpack.c.l.b16 %v560
    %v2504 = vunpack.c.h.b16 %v560
    %v2505 = vunpack.c.l.b16 %v561
    %v2506 = vunpack.c.h.b16 %v561
    %v2507 = vunpack.c.l.b16 %v562
    %v2508 = vunpack.c.h.b16 %v562
    %v2509 = vunpack.c.l.b16 %v563
    %v2510 = vunpack.c.h.b16 %v563
    %v2511 = vunpack.c.l.b16 %v564
    %v2512 = vunpack.c.h.b16 %v564
    %v2513 = vunpack.c.l.b16 %v565
    %v2514 = vunpack.c.l.b16 %v566
    %v2515 = vunpack.c.h.b16 %v566
    %v2516 = vunpack.c.l.b16 %v567
    %v2517 = vunpack.c.h.b16 %v567
    %v2518 = vunpack.c.l.b16 %v568
    %v2519 = vunpack.c.h.b16 %v568
    %v2520 = vunpack.c.l.b16 %v569
    %v2521 = vunpack.c.h.b16 %v569
    %v2522 = vunpack.c.l.b16 %v570
    %v2523 = vunpack.c.h.b16 %v570
    %v2524 = vunpack.c.l.b16 %v571
    %v2525 = vunpack.c.h.b16 %v571
    %v2526 = vunpack.c.l.b16 %v572
    %v2527 = vunpack.c.h.b16 %v572
    %v2528 = vunpack.c.l.b16 %v573
    %v2529 = vunpack.c.h.b16 %v573
    %v2530 = vunpack.c.l.b16 %v574
    %v2531 = vunpack.c.h.b16 %v574
    %v2532 = vunpack.c.l.b16 %v575
    %v2533 = vunpack.c.l.b16 %v576
    %v2534 = vunpack.c.h.b16 %v576
    %v2535 = vunpack.c.l.b16 %v577
    %v2536 = vunpack.c.h.b16 %v577
    %v2537 = vunpack.c.l.b16 %v578
    %v2538 = vunpack.c.h.b16 %v578
    %v2539 = vunpack.c.l.b16 %v579
    %v2540 = vunpack.c.h.b16 %v579
    %v2541 = vunpack.c.l.b16 %v580
    %v2542 = vunpack.c.h.b16 %v580
    %v2543 = vunpack.c.l.b16 %v581
    %v2544 = vunpack.c.h.b16 %v581
    %v2545 = vunpack.c.l.b16 %v582
    %v2546 = vunpack.c.h.b16 %v582
    %v2547 = vunpack.c.l.b16 %v583
    %v2548 = vunpack.c.h.b16 %v583
    %v2549 = vunpack.c.l.b16 %v584
    %v2550 = vunpack.c.h.b16 %v584
    %v2551 = vunpack.c.l.b16 %v585
    %v2552 = vunpack.c.l.b16 %v586
    %v2553 = vunpack.c.h.b16 %v586
    %v2554 = vunpack.c.l.b16 %v587
    %v2555 = vunpack.c.h.b16 %v587
    %v2556 = vunpack.c.l.b16 %v588
    %v2557 = vunpack.c.h.b16 %v588
    %v2558 = vunpack.c.l.b16 %v589
    %v2559 = vunpack.c.h.b16 %v589
    %v2560 = vunpack.c.l.b16 %v590
    %v2561 = vunpack.c.h.b16 %v590
    %v2562 = vunpack.c.l.b16 %v591
    %v2563 = vunpack.c.h.b16 %v591
    %v2564 = vunpack.c.l.b16 %v592
    %v2565 = vunpack.c.h.b16 %v592
    %v2566 = vunpack.c.l.b16 %v593
    %v2567 = vunpack.c.h.b16 %v593
    %v2568 = vunpack.c.l.b16 %v594
    %v2569 = vunpack.c.h.b16 %v594
    %v2570 = vunpack.c.l.b16 %v595
    %v2571 = vunpack.c.l.b16 %v596
    %v2572 = vunpack.c.h.b16 %v596
    %v2573 = vunpack.c.l.b16 %v597
    %v2574 = vunpack.c.h.b16 %v597
    %v2575 = vunpack.c.l.b16 %v598
    %v2576 = vunpack.c.h.b16 %v598
    %v2577 = vunpack.c.l.b16 %v599
    %v2578 = vunpack.c.h.b16 %v599
    %v2579 = vunpack.c.l.b16 %v600
    %v2580 = vunpack.c.h.b16 %v600
    %v2581 = vunpack.c.l.b16 %v601
    %v2582 = vunpack.c.h.b16 %v601
    %v2583 = vunpack.c.l.b16 %v602
    %v2584 = vunpack.c.h.b16 %v602
    %v2585 = vunpack.c.l.b16 %v603
    %v2586 = vunpack.c.h.b16 %v603
    %v2587 = vunpack.c.l.b16 %v604
    %v2588 = vunpack.c.h.b16 %v604
    %v2589 = vunpack.c.l.b16 %v605
    %v2590 = vunpack.c.l.b16 %v606
    %v2591 = vunpack.c.h.b16 %v606
    %v2592 = vunpack.c.l.b16 %v607
    %v2593 = vunpack.c.h.b16 %v607
    %v2594 = vunpack.c.l.b16 %v608
    %v2595 = vunpack.c.h.b16 %v608
    %v2596 = vunpack.c.l.b16 %v609
    %v2597 = vunpack.c.h.b16 %v609
    %v2598 = vunpack.c.l.b16 %v610
    %v2599 = vunpack.c.h.b16 %v610
    %v2600 = vunpack.c.l.b16 %v611
    %v2601 = vunpack.c.h.b16 %v611
    %v2602 = vunpack.c.l.b16 %v612
    %v2603 = vunpack.c.h.b16 %v612
    %v2604 = vunpack.c.l.b16 %v613
    %v2605 = vunpack.c.h.b16 %v613
    %v2606 = vunpack.c.l.b16 %v614
    %v2607 = vunpack.c.h.b16 %v614
    %v2608 = vunpack.c.l.b16 %v615
    %v2609 = vunpack.c.l.b16 %v616
    %v2610 = vunpack.c.h.b16 %v616
    %v2611 = vunpack.c.l.b16 %v617
    %v2612 = vunpack.c.h.b16 %v617
    %v2613 = vunpack.c.l.b16 %v618
    %v2614 = vunpack.c.h.b16 %v618
    %v2615 = vunpack.c.l.b16 %v619
    %v2616 = vunpack.c.h.b16 %v619
    %v2617 = vunpack.c.l.b16 %v620
    %v2618 = vunpack.c.h.b16 %v620
    %v2619 = vunpack.c.l.b16 %v621
    %v2620 = vunpack.c.h.b16 %v621
    %v2621 = vunpack.c.l.b16 %v622
    %v2622 = vunpack.c.h.b16 %v622
    %v2623 = vunpack.c.l.b16 %v623
    %v2624 = vunpack.c.h.b16 %v623
    %v2625 = vunpack.c.l.b16 %v624
    %v2626 = vunpack.c.h.b16 %v624
    %v2627 = vunpack.c.l.b16 %v625
    %v2628 = vunpack.c.l.b16 %v626
    %v2629 = vunpack.c.h.b16 %v626
    %v2630 = vunpack.c.l.b16 %v627
    %v2631 = vunpack.c.h.b16 %v627
    %v2632 = vunpack.c.l.b16 %v628
    %v2633 = vunpack.c.h.b16 %v628
    %v2634 = vunpack.c.l.b16 %v629
    %v2635 = vunpack.c.h.b16 %v629
    %v2636 = vunpack.c.l.b16 %v630
    %v2637 = vunpack.c.h.b16 %v630
    %v2638 = vunpack.c.l.b16 %v631
    %v2639 = vunpack.c.h.b16 %v631
    %v2640 = vunpack.c.l.b16 %v632
    %v2641 = vunpack.c.h.b16 %v632
    %v2642 = vunpack.c.l.b16 %v633
    %v2643 = vunpack.c.h.b16 %v633
    %v2644 = vunpack.c.l.b16 %v634
    %v2645 = vunpack.c.h.b16 %v634
    %v2646 = vunpack.c.l.b16 %v635
    %v2647 = vunpack.c.l.b16 %v636
    %v2648 = vunpack.c.h.b16 %v636
    %v2649 = vunpack.c.l.b16 %v637
    %v2650 = vunpack.c.h.b16 %v637
    %v2651 = vunpack.c.l.b16 %v638
    %v2652 = vunpack.c.h.b16 %v638
    %v2653 = vunpack.c.l.b16 %v639
    %v2654 = vunpack.c.h.b16 %v639
    %v2655 = vunpack.c.l.b16 %v640
    %v2656 = vunpack.c.h.b16 %v640
    %v2657 = vunpack.c.l.b16 %v641
    %v2658 = vunpack.c.h.b16 %v641
    %v2659 = vunpack.c.l.b16 %v642
    %v2660 = vunpack.c.h.b16 %v642
    %v2661 = vunpack.c.l.b16 %v643
    %v2662 = vunpack.c.h.b16 %v643
    %v2663 = vunpack.c.l.b16 %v644
    %v2664 = vunpack.c.h.b16 %v644
    %v2665 = vunpack.c.l.b16 %v645
    %v2666 = vunpack.c.l.b16 %v646
    %v2667 = vunpack.c.h.b16 %v646
    %v2668 = vunpack.c.l.b16 %v647
    %v2669 = vunpack.c.h.b16 %v647
    %v2670 = vunpack.c.l.b16 %v648
    %v2671 = vunpack.c.h.b16 %v648
    %v2672 = vunpack.c.l.b16 %v649
    %v2673 = vunpack.c.h.b16 %v649
    %v2674 = vunpack.c.l.b16 %v650
    %v2675 = vunpack.c.h.b16 %v650
    %v2676 = vunpack.c.l.b16 %v651
    %v2677 = vunpack.c.h.b16 %v651
    %v2678 = vunpack.c.l.b16 %v652
    %v2679 = vunpack.c.h.b16 %v652
    %v2680 = vunpack.c.l.b16 %v653
    %v2681 = vunpack.c.h.b16 %v653
    %v2682 = vunpack.c.l.b16 %v654
    %v2683 = vunpack.c.h.b16 %v654
    %v2684 = vunpack.c.l.b16 %v655
    %v2685 = vunpack.c.l.b16 %v656
    %v2686 = vunpack.c.h.b16 %v656
    %v2687 = vunpack.c.l.b16 %v657
    %v2688 = vunpack.c.h.b16 %v657
    %v2689 = vunpack.c.l.b16 %v658
    %v2690 = vunpack.c.h.b16 %v658
    %v2691 = vunpack.c.l.b16 %v659
    %v2692 = vunpack.c.h.b16 %v659
    %v2693 = vunpack.c.l.b16 %v660
    %v2694 = vunpack.c.h.b16 %v660
    %v2695 = vunpack.c.l.b16 %v661
    %v2696 = vunpack.c.h.b16 %v661
    %v2697 = vunpack.c.l.b16 %v662
    %v2698 = vunpack.c.h.b16 %v662
    %v2699 = vunpack.c.l.b16 %v663
    %v2700 = vunpack.c.h.b16 %v663
    %v2701 = vunpack.c.l.b16 %v664
    %v2702 = vunpack.c.h.b16 %v664
    %v2703 = vunpack.c.l.b16 %v665
    %v2704 = vunpack.c.l.b16 %v666
    %v2705 = vunpack.c.h.b16 %v666
    %v2706 = vunpack.c.l.b16 %v667
    %v2707 = vunpack.c.h.b16 %v667
    %v2708 = vunpack.c.l.b16 %v668
    %v2709 = vunpack.c.h.b16 %v668
    %v2710 = vunpack.c.l.b16 %v669
    %v2711 = vunpack.c.h.b16 %v669
    %v2712 = vunpack.c.l.b16 %v670
    %v2713 = vunpack.c.h.b16 %v670
    %v2714 = vunpack.c.l.b16 %v671
    %v2715 = vunpack.c.h.b16 %v671
    %v2716 = vunpack.c.l.b16 %v672
    %v2717 = vunpack.c.h.b16 %v672
    %v2718 = vunpack.c.l.b16 %v673
    %v2719 = vunpack.c.h.b16 %v673
    %v2720 = vunpack.c.l.b16 %v674
    %v2721 = vunpack.c.h.b16 %v674
    %v2722 = vunpack.c.l.b16 %v675
    %v2723 = vunpack.c.l.b16 %v676
    %v2724 = vunpack.c.h.b16 %v676
    %v2725 = vunpack.c.l.b16 %v677
    %v2726 = vunpack.c.h.b16 %v677
    %v2727 = vunpack.c.l.b16 %v678
    %v2728 = vunpack.c.h.b16 %v678
    %v2729 = vunpack.c.l.b16 %v679
    %v2730 = vunpack.c.h.b16 %v679
    %v2731 = vunpack.c.l.b16 %v680
    %v2732 = vunpack.c.h.b16 %v680
    %v2733 = vunpack.c.l.b16 %v681
    %v2734 = vunpack.c.h.b16 %v681
    %v2735 = vunpack.c.l.b16 %v682
    %v2736 = vunpack.c.h.b16 %v682
    %v2737 = vunpack.c.l.b16 %v683
    %v2738 = vunpack.c.h.b16 %v683
    %v2739 = vunpack.c.l.b16 %v684
    %v2740 = vunpack.c.h.b16 %v684
    %v2741 = vunpack.c.l.b16 %v685
    %v2742 = vunpack.c.l.b16 %v686
    %v2743 = vunpack.c.h.b16 %v686
    %v2744 = vunpack.c.l.b16 %v687
    %v2745 = vunpack.c.h.b16 %v687
    %v2746 = vunpack.c.l.b16 %v688
    %v2747 = vunpack.c.h.b16 %v688
    %v2748 = vunpack.c.l.b16 %v689
    %v2749 = vunpack.c.h.b16 %v689
    %v2750 = vunpack.c.l.b16 %v690
    %v2751 = vunpack.c.h.b16 %v690
    %v2752 = vunpack.c.l.b16 %v691
    %v2753 = vunpack.c.h.b16 %v691
    %v2754 = vunpack.c.l.b16 %v692
    %v2755 = vunpack.c.h.b16 %v692
    %v2756 = vunpack.c.l.b16 %v693
    %v2757 = vunpack.c.h.b16 %v693
    %v2758 = vunpack.c.l.b16 %v694
    %v2759 = vunpack.c.h.b16 %v694
    %v2760 = vunpack.c.l.b16 %v695
    %v2761 = vunpack.c.l.b16 %v696
    %v2762 = vunpack.c.h.b16 %v696
    %v2763 = vunpack.c.l.b16 %v697
    %v2764 = vunpack.c.h.b16 %v697
    %v2765 = vunpack.c.l.b16 %v698
    %v2766 = vunpack.c.h.b16 %v698
    %v2767 = vunpack.c.l.b16 %v699
    %v2768 = vunpack.c.h.b16 %v699
    %v2769 = vunpack.c.l.b16 %v700
    %v2770 = vunpack.c.h.b16 %v700
    %v2771 = vunpack.c.l.b16 %v701
    %v2772 = vunpack.c.h.b16 %v701
    %v2773 = vunpack.c.l.b16 %v702
    %v2774 = vunpack.c.h.b16 %v702
    %v2775 = vunpack.c.l.b16 %v703
    %v2776 = vunpack.c.h.b16 %v703
    %v2777 = vunpack.c.l.b16 %v704
    %v2778 = vunpack.c.h.b16 %v704
    %v2779 = vunpack.c.l.b16 %v705
    %v2780 = vunpack.c.l.b16 %v706
    %v2781 = vunpack.c.h.b16 %v706
    %v2782 = vunpack.c.l.b16 %v707
    %v2783 = vunpack.c.h.b16 %v707
    %v2784 = vunpack.c.l.b16 %v708
    %v2785 = vunpack.c.h.b16 %v708
    %v2786 = vunpack.c.l.b16 %v709
    %v2787 = vunpack.c.h.b16 %v709
    %v2788 = vunpack.c.l.b16 %v710
    %v2789 = vunpack.c.h.b16 %v710
    %v2790 = vunpack.c.l.b16 %v711
    %v2791 = vunpack.c.h.b16 %v711
    %v2792 = vunpack.c.l.b16 %v712
    %v2793 = vunpack.c.h.b16 %v712
    %v2794 = vunpack.c.l.b16 %v713
    %v2795 = vunpack.c.h.b16 %v713
    %v2796 = vunpack.c.l.b16 %v714
    %v2797 = vunpack.c.h.b16 %v714
    %v2798 = vunpack.c.l.b16 %v715
    %v2799 = vunpack.c.l.b16 %v716
    %v2800 = vunpack.c.h.b16 %v716
    %v2801 = vunpack.c.l.b16 %v717
    %v2802 = vunpack.c.h.b16 %v717
    %v2803 = vunpack.c.l.b16 %v718
    %v2804 = vunpack.c.h.b16 %v718
    %v2805 = vunpack.c.l.b16 %v719
    %v2806 = vunpack.c.h.b16 %v719
    %v2807 = vunpack.c.l.b16 %v720
    %v2808 = vunpack.c.h.b16 %v720
    %v2809 = vunpack.c.l.b16 %v721
    %v2810 = vunpack.c.h.b16 %v721
    %v2811 = vunpack.c.l.b16 %v722
    %v2812 = vunpack.c.h.b16 %v722
    %v2813 = vunpack.c.l.b16 %v723
    %v2814 = vunpack.c.h.b16 %v723
    %v2815 = vunpack.c.l.b16 %v724
    %v2816 = vunpack.c.h.b16 %v724
    %v2817 = vunpack.c.l.b16 %v725
    %v2818 = vunpack.c.l.b16 %v726
    %v2819 = vunpack.c.h.b16 %v726
    %v2820 = vunpack.c.l.b16 %v727
    %v2821 = vunpack.c.h.b16 %v727
    %v2822 = vunpack.c.l.b16 %v728
    %v2823 = vunpack.c.h.b16 %v728
    %v2824 = vunpack.c.l.b16 %v729
    %v2825 = vunpack.c.h.b16 %v729
    %v2826 = vunpack.c.l.b16 %v730
    %v2827 = vunpack.c.h.b16 %v730
    %v2828 = vunpack.c.l.b16 %v731
    %v2829 = vunpack.c.h.b16 %v731
    %v2830 = vunpack.c.l.b16 %v732
    %v2831 = vunpack.c.h.b16 %v732
    %v2832 = vunpack.c.l.b16 %v733
    %v2833 = vunpack.c.h.b16 %v733
    %v2834 = vunpack.c.l.b16 %v734
    %v2835 = vunpack.c.h.b16 %v734
    %v2836 = vunpack.c.l.b16 %v735
    %v2837 = vunpack.c.l.b16 %v736
    %v2838 = vunpack.c.h.b16 %v736
    %v2839 = vunpack.c.l.b16 %v737
    %v2840 = vunpack.c.h.b16 %v737
    %v2841 = vunpack.c.l.b16 %v738
    %v2842 = vunpack.c.h.b16 %v738
    %v2843 = vunpack.c.l.b16 %v739
    %v2844 = vunpack.c.h.b16 %v739
    %v2845 = vunpack.c.l.b16 %v740
    %v2846 = vunpack.c.h.b16 %v740
    %v2847 = vunpack.c.l.b16 %v741
    %v2848 = vunpack.c.h.b16 %v741
    %v2849 = vunpack.c.l.b16 %v742
    %v2850 = vunpack.c.h.b16 %v742
    %v2851 = vunpack.c.l.b16 %v743
    %v2852 = vunpack.c.h.b16 %v743
    %v2853 = vunpack.c.l.b16 %v744
    %v2854 = vunpack.c.h.b16 %v744
    %v2855 = vunpack.c.l.b16 %v745
    %v2856 = vunpack.c.l.b16 %v746
    %v2857 = vunpack.c.h.b16 %v746
    %v2858 = vunpack.c.l.b16 %v747
    %v2859 = vunpack.c.h.b16 %v747
    %v2860 = vunpack.c.l.b16 %v748
    %v2861 = vunpack.c.h.b16 %v748
    %v2862 = vunpack.c.l.b16 %v749
    %v2863 = vunpack.c.h.b16 %v749
    %v2864 = vunpack.c.l.b16 %v750
    %v2865 = vunpack.c.h.b16 %v750
    %v2866 = vunpack.c.l.b16 %v751
    %v2867 = vunpack.c.h.b16 %v751
    %v2868 = vunpack.c.l.b16 %v752
    %v2869 = vunpack.c.h.b16 %v752
    %v2870 = vunpack.c.l.b16 %v753
    %v2871 = vunpack.c.h.b16 %v753
    %v2872 = vunpack.c.l.b16 %v754
    %v2873 = vunpack.c.h.b16 %v754
    %v2874 = vunpack.c.l.b16 %v755
    %v2875 = vunpack.c.l.b16 %v756
    %v2876 = vunpack.c.h.b16 %v756
    %v2877 = vunpack.c.l.b16 %v757
    %v2878 = vunpack.c.h.b16 %v757
    %v2879 = vunpack.c.l.b16 %v758
    %v2880 = vunpack.c.h.b16 %v758
    %v2881 = vunpack.c.l.b16 %v759
    %v2882 = vunpack.c.h.b16 %v759
    %v2883 = vunpack.c.l.b16 %v760
    %v2884 = vunpack.c.h.b16 %v760
    %v2885 = vunpack.c.l.b16 %v761
    %v2886 = vunpack.c.h.b16 %v761
    %v2887 = vunpack.c.l.b16 %v762
    %v2888 = vunpack.c.h.b16 %v762
    %v2889 = vunpack.c.l.b16 %v763
    %v2890 = vunpack.c.h.b16 %v763
    %v2891 = vunpack.c.l.b16 %v764
    %v2892 = vunpack.c.h.b16 %v764
    %v2893 = vunpack.c.l.b16 %v765
    %v2894 = vunpack.c.l.b16 %v766
    %v2895 = vunpack.c.h.b16 %v766
    %v2896 = vunpack.c.l.b16 %v767
    %v2897 = vunpack.c.h.b16 %v767
    %v2898 = vunpack.c.l.b16 %v768
    %v2899 = vunpack.c.h.b16 %v768
    %v2900 = vunpack.c.l.b16 %v769
    %v2901 = vunpack.c.h.b16 %v769
    %v2902 = vunpack.c.l.b16 %v770
    %v2903 = vunpack.c.h.b16 %v770
    %v2904 = vunpack.c.l.b16 %v771
    %v2905 = vunpack.c.h.b16 %v771
    %v2906 = vunpack.c.l.b16 %v772
    %v2907 = vunpack.c.h.b16 %v772
    %v2908 = vunpack.c.l.b16 %v773
    %v2909 = vunpack.c.h.b16 %v773
    %v2910 = vunpack.c.l.b16 %v774
    %v2911 = vunpack.c.h.b16 %v774
    %v2912 = vunpack.c.l.b16 %v775
    %v2913 = vunpack.c.l.b16 %v776
    %v2914 = vunpack.c.h.b16 %v776
    %v2915 = vunpack.c.l.b16 %v777
    %v2916 = vunpack.c.h.b16 %v777
    %v2917 = vunpack.c.l.b16 %v778
    %v2918 = vunpack.c.h.b16 %v778
    %v2919 = vunpack.c.l.b16 %v779
    %v2920 = vunpack.c.h.b16 %v779
    %v2921 = vunpack.c.l.b16 %v780
    %v2922 = vunpack.c.h.b16 %v780
    %v2923 = vunpack.c.l.b16 %v781
    %v2924 = vunpack.c.h.b16 %v781
    %v2925 = vunpack.c.l.b16 %v782
    %v2926 = vunpack.c.h.b16 %v782
    %v2927 = vunpack.c.l.b16 %v783
    %v2928 = vunpack.c.h.b16 %v783
    %v2929 = vunpack.c.l.b16 %v784
    %v2930 = vunpack.c.h.b16 %v784
    %v2931 = vunpack.c.l.b16 %v785
    %v2932 = vunpack.c.l.b16 %v786
    %v2933 = vunpack.c.h.b16 %v786
    %v2934 = vunpack.c.l.b16 %v787
    %v2935 = vunpack.c.h.b16 %v787
    %v2936 = vunpack.c.l.b16 %v788
    %v2937 = vunpack.c.h.b16 %v788
    %v2938 = vunpack.c.l.b16 %v789
    %v2939 = vunpack.c.h.b16 %v789
    %v2940 = vunpack.c.l.b16 %v790
    %v2941 = vunpack.c.h.b16 %v790
    %v2942 = vunpack.c.l.b16 %v791
    %v2943 = vunpack.c.h.b16 %v791
    %v2944 = vunpack.c.l.b16 %v792
    %v2945 = vunpack.c.h.b16 %v792
    %v2946 = vunpack.c.l.b16 %v793
    %v2947 = vunpack.c.h.b16 %v793
    %v2948 = vunpack.c.l.b16 %v794
    %v2949 = vunpack.c.h.b16 %v794
    %v2950 = vunpack.c.l.b16 %v795
    %v2951 = vunpack.c.l.b16 %v796
    %v2952 = vunpack.c.h.b16 %v796
    %v2953 = vunpack.c.l.b16 %v797
    %v2954 = vunpack.c.h.b16 %v797
    %v2955 = vunpack.c.l.b16 %v798
    %v2956 = vunpack.c.h.b16 %v798
    %v2957 = vunpack.c.l.b16 %v799
    %v2958 = vunpack.c.h.b16 %v799
    %v2959 = vunpack.c.l.b16 %v800
    %v2960 = vunpack.c.h.b16 %v800
    %v2961 = vunpack.c.l.b16 %v801
    %v2962 = vunpack.c.h.b16 %v801
    %v2963 = vunpack.c.l.b16 %v802
    %v2964 = vunpack.c.h.b16 %v802
    %v2965 = vunpack.c.l.b16 %v803
    %v2966 = vunpack.c.h.b16 %v803
    %v2967 = vunpack.c.l.b16 %v804
    %v2968 = vunpack.c.h.b16 %v804
    %v2969 = vunpack.c.l.b16 %v805
    %v2970 = vunpack.c.l.b16 %v806
    %v2971 = vunpack.c.h.b16 %v806
    %v2972 = vunpack.c.l.b16 %v807
    %v2973 = vunpack.c.h.b16 %v807
    %v2974 = vunpack.c.l.b16 %v808
    %v2975 = vunpack.c.h.b16 %v808
    %v2976 = vunpack.c.l.b16 %v809
    %v2977 = vunpack.c.h.b16 %v809
    %v2978 = vunpack.c.l.b16 %v810
    %v2979 = vunpack.c.h.b16 %v810
    %v2980 = vunpack.c.l.b16 %v811
    %v2981 = vunpack.c.h.b16 %v811
    %v2982 = vunpack.c.l.b16 %v812
    %v2983 = vunpack.c.h.b16 %v812
    %v2984 = vunpack.c.l.b16 %v813
    %v2985 = vunpack.c.h.b16 %v813
    %v2986 = vunpack.c.l.b16 %v814
    %v2987 = vunpack.c.h.b16 %v814
    %v2988 = vunpack.c.l.b16 %v815
    %v2989 = vunpack.c.l.b16 %v816
    %v2990 = vunpack.c.h.b16 %v816
    %v2991 = vunpack.c.l.b16 %v817
    %v2992 = vunpack.c.h.b16 %v817
    %v2993 = vunpack.c.l.b16 %v818
    %v2994 = vunpack.c.h.b16 %v818
    %v2995 = vunpack.c.l.b16 %v819
    %v2996 = vunpack.c.h.b16 %v819
    %v2997 = vunpack.c.l.b16 %v820
    %v2998 = vunpack.c.h.b16 %v820
    %v2999 = vunpack.c.l.b16 %v821
    %v3000 = vunpack.c.h.b16 %v821
    %v3001 = vunpack.c.l.b16 %v822
    %v3002 = vunpack.c.h.b16 %v822
    %v3003 = vunpack.c.l.b16 %v823
    %v3004 = vunpack.c.h.b16 %v823
    %v3005 = vunpack.c.l.b16 %v824
    %v3006 = vunpack.c.h.b16 %v824
    %v3007 = vunpack.c.l.b16 %v825
    %v3008 = vunpack.c.l.b16 %v826
    %v3009 = vunpack.c.h.b16 %v826
    %v3010 = vunpack.c.l.b16 %v827
    %v3011 = vunpack.c.h.b16 %v827
    %v3012 = vunpack.c.l.b16 %v828
    %v3013 = vunpack.c.h.b16 %v828
    %v3014 = vunpack.c.l.b16 %v829
    %v3015 = vunpack.c.h.b16 %v829
    %v3016 = vunpack.c.l.b16 %v830
    %v3017 = vunpack.c.h.b16 %v830
    %v3018 = vunpack.c.l.b16 %v831
    %v3019 = vunpack.c.h.b16 %v831
    %v3020 = vunpack.c.l.b16 %v832
    %v3021 = vunpack.c.h.b16 %v832
    %v3022 = vunpack.c.l.b16 %v833
    %v3023 = vunpack.c.h.b16 %v833
    %v3024 = vunpack.c.l.b16 %v834
    %v3025 = vunpack.c.h.b16 %v834
    %v3026 = vunpack.c.l.b16 %v835
    %v3027 = vunpack.c.l.b16 %v836
    %v3028 = vunpack.c.h.b16 %v836
    %v3029 = vunpack.c.l.b16 %v837
    %v3030 = vunpack.c.h.b16 %v837
    %v3031 = vunpack.c.l.b16 %v838
    %v3032 = vunpack.c.h.b16 %v838
    %v3033 = vunpack.c.l.b16 %v839
    %v3034 = vunpack.c.h.b16 %v839
    %v3035 = vunpack.c.l.b16 %v840
    %v3036 = vunpack.c.h.b16 %v840
    %v3037 = vunpack.c.l.b16 %v841
    %v3038 = vunpack.c.h.b16 %v841
    %v3039 = vunpack.c.l.b16 %v842
    %v3040 = vunpack.c.h.b16 %v842
    %v3041 = vunpack.c.l.b16 %v843
    %v3042 = vunpack.c.h.b16 %v843
    %v3043 = vunpack.c.l.b16 %v844
    %v3044 = vunpack.c.h.b16 %v844
    %v3045 = vunpack.c.l.b16 %v845
    %v3046 = vpack.c.b16 %v1640, %v1621
    %v3047 = vpack.c.b16 %v1641, %v1622
    %v3048 = vpack.c.b16 %v1642, %v1623
    %v3049 = vpack.c.b16 %v1643, %v1624
    %v3050 = vpack.c.b16 %v1644, %v1625
    %v3051 = vpack.c.b16 %v1645, %v1626
    %v3052 = vpack.c.b16 %v1646, %v1627
    %v3053 = vpack.c.b16 %v1647, %v1628
    %v3054 = vpack.c.b16 %v1648, %v1629
    %v3055 = vpack.c.b16 %v1649, %v1630
    %v3056 = vpack.c.b16 %v1650, %v1631
    %v3057 = vpack.c.b16 %v1651, %v1632
    %v3058 = vpack.c.b16 %v1652, %v1633
    %v3059 = vpack.c.b16 %v1653, %v1634
    %v3060 = vpack.c.b16 %v1654, %v1635
    %v3061 = vpack.c.b16 %v1655, %v1636
    %v3062 = vpack.c.b16 %v1656, %v1637
    %v3063 = vpack.c.b16 %v1657, %v1638
    %v3064 = vpack.c.b16 %v1658, %v1639
    %v3065 = vpack.c.b16 %v1678, %v1659
    %v3066 = vpack.c.b16 %v1679, %v1660
    %v3067 = vpack.c.b16 %v1680, %v1661
    %v3068 = vpack.c.b16 %v1681, %v1662
    %v3069 = vpack.c.b16 %v1682, %v1663
    %v3070 = vpack.c.b16 %v1683, %v1664
    %v3071 = vpack.c.b16 %v1684, %v1665
    %v3072 = vpack.c.b16 %v1685, %v1666
    %v3073 = vpack.c.b16 %v1686, %v1667
    %v3074 = vpack.c.b16 %v1687, %v1668
    %v3075 = vpack.c.b16 %v1688, %v1669
    %v3076 = vpack.c.b16 %v1689, %v1670
    %v3077 = vpack.c.b16 %v1690, %v1671
    %v3078 = vpack.c.b16 %v1691, %v1672
    %v3079 = vpack.c.b16 %v1692, %v1673
    %v3080 = vpack.c.b16 %v1693, %v1674
    %v3081 = vpack.c.b16 %v1694, %v1675
    %v3082 = vpack.c.b16 %v1695, %v1676
    %v3083 = vpack.c.b16 %v1696, %v1677
    %v3084 = vpack.c.b16 %v1716, %v1697
    %v3085 = vpack.c.b16 %v1717, %v1698
    %v3086 = vpack.c.b16 %v1718, %v1699
    %v3087 = vpack.c.b16 %v1719, %v1700
    %v3088 = vpack.c.b16 %v1720, %v1701
    %v3089 = vpack.c.b16 %v1721, %v1702
    %v3090 = vpack.c.b16 %v1722, %v1703
    %v3091 = vpack.c.b16 %v1723, %v1704
    %v3092 = vpack.c.b16 %v1724, %v1705
    %v3093 = vpack.c.b16 %v1725, %v1706
    %v3094 = vpack.c.b16 %v1726, %v1707
    %v3095 = vpack.c.b16 %v1727, %v1708
    %v3096 = vpack.c.b16 %v1728, %v1709
    %v3097 = vpack.c.b16 %v1729, %v1710
    %v3098 = vpack.c.b16 %v1730, %v1711
    %v3099 = vpack.c.b16 %v1731, %v1712
    %v3100 = vpack.c.b16 %v1732, %v1713
    %v3101 = vpack.c.b16 %v1733, %v1714
    %v3102 = vpack.c.b16 %v1734, %v1715
    %v3103 = vpack.c.b16 %v1754, %v1735
    %v3104 = vpack.c.b16 %v1755, %v1736
    %v3105 = vpack.c.b16 %v1756, %v1737
    %v3106 = vpack.c.b16 %v1757, %v1738
    %v3107 = vpack.c.b16 %v1758, %v1739
    %v3108 = vpack.c.b16 %v1759, %v1740
    %v3109 = vpack.c.b16 %v1760, %v1741
    %v3110 = vpack.c.b16 %v1761, %v1742
    %v3111 = vpack.c.b16 %v1762, %v1743
    %v3112 = vpack.c.b16 %v1763, %v1744
    %v3113 = vpack.c.b16 %v1764, %v1745
    %v3114 = vpack.c.b16 %v1765, %v1746
    %v3115 = vpack.c.b16 %v1766, %v1747
    %v3116 = vpack.c.b16 %v1767, %v1748
    %v3117 = vpack.c.b16 %v1768, %v1749
    %v3118 = vpack.c.b16 %v1769, %v1750
    %v3119 = vpack.c.b16 %v1770, %v1751
    %v3120 = vpack.c.b16 %v1771, %v1752
    %v3121 = vpack.c.b16 %v1772, %v1753
    %v3122 = vpack.c.b16 %v1792, %v1773
    %v3123 = vpack.c.b16 %v1793, %v1774
    %v3124 = vpack.c.b16 %v1794, %v1775
    %v3125 = vpack.c.b16 %v1795, %v1776
    %v3126 = vpack.c.b16 %v1796, %v1777
    %v3127 = vpack.c.b16 %v1797, %v1778
    %v3128 = vpack.c.b16 %v1798, %v1779
    %v3129 = vpack.c.b16 %v1799, %v1780
    %v3130 = vpack.c.b16 %v1800, %v1781
    %v3131 = vpack.c.b16 %v1801, %v1782
    %v3132 = vpack.c.b16 %v1802, %v1783
    %v3133 = vpack.c.b16 %v1803, %v1784
    %v3134 = vpack.c.b16 %v1804, %v1785
    %v3135 = vpack.c.b16 %v1805, %v1786
    %v3136 = vpack.c.b16 %v1806, %v1787
    %v3137 = vpack.c.b16 %v1807, %v1788
    %v3138 = vpack.c.b16 %v1808, %v1789
    %v3139 = vpack.c.b16 %v1809, %v1790
    %v3140 = vpack.c.b16 %v1810, %v1791
    %v3141 = vpack.c.b16 %v1830, %v1811
    %v3142 = vpack.c.b16 %v1831, %v1812
    %v3143 = vpack.c.b16 %v1832, %v1813
    %v3144 = vpack.c.b16 %v1833, %v1814
    %v3145 = vpack.c.b16 %v1834, %v1815
    %v3146 = vpack.c.b16 %v1835, %v1816
    %v3147 = vpack.c.b16 %v1836, %v1817
    %v3148 = vpack.c.b16 %v1837, %v1818
    %v3149 = vpack.c.b16 %v1838, %v1819
    %v3150 = vpack.c.b16 %v1839, %v1820
    %v3151 = vpack.c.b16 %v1840, %v1821
    %v3152 = vpack.c.b16 %v1841, %v1822
    %v3153 = vpack.c.b16 %v1842, %v1823
    %v3154 = vpack.c.b16 %v1843, %v1824
    %v3155 = vpack.c.b16 %v1844, %v1825
    %v3156 = vpack.c.b16 %v1845, %v1826
    %v3157 = vpack.c.b16 %v1846, %v1827
    %v3158 = vpack.c.b16 %v1847, %v1828
    %v3159 = vpack.c.b16 %v1848, %v1829
    %v3160 = vpack.c.b16 %v1868, %v1849
    %v3161 = vpack.c.b16 %v1869, %v1850
    %v3162 = vpack.c.b16 %v1870, %v1851
    %v3163 = vpack.c.b16 %v1871, %v1852
    %v3164 = vpack.c.b16 %v1872, %v1853
    %v3165 = vpack.c.b16 %v1873, %v1854
    %v3166 = vpack.c.b16 %v1874, %v1855
    %v3167 = vpack.c.b16 %v1875, %v1856
    %v3168 = vpack.c.b16 %v1876, %v1857
    %v3169 = vpack.c.b16 %v1877, %v1858
    %v3170 = vpack.c.b16 %v1878, %v1859
    %v3171 = vpack.c.b16 %v1879, %v1860
    %v3172 = vpack.c.b16 %v1880, %v1861
    %v3173 = vpack.c.b16 %v1881, %v1862
    %v3174 = vpack.c.b16 %v1882, %v1863
    %v3175 = vpack.c.b16 %v1883, %v1864
    %v3176 = vpack.c.b16 %v1884, %v1865
    %v3177 = vpack.c.b16 %v1885, %v1866
    %v3178 = vpack.c.b16 %v1886, %v1867
    %v3179 = vpack.c.b16 %v1906, %v1887
    %v3180 = vpack.c.b16 %v1907, %v1888
    %v3181 = vpack.c.b16 %v1908, %v1889
    %v3182 = vpack.c.b16 %v1909, %v1890
    %v3183 = vpack.c.b16 %v1910, %v1891
    %v3184 = vpack.c.b16 %v1911, %v1892
    %v3185 = vpack.c.b16 %v1912, %v1893
    %v3186 = vpack.c.b16 %v1913, %v1894
    %v3187 = vpack.c.b16 %v1914, %v1895
    %v3188 = vpack.c.b16 %v1915, %v1896
    %v3189 = vpack.c.b16 %v1916, %v1897
    %v3190 = vpack.c.b16 %v1917, %v1898
    %v3191 = vpack.c.b16 %v1918, %v1899
    %v3192 = vpack.c.b16 %v1919, %v1900
    %v3193 = vpack.c.b16 %v1920, %v1901
    %v3194 = vpack.c.b16 %v1921, %v1902
    %v3195 = vpack.c.b16 %v1922, %v1903
    %v3196 = vpack.c.b16 %v1923, %v1904
    %v3197 = vpack.c.b16 %v1924, %v1905
    %v3198 = vpack.c.b16 %v1944, %v1925
    %v3199 = vpack.c.b16 %v1945, %v1926
    %v3200 = vpack.c.b16 %v1946, %v1927
    %v3201 = vpack.c.b16 %v1947, %v1928
    %v3202 = vpack.c.b16 %v1948, %v1929
    %v3203 = vpack.c.b16 %v1949, %v1930
    %v3204 = vpack.c.b16 %v1950, %v1931
    %v3205 = vpack.c.b16 %v1951, %v1932
    %v3206 = vpack.c.b16 %v1952, %v1933
    %v3207 = vpack.c.b16 %v1953, %v1934
    %v3208 = vpack.c.b16 %v1954, %v1935
    %v3209 = vpack.c.b16 %v1955, %v1936
    %v3210 = vpack.c.b16 %v1956, %v1937
    %v3211 = vpack.c.b16 %v1957, %v1938
    %v3212 = vpack.c.b16 %v1958, %v1939
    %v3213 = vpack.c.b16 %v1959, %v1940
    %v3214 = vpack.c.b16 %v1960, %v1941
    %v3215 = vpack.c.b16 %v1961, %v1942
    %v3216 = vpack.c.b16 %v1962, %v1943
    %v3217 = vpack.c.b16 %v1982, %v1963
    %v3218 = vpack.c.b16 %v1983, %v1964
    %v3219 = vpack.c.b16 %v1984, %v1965
    %v3220 = vpack.c.b16 %v1985, %v1966
    %v3221 = vpack.c.b16 %v1986, %v1967
    %v3222 = vpack.c.b16 %v1987, %v1968
    %v3223 = vpack.c.b16 %v1988, %v1969
    %v3224 = vpack.c.b16 %v1989, %v1970
    %v3225 = vpack.c.b16 %v1990, %v1971
    %v3226 = vpack.c.b16 %v1991, %v1972
    %v3227 = vpack.c.b16 %v1992, %v1973
    %v3228 = vpack.c.b16 %v1993, %v1974
    %v3229 = vpack.c.b16 %v1994, %v1975
    %v3230 = vpack.c.b16 %v1995, %v1976
    %v3231 = vpack.c.b16 %v1996, %v1977
    %v3232 = vpack.c.b16 %v1997, %v1978
    %v3233 = vpack.c.b16 %v1998, %v1979
    %v3234 = vpack.c.b16 %v1999, %v1980
    %v3235 = vpack.c.b16 %v2000, %v1981
    %v3236 = vpack.c.b16 %v2020, %v2001
    %v3237 = vpack.c.b16 %v2021, %v2002
    %v3238 = vpack.c.b16 %v2022, %v2003
    %v3239 = vpack.c.b16 %v2023, %v2004
    %v3240 = vpack.c.b16 %v2024, %v2005
    %v3241 = vpack.c.b16 %v2025, %v2006
    %v3242 = vpack.c.b16 %v2026, %v2007
    %v3243 = vpack.c.b16 %v2027, %v2008
    %v3244 = vpack.c.b16 %v2028, %v2009
    %v3245 = vpack.c.b16 %v2029, %v2010
    %v3246 = vpack.c.b16 %v2030, %v2011
    %v3247 = vpack.c.b16 %v2031, %v2012
    %v3248 = vpack.c.b16 %v2032, %v2013
    %v3249 = vpack.c.b16 %v2033, %v2014
    %v3250 = vpack.c.b16 %v2034, %v2015
    %v3251 = vpack.c.b16 %v2035, %v2016
    %v3252 = vpack.c.b16 %v2036, %v2017
    %v3253 = vpack.c.b16 %v2037, %v2018
    %v3254 = vpack.c.b16 %v2038, %v2019
    %v3255 = vpack.c.b16 %v2058, %v2039
    %v3256 = vpack.c.b16 %v2059, %v2040
    %v3257 = vpack.c.b16 %v2060, %v2041
    %v3258 = vpack.c.b16 %v2061, %v2042
    %v3259 = vpack.c.b16 %v2062, %v2043
    %v3260 = vpack.c.b16 %v2063, %v2044
    %v3261 = vpack.c.b16 %v2064, %v2045
    %v3262 = vpack.c.b16 %v2065, %v2046
    %v3263 = vpack.c.b16 %v2066, %v2047
    %v3264 = vpack.c.b16 %v2067, %v2048
    %v3265 = vpack.c.b16 %v2068, %v2049
    %v3266 = vpack.c.b16 %v2069, %v2050
    %v3267 = vpack.c.b16 %v2070, %v2051
    %v3268 = vpack.c.b16 %v2071, %v2052
    %v3269 = vpack.c.b16 %v2072, %v2053
    %v3270 = vpack.c.b16 %v2073, %v2054
    %v3271 = vpack.c.b16 %v2074, %v2055
    %v3272 = vpack.c.b16 %v2075, %v2056
    %v3273 = vpack.c.b16 %v2076, %v2057
    %v3274 = vpack.c.b16 %v2096, %v2077
    %v3275 = vpack.c.b16 %v2097, %v2078
    %v3276 = vpack.c.b16 %v2098, %v2079
    %v3277 = vpack.c.b16 %v2099, %v2080
    %v3278 = vpack.c.b16 %v2100, %v2081
    %v3279 = vpack.c.b16 %v2101, %v2082
    %v3280 = vpack.c.b16 %v2102, %v2083
    %v3281 = vpack.c.b16 %v2103, %v2084
    %v3282 = vpack.c.b16 %v2104, %v2085
    %v3283 = vpack.c.b16 %v2105, %v2086
    %v3284 = vpack.c.b16 %v2106, %v2087
    %v3285 = vpack.c.b16 %v2107, %v2088
    %v3286 = vpack.c.b16 %v2108, %v2089
    %v3287 = vpack.c.b16 %v2109, %v2090
    %v3288 = vpack.c.b16 %v2110, %v2091
    %v3289 = vpack.c.b16 %v2111, %v2092
    %v3290 = vpack.c.b16 %v2112, %v2093
    %v3291 = vpack.c.b16 %v2113, %v2094
    %v3292 = vpack.c.b16 %v2114, %v2095
    %v3293 = vpack.c.b16 %v2134, %v2115
    %v3294 = vpack.c.b16 %v2135, %v2116
    %v3295 = vpack.c.b16 %v2136, %v2117
    %v3296 = vpack.c.b16 %v2137, %v2118
    %v3297 = vpack.c.b16 %v2138, %v2119
    %v3298 = vpack.c.b16 %v2139, %v2120
    %v3299 = vpack.c.b16 %v2140, %v2121
    %v3300 = vpack.c.b16 %v2141, %v2122
    %v3301 = vpack.c.b16 %v2142, %v2123
    %v3302 = vpack.c.b16 %v2143, %v2124
    %v3303 = vpack.c.b16 %v2144, %v2125
    %v3304 = vpack.c.b16 %v2145, %v2126
    %v3305 = vpack.c.b16 %v2146, %v2127
    %v3306 = vpack.c.b16 %v2147, %v2128
    %v3307 = vpack.c.b16 %v2148, %v2129
    %v3308 = vpack.c.b16 %v2149, %v2130
    %v3309 = vpack.c.b16 %v2150, %v2131
    %v3310 = vpack.c.b16 %v2151, %v2132
    %v3311 = vpack.c.b16 %v2152, %v2133
    %v3312 = vpack.c.b16 %v2172, %v2153
    %v3313 = vpack.c.b16 %v2173, %v2154
    %v3314 = vpack.c.b16 %v2174, %v2155
    %v3315 = vpack.c.b16 %v2175, %v2156
    %v3316 = vpack.c.b16 %v2176, %v2157
    %v3317 = vpack.c.b16 %v2177, %v2158
    %v3318 = vpack.c.b16 %v2178, %v2159
    %v3319 = vpack.c.b16 %v2179, %v2160
    %v3320 = vpack.c.b16 %v2180, %v2161
    %v3321 = vpack.c.b16 %v2181, %v2162
    %v3322 = vpack.c.b16 %v2182, %v2163
    %v3323 = vpack.c.b16 %v2183, %v2164
    %v3324 = vpack.c.b16 %v2184, %v2165
    %v3325 = vpack.c.b16 %v2185, %v2166
    %v3326 = vpack.c.b16 %v2186, %v2167
    %v3327 = vpack.c.b16 %v2187, %v2168
    %v3328 = vpack.c.b16 %v2188, %v2169
    %v3329 = vpack.c.b16 %v2189, %v2170
    %v3330 = vpack.c.b16 %v2190, %v2171
    %v3331 = vpack.c.b16 %v2210, %v2191
    %v3332 = vpack.c.b16 %v2211, %v2192
    %v3333 = vpack.c.b16 %v2212, %v2193
    %v3334 = vpack.c.b16 %v2213, %v2194
    %v3335 = vpack.c.b16 %v2214, %v2195
    %v3336 = vpack.c.b16 %v2215, %v2196
    %v3337 = vpack.c.b16 %v2216, %v2197
    %v3338 = vpack.c.b16 %v2217, %v2198
    %v3339 = vpack.c.b16 %v2218, %v2199
    %v3340 = vpack.c.b16 %v2219, %v2200
    %v3341 = vpack.c.b16 %v2220, %v2201
    %v3342 = vpack.c.b16 %v2221, %v2202
    %v3343 = vpack.c.b16 %v2222, %v2203
    %v3344 = vpack.c.b16 %v2223, %v2204
    %v3345 = vpack.c.b16 %v2224, %v2205
    %v3346 = vpack.c.b16 %v2225, %v2206
    %v3347 = vpack.c.b16 %v2226, %v2207
    %v3348 = vpack.c.b16 %v2227, %v2208
    %v3349 = vpack.c.b16 %v2228, %v2209
    %v3350 = vpack.c.b16 %v2248, %v2229
    %v3351 = vpack.c.b16 %v2249, %v2230
    %v3352 = vpack.c.b16 %v2250, %v2231
    %v3353 = vpack.c.b16 %v2251, %v2232
    %v3354 = vpack.c.b16 %v2252, %v2233
    %v3355 = vpack.c.b16 %v2253, %v2234
    %v3356 = vpack.c.b16 %v2254, %v2235
    %v3357 = vpack.c.b16 %v2255, %v2236
    %v3358 = vpack.c.b16 %v2256, %v2237
    %v3359 = vpack.c.b16 %v2257, %v2238
    %v3360 = vpack.c.b16 %v2258, %v2239
    %v3361 = vpack.c.b16 %v2259, %v2240
    %v3362 = vpack.c.b16 %v2260, %v2241
    %v3363 = vpack.c.b16 %v2261, %v2242
    %v3364 = vpack.c.b16 %v2262, %v2243
    %v3365 = vpack.c.b16 %v2263, %v2244
    %v3366 = vpack.c.b16 %v2264, %v2245
    %v3367 = vpack.c.b16 %v2265, %v2246
    %v3368 = vpack.c.b16 %v2266, %v2247
    %v3369 = vpack.c.b16 %v2286, %v2267
    %v3370 = vpack.c.b16 %v2287, %v2268
    %v3371 = vpack.c.b16 %v2288, %v2269
    %v3372 = vpack.c.b16 %v2289, %v2270
    %v3373 = vpack.c.b16 %v2290, %v2271
    %v3374 = vpack.c.b16 %v2291, %v2272
    %v3375 = vpack.c.b16 %v2292, %v2273
    %v3376 = vpack.c.b16 %v2293, %v2274
    %v3377 = vpack.c.b16 %v2294, %v2275
    %v3378 = vpack.c.b16 %v2295, %v2276
    %v3379 = vpack.c.b16 %v2296, %v2277
    %v3380 = vpack.c.b16 %v2297, %v2278
    %v3381 = vpack.c.b16 %v2298, %v2279
    %v3382 = vpack.c.b16 %v2299, %v2280
    %v3383 = vpack.c.b16 %v2300, %v2281
    %v3384 = vpack.c.b16 %v2301, %v2282
    %v3385 = vpack.c.b16 %v2302, %v2283
    %v3386 = vpack.c.b16 %v2303, %v2284
    %v3387 = vpack.c.b16 %v2304, %v2285
    %v3388 = vpack.c.b16 %v2324, %v2305
    %v3389 = vpack.c.b16 %v2325, %v2306
    %v3390 = vpack.c.b16 %v2326, %v2307
    %v3391 = vpack.c.b16 %v2327, %v2308
    %v3392 = vpack.c.b16 %v2328, %v2309
    %v3393 = vpack.c.b16 %v2329, %v2310
    %v3394 = vpack.c.b16 %v2330, %v2311
    %v3395 = vpack.c.b16 %v2331, %v2312
    %v3396 = vpack.c.b16 %v2332, %v2313
    %v3397 = vpack.c.b16 %v2333, %v2314
    %v3398 = vpack.c.b16 %v2334, %v2315
    %v3399 = vpack.c.b16 %v2335, %v2316
    %v3400 = vpack.c.b16 %v2336, %v2317
    %v3401 = vpack.c.b16 %v2337, %v2318
    %v3402 = vpack.c.b16 %v2338, %v2319
    %v3403 = vpack.c.b16 %v2339, %v2320
    %v3404 = vpack.c.b16 %v2340, %v2321
    %v3405 = vpack.c.b16 %v2341, %v2322
    %v3406 = vpack.c.b16 %v2342, %v2323
    %v3407 = vpack.c.b16 %v2362, %v2343
    %v3408 = vpack.c.b16 %v2363, %v2344
    %v3409 = vpack.c.b16 %v2364, %v2345
    %v3410 = vpack.c.b16 %v2365, %v2346
    %v3411 = vpack.c.b16 %v2366, %v2347
    %v3412 = vpack.c.b16 %v2367, %v2348
    %v3413 = vpack.c.b16 %v2368, %v2349
    %v3414 = vpack.c.b16 %v2369, %v2350
    %v3415 = vpack.c.b16 %v2370, %v2351
    %v3416 = vpack.c.b16 %v2371, %v2352
    %v3417 = vpack.c.b16 %v2372, %v2353
    %v3418 = vpack.c.b16 %v2373, %v2354
    %v3419 = vpack.c.b16 %v2374, %v2355
    %v3420 = vpack.c.b16 %v2375, %v2356
    %v3421 = vpack.c.b16 %v2376, %v2357
    %v3422 = vpack.c.b16 %v2377, %v2358
    %v3423 = vpack.c.b16 %v2378, %v2359
    %v3424 = vpack.c.b16 %v2379, %v2360
    %v3425 = vpack.c.b16 %v2380, %v2361
    %v3426 = vpack.c.b16 %v2400, %v2381
    %v3427 = vpack.c.b16 %v2401, %v2382
    %v3428 = vpack.c.b16 %v2402, %v2383
    %v3429 = vpack.c.b16 %v2403, %v2384
    %v3430 = vpack.c.b16 %v2404, %v2385
    %v3431 = vpack.c.b16 %v2405, %v2386
    %v3432 = vpack.c.b16 %v2406, %v2387
    %v3433 = vpack.c.b16 %v2407, %v2388
    %v3434 = vpack.c.b16 %v2408, %v2389
    %v3435 = vpack.c.b16 %v2409, %v2390
    %v3436 = vpack.c.b16 %v2410, %v2391
    %v3437 = vpack.c.b16 %v2411, %v2392
    %v3438 = vpack.c.b16 %v2412, %v2393
    %v3439 = vpack.c.b16 %v2413, %v2394
    %v3440 = vpack.c.b16 %v2414, %v2395
    %v3441 = vpack.c.b16 %v2415, %v2396
    %v3442 = vpack.c.b16 %v2416, %v2397
    %v3443 = vpack.c.b16 %v2417, %v2398
    %v3444 = vpack.c.b16 %v2418, %v2399
    %v3445 = vpack.c.b16 %v2438, %v2419
    %v3446 = vpack.c.b16 %v2439, %v2420
    %v3447 = vpack.c.b16 %v2440, %v2421
    %v3448 = vpack.c.b16 %v2441, %v2422
    %v3449 = vpack.c.b16 %v2442, %v2423
    %v3450 = vpack.c.b16 %v2443, %v2424
    %v3451 = vpack.c.b16 %v2444, %v2425
    %v3452 = vpack.c.b16 %v2445, %v2426
    %v3453 = vpack.c.b16 %v2446, %v2427
    %v3454 = vpack.c.b16 %v2447, %v2428
    %v3455 = vpack.c.b16 %v2448, %v2429
    %v3456 = vpack.c.b16 %v2449, %v2430
    %v3457 = vpack.c.b16 %v2450, %v2431
    %v3458 = vpack.c.b16 %v2451, %v2432
    %v3459 = vpack.c.b16 %v2452, %v2433
    %v3460 = vpack.c.b16 %v2453, %v2434
    %v3461 = vpack.c.b16 %v2454, %v2435
    %v3462 = vpack.c.b16 %v2455, %v2436
    %v3463 = vpack.c.b16 %v2456, %v2437
    %v3464 = vpack.c.b16 %v2476, %v2457
    %v3465 = vpack.c.b16 %v2477, %v2458
    %v3466 = vpack.c.b16 %v2478, %v2459
    %v3467 = vpack.c.b16 %v2479, %v2460
    %v3468 = vpack.c.b16 %v2480, %v2461
    %v3469 = vpack.c.b16 %v2481, %v2462
    %v3470 = vpack.c.b16 %v2482, %v2463
    %v3471 = vpack.c.b16 %v2483, %v2464
    %v3472 = vpack.c.b16 %v2484, %v2465
    %v3473 = vpack.c.b16 %v2485, %v2466
    %v3474 = vpack.c.b16 %v2486, %v2467
    %v3475 = vpack.c.b16 %v2487, %v2468
    %v3476 = vpack.c.b16 %v2488, %v2469
    %v3477 = vpack.c.b16 %v2489, %v2470
    %v3478 = vpack.c.b16 %v2490, %v2471
    %v3479 = vpack.c.b16 %v2491, %v2472
    %v3480 = vpack.c.b16 %v2492, %v2473
    %v3481 = vpack.c.b16 %v2493, %v2474
    %v3482 = vpack.c.b16 %v2494, %v2475
    %v3483 = vpack.c.b16 %v2514, %v2495
    %v3484 = vpack.c.b16 %v2515, %v2496
    %v3485 = vpack.c.b16 %v2516, %v2497
    %v3486 = vpack.c.b16 %v2517, %v2498
    %v3487 = vpack.c.b16 %v2518, %v2499
    %v3488 = vpack.c.b16 %v2519, %v2500
    %v3489 = vpack.c.b16 %v2520, %v2501
    %v3490 = vpack.c.b16 %v2521, %v2502
    %v3491 = vpack.c.b16 %v2522, %v2503
    %v3492 = vpack.c.b16 %v2523, %v2504
    %v3493 = vpack.c.b16 %v2524, %v2505
    %v3494 = vpack.c.b16 %v2525, %v2506
    %v3495 = vpack.c.b16 %v2526, %v2507
    %v3496 = vpack.c.b16 %v2527, %v2508
    %v3497 = vpack.c.b16 %v2528, %v2509
    %v3498 = vpack.c.b16 %v2529, %v2510
    %v3499 = vpack.c.b16 %v2530, %v2511
    %v3500 = vpack.c.b16 %v2531, %v2512
    %v3501 = vpack.c.b16 %v2532, %v2513
    %v3502 = vpack.c.b16 %v2552, %v2533
    %v3503 = vpack.c.b16 %v2553, %v2534
    %v3504 = vpack.c.b16 %v2554, %v2535
    %v3505 = vpack.c.b16 %v2555, %v2536
    %v3506 = vpack.c.b16 %v2556, %v2537
    %v3507 = vpack.c.b16 %v2557, %v2538
    %v3508 = vpack.c.b16 %v2558, %v2539
    %v3509 = vpack.c.b16 %v2559, %v2540
    %v3510 = vpack.c.b16 %v2560, %v2541
    %v3511 = vpack.c.b16 %v2561, %v2542
    %v3512 = vpack.c.b16 %v2562, %v2543
    %v3513 = vpack.c.b16 %v2563, %v2544
    %v3514 = vpack.c.b16 %v2564, %v2545
    %v3515 = vpack.c.b16 %v2565, %v2546
    %v3516 = vpack.c.b16 %v2566, %v2547
    %v3517 = vpack.c.b16 %v2567, %v2548
    %v3518 = vpack.c.b16 %v2568, %v2549
    %v3519 = vpack.c.b16 %v2569, %v2550
    %v3520 = vpack.c.b16 %v2570, %v2551
    %v3521 = vpack.c.b16 %v2590, %v2571
    %v3522 = vpack.c.b16 %v2591, %v2572
    %v3523 = vpack.c.b16 %v2592, %v2573
    %v3524 = vpack.c.b16 %v2593, %v2574
    %v3525 = vpack.c.b16 %v2594, %v2575
    %v3526 = vpack.c.b16 %v2595, %v2576
    %v3527 = vpack.c.b16 %v2596, %v2577
    %v3528 = vpack.c.b16 %v2597, %v2578
    %v3529 = vpack.c.b16 %v2598, %v2579
    %v3530 = vpack.c.b16 %v2599, %v2580
    %v3531 = vpack.c.b16 %v2600, %v2581
    %v3532 = vpack.c.b16 %v2601, %v2582
    %v3533 = vpack.c.b16 %v2602, %v2583
    %v3534 = vpack.c.b16 %v2603, %v2584
    %v3535 = vpack.c.b16 %v2604, %v2585
    %v3536 = vpack.c.b16 %v2605, %v2586
    %v3537 = vpack.c.b16 %v2606, %v2587
    %v3538 = vpack.c.b16 %v2607, %v2588
    %v3539 = vpack.c.b16 %v2608, %v2589
    %v3540 = vpack.c.b16 %v2628, %v2609
    %v3541 = vpack.c.b16 %v2629, %v2610
    %v3542 = vpack.c.b16 %v2630, %v2611
    %v3543 = vpack.c.b16 %v2631, %v2612
    %v3544 = vpack.c.b16 %v2632, %v2613
    %v3545 = vpack.c.b16 %v2633, %v2614
    %v3546 = vpack.c.b16 %v2634, %v2615
    %v3547 = vpack.c.b16 %v2635, %v2616
    %v3548 = vpack.c.b16 %v2636, %v2617
    %v3549 = vpack.c.b16 %v2637, %v2618
    %v3550 = vpack.c.b16 %v2638, %v2619
    %v3551 = vpack.c.b16 %v2639, %v2620
    %v3552 = vpack.c.b16 %v2640, %v2621
    %v3553 = vpack.c.b16 %v2641, %v2622
    %v3554 = vpack.c.b16 %v2642, %v2623
    %v3555 = vpack.c.b16 %v2643, %v2624
    %v3556 = vpack.c.b16 %v2644, %v2625
    %v3557 = vpack.c.b16 %v2645, %v2626
    %v3558 = vpack.c.b16 %v2646, %v2627
    %v3559 = vpack.c.b16 %v2666, %v2647
    %v3560 = vpack.c.b16 %v2667, %v2648
    %v3561 = vpack.c.b16 %v2668, %v2649
    %v3562 = vpack.c.b16 %v2669, %v2650
    %v3563 = vpack.c.b16 %v2670, %v2651
    %v3564 = vpack.c.b16 %v2671, %v2652
    %v3565 = vpack.c.b16 %v2672, %v2653
    %v3566 = vpack.c.b16 %v2673, %v2654
    %v3567 = vpack.c.b16 %v2674, %v2655
    %v3568 = vpack.c.b16 %v2675, %v2656
    %v3569 = vpack.c.b16 %v2676, %v2657
    %v3570 = vpack.c.b16 %v2677, %v2658
    %v3571 = vpack.c.b16 %v2678, %v2659
    %v3572 = vpack.c.b16 %v2679, %v2660
    %v3573 = vpack.c.b16 %v2680, %v2661
    %v3574 = vpack.c.b16 %v2681, %v2662
    %v3575 = vpack.c.b16 %v2682, %v2663
    %v3576 = vpack.c.b16 %v2683, %v2664
    %v3577 = vpack.c.b16 %v2684, %v2665
    %v3578 = vpack.c.b16 %v2704, %v2685
    %v3579 = vpack.c.b16 %v2705, %v2686
    %v3580 = vpack.c.b16 %v2706, %v2687
    %v3581 = vpack.c.b16 %v2707, %v2688
    %v3582 = vpack.c.b16 %v2708, %v2689
    %v3583 = vpack.c.b16 %v2709, %v2690
    %v3584 = vpack.c.b16 %v2710, %v2691
    %v3585 = vpack.c.b16 %v2711, %v2692
    %v3586 = vpack.c.b16 %v2712, %v2693
    %v3587 = vpack.c.b16 %v2713, %v2694
    %v3588 = vpack.c.b16 %v2714, %v2695
    %v3589 = vpack.c.b16 %v2715, %v2696
    %v3590 = vpack.c.b16 %v2716, %v2697
    %v3591 = vpack.c.b16 %v2717, %v2698
    %v3592 = vpack.c.b16 %v2718, %v2699
    %v3593 = vpack.c.b16 %v2719, %v2700
    %v3594 = vpack.c.b16 %v2720, %v2701
    %v3595 = vpack.c.b16 %v2721, %v2702
    %v3596 = vpack.c.b16 %v2722, %v2703
    %v3597 = vpack.c.b16 %v2742, %v2723
    %v3598 = vpack.c.b16 %v2743, %v2724
    %v3599 = vpack.c.b16 %v2744, %v2725
    %v3600 = vpack.c.b16 %v2745, %v2726
    %v3601 = vpack.c.b16 %v2746, %v2727
    %v3602 = vpack.c.b16 %v2747, %v2728
    %v3603 = vpack.c.b16 %v2748, %v2729
    %v3604 = vpack.c.b16 %v2749, %v2730
    %v3605 = vpack.c.b16 %v2750, %v2731
    %v3606 = vpack.c.b16 %v2751, %v2732
    %v3607 = vpack.c.b16 %v2752, %v2733
    %v3608 = vpack.c.b16 %v2753, %v2734
    %v3609 = vpack.c.b16 %v2754, %v2735
    %v3610 = vpack.c.b16 %v2755, %v2736
    %v3611 = vpack.c.b16 %v2756, %v2737
    %v3612 = vpack.c.b16 %v2757, %v2738
    %v3613 = vpack.c.b16 %v2758, %v2739
    %v3614 = vpack.c.b16 %v2759, %v2740
    %v3615 = vpack.c.b16 %v2760, %v2741
    %v3616 = vpack.c.b16 %v2780, %v2761
    %v3617 = vpack.c.b16 %v2781, %v2762
    %v3618 = vpack.c.b16 %v2782, %v2763
    %v3619 = vpack.c.b16 %v2783, %v2764
    %v3620 = vpack.c.b16 %v2784, %v2765
    %v3621 = vpack.c.b16 %v2785, %v2766
    %v3622 = vpack.c.b16 %v2786, %v2767
    %v3623 = vpack.c.b16 %v2787, %v2768
    %v3624 = vpack.c.b16 %v2788, %v2769
    %v3625 = vpack.c.b16 %v2789, %v2770
    %v3626 = vpack.c.b16 %v2790, %v2771
    %v3627 = vpack.c.b16 %v2791, %v2772
    %v3628 = vpack.c.b16 %v2792, %v2773
    %v3629 = vpack.c.b16 %v2793, %v2774
    %v3630 = vpack.c.b16 %v2794, %v2775
    %v3631 = vpack.c.b16 %v2795, %v2776
    %v3632 = vpack.c.b16 %v2796, %v2777
    %v3633 = vpack.c.b16 %v2797, %v2778
    %v3634 = vpack.c.b16 %v2798, %v2779
    %v3635 = vpack.c.b16 %v2818, %v2799
    %v3636 = vpack.c.b16 %v2819, %v2800
    %v3637 = vpack.c.b16 %v2820, %v2801
    %v3638 = vpack.c.b16 %v2821, %v2802
    %v3639 = vpack.c.b16 %v2822, %v2803
    %v3640 = vpack.c.b16 %v2823, %v2804
    %v3641 = vpack.c.b16 %v2824, %v2805
    %v3642 = vpack.c.b16 %v2825, %v2806
    %v3643 = vpack.c.b16 %v2826, %v2807
    %v3644 = vpack.c.b16 %v2827, %v2808
    %v3645 = vpack.c.b16 %v2828, %v2809
    %v3646 = vpack.c.b16 %v2829, %v2810
    %v3647 = vpack.c.b16 %v2830, %v2811
    %v3648 = vpack.c.b16 %v2831, %v2812
    %v3649 = vpack.c.b16 %v2832, %v2813
    %v3650 = vpack.c.b16 %v2833, %v2814
    %v3651 = vpack.c.b16 %v2834, %v2815
    %v3652 = vpack.c.b16 %v2835, %v2816
    %v3653 = vpack.c.b16 %v2836, %v2817
    %v3654 = vpack.c.b16 %v2856, %v2837
    %v3655 = vpack.c.b16 %v2857, %v2838
    %v3656 = vpack.c.b16 %v2858, %v2839
    %v3657 = vpack.c.b16 %v2859, %v2840
    %v3658 = vpack.c.b16 %v2860, %v2841
    %v3659 = vpack.c.b16 %v2861, %v2842
    %v3660 = vpack.c.b16 %v2862, %v2843
    %v3661 = vpack.c.b16 %v2863, %v2844
    %v3662 = vpack.c.b16 %v2864, %v2845
    %v3663 = vpack.c.b16 %v2865, %v2846
    %v3664 = vpack.c.b16 %v2866, %v2847
    %v3665 = vpack.c.b16 %v2867, %v2848
    %v3666 = vpack.c.b16 %v2868, %v2849
    %v3667 = vpack.c.b16 %v2869, %v2850
    %v3668 = vpack.c.b16 %v2870, %v2851
    %v3669 = vpack.c.b16 %v2871, %v2852
    %v3670 = vpack.c.b16 %v2872, %v2853
    %v3671 = vpack.c.b16 %v2873, %v2854
    %v3672 = vpack.c.b16 %v2874, %v2855
    %v3673 = vpack.c.b16 %v2894, %v2875
    %v3674 = vpack.c.b16 %v2895, %v2876
    %v3675 = vpack.c.b16 %v2896, %v2877
    %v3676 = vpack.c.b16 %v2897, %v2878
    %v3677 = vpack.c.b16 %v2898, %v2879
    %v3678 = vpack.c.b16 %v2899, %v2880
    %v3679 = vpack.c.b16 %v2900, %v2881
    %v3680 = vpack.c.b16 %v2901, %v2882
    %v3681 = vpack.c.b16 %v2902, %v2883
    %v3682 = vpack.c.b16 %v2903, %v2884
    %v3683 = vpack.c.b16 %v2904, %v2885
    %v3684 = vpack.c.b16 %v2905, %v2886
    %v3685 = vpack.c.b16 %v2906, %v2887
    %v3686 = vpack.c.b16 %v2907, %v2888
    %v3687 = vpack.c.b16 %v2908, %v2889
    %v3688 = vpack.c.b16 %v2909, %v2890
    %v3689 = vpack.c.b16 %v2910, %v2891
    %v3690 = vpack.c.b16 %v2911, %v2892
    %v3691 = vpack.c.b16 %v2912, %v2893
    %v3692 = vpack.c.b16 %v2932, %v2913
    %v3693 = vpack.c.b16 %v2933, %v2914
    %v3694 = vpack.c.b16 %v2934, %v2915
    %v3695 = vpack.c.b16 %v2935, %v2916
    %v3696 = vpack.c.b16 %v2936, %v2917
    %v3697 = vpack.c.b16 %v2937, %v2918
    %v3698 = vpack.c.b16 %v2938, %v2919
    %v3699 = vpack.c.b16 %v2939, %v2920
    %v3700 = vpack.c.b16 %v2940, %v2921
    %v3701 = vpack.c.b16 %v2941, %v2922
    %v3702 = vpack.c.b16 %v2942, %v2923
    %v3703 = vpack.c.b16 %v2943, %v2924
    %v3704 = vpack.c.b16 %v2944, %v2925
    %v3705 = vpack.c.b16 %v2945, %v2926
    %v3706 = vpack.c.b16 %v2946, %v2927
    %v3707 = vpack.c.b16 %v2947, %v2928
    %v3708 = vpack.c.b16 %v2948, %v2929
    %v3709 = vpack.c.b16 %v2949, %v2930
    %v3710 = vpack.c.b16 %v2950, %v2931
    %v3711 = vpack.c.b16 %v2970, %v2951
    %v3712 = vpack.c.b16 %v2971, %v2952
    %v3713 = vpack.c.b16 %v2972, %v2953
    %v3714 = vpack.c.b16 %v2973, %v2954
    %v3715 = vpack.c.b16 %v2974, %v2955
    %v3716 = vpack.c.b16 %v2975, %v2956
    %v3717 = vpack.c.b16 %v2976, %v2957
    %v3718 = vpack.c.b16 %v2977, %v2958
    %v3719 = vpack.c.b16 %v2978, %v2959
    %v3720 = vpack.c.b16 %v2979, %v2960
    %v3721 = vpack.c.b16 %v2980, %v2961
    %v3722 = vpack.c.b16 %v2981, %v2962
    %v3723 = vpack.c.b16 %v2982, %v2963
    %v3724 = vpack.c.b16 %v2983, %v2964
    %v3725 = vpack.c.b16 %v2984, %v2965
    %v3726 = vpack.c.b16 %v2985, %v2966
    %v3727 = vpack.c.b16 %v2986, %v2967
    %v3728 = vpack.c.b16 %v2987, %v2968
    %v3729 = vpack.c.b16 %v2988, %v2969
    %v3730 = vpack.c.b16 %v3008, %v2989
    %v3731 = vpack.c.b16 %v3009, %v2990
    %v3732 = vpack.c.b16 %v3010, %v2991
    %v3733 = vpack.c.b16 %v3011, %v2992
    %v3734 = vpack.c.b16 %v3012, %v2993
    %v3735 = vpack.c.b16 %v3013, %v2994
    %v3736 = vpack.c.b16 %v3014, %v2995
    %v3737 = vpack.c.b16 %v3015, %v2996
    %v3738 = vpack.c.b16 %v3016, %v2997
    %v3739 = vpack.c.b16 %v3017, %v2998
    %v3740 = vpack.c.b16 %v3018, %v2999
    %v3741 = vpack.c.b16 %v3019, %v3000
    %v3742 = vpack.c.b16 %v3020, %v3001
    %v3743 = vpack.c.b16 %v3021, %v3002
    %v3744 = vpack.c.b16 %v3022, %v3003
    %v3745 = vpack.c.b16 %v3023, %v3004
    %v3746 = vpack.c.b16 %v3024, %v3005
    %v3747 = vpack.c.b16 %v3025, %v3006
    %v3748 = vpack.c.b16 %v3026, %v3007
    %v3749 = vpack.c.b16 %v3027, %v3027
    %v3750 = vpack.c.b16 %v3028, %v3028
    %v3751 = vpack.c.b16 %v3029, %v3029
    %v3752 = vpack.c.b16 %v3030, %v3030
    %v3753 = vpack.c.b16 %v3031, %v3031
    %v3754 = vpack.c.b16 %v3032, %v3032
    %v3755 = vpack.c.b16 %v3033, %v3033
    %v3756 = vpack.c.b16 %v3034, %v3034
    %v3757 = vpack.c.b16 %v3035, %v3035
    %v3758 = vpack.c.b16 %v3036, %v3036
    %v3759 = vpack.c.b16 %v3037, %v3037
    %v3760 = vpack.c.b16 %v3038, %v3038
    %v3761 = vpack.c.b16 %v3039, %v3039
    %v3762 = vpack.c.b16 %v3040, %v3040
    %v3763 = vpack.c.b16 %v3041, %v3041
    %v3764 = vpack.c.b16 %v3042, %v3042
    %v3765 = vpack.c.b16 %v3043, %v3043
    %v3766 = vpack.c.b16 %v3044, %v3044
    %v3767 = vpack.c.b16 %v3045, %v3045
    %vm4471 = vcmask 719872
    %v4473 = vsel %vm4471, %v866, 0
    %vm4475 = vcmask 1043456
    %v4477 = vsel %vm4475, %v3749, 0
    %v4480 = vsel %vm4475, %v3750, 0
    %v4483 = vsel %vm4475, %v3751, 0
    %v4486 = vsel %vm4475, %v3752, 0
    %v4489 = vsel %vm4475, %v3753, 0
    %v4492 = vsel %vm4475, %v3754, 0
    %v4495 = vsel %vm4475, %v3755, 0
    %v4498 = vsel %vm4475, %v3756, 0
    %v4501 = vsel %vm4475, %v3757, 0
    %v4504 = vsel %vm4475, %v3758, 0
    %v4507 = vsel %vm4475, %v3759, 0
    %v4510 = vsel %vm4475, %v3760, 0
    %v4513 = vsel %vm4475, %v3761, 0
    %v4516 = vsel %vm4475, %v3762, 0
    %v4519 = vsel %vm4475, %v3763, 0
    %v4522 = vsel %vm4475, %v3764, 0
    %v4525 = vsel %vm4475, %v3765, 0
    %v4528 = vsel %vm4475, %v3766, 0
    %v4531 = vsel %vm4475, %v3767, 0
    %4533 = vmatprep.subr.bf16.mxu0 %v3047
    %4534 = vmatpush1.bf16.msra.mxu0 %v3046
    %4535 = vmatprep.subr.bf16.mxu0 %v3066
    %4536 = vmatpush1.bf16.msra.mxu0 %v3065
    %4537 = vmatprep.subr.bf16.mxu0 %v3085
    %4538 = vmatpush1.bf16.msra.mxu0 %v3084
    %4539 = vmatprep.subr.bf16.mxu0 %v3104
    %4540 = vmatpush1.bf16.msra.mxu0 %v3103
    %4541 = vmatprep.subr.bf16.mxu0 %v3123
    %4542 = vmatpush1.bf16.msra.mxu0 %v3122
    %4543 = vmatprep.subr.bf16.mxu0 %v3142
    %4544 = vmatpush1.bf16.msra.mxu0 %v3141
    %4545 = vmatprep.subr.bf16.mxu0 %v3161
    %4546 = vmatpush1.bf16.msra.mxu0 %v3160
    %4547 = vmatprep.subr.bf16.mxu0 %v3180
    %4548 = vmatpush1.bf16.msra.mxu0 %v3179
    %4549 = vmatprep.subr.bf16.mxu0 %v3199
    %4550 = vmatpush1.bf16.msra.mxu0 %v3198
    %4551 = vmatprep.subr.bf16.mxu0 %v3218
    %4552 = vmatpush1.bf16.msra.mxu0 %v3217
    %4553 = vmatprep.subr.bf16.mxu0 %v3237
    %4554 = vmatpush1.bf16.msra.mxu0 %v3236
    %4555 = vmatprep.subr.bf16.mxu0 %v3256
    %4556 = vmatpush1.bf16.msra.mxu0 %v3255
    %4557 = vmatprep.subr.bf16.mxu0 %v3275
    %4558 = vmatpush1.bf16.msra.mxu0 %v3274
    %4559 = vmatprep.subr.bf16.mxu0 %v3294
    %4560 = vmatpush1.bf16.msra.mxu0 %v3293
    %4561 = vmatprep.subr.bf16.mxu0 %v3313
    %4562 = vmatpush1.bf16.msra.mxu0 %v3312
    %4563 = vmatprep.subr.bf16.mxu0 %v3332
    %4564 = vmatpush1.bf16.msra.mxu0 %v3331
    %4565 = vmatprep.mubr.bf16.mxu0 %v863
    %4566 = vmatmul.mubr.bf16.gmra.mrb[0].mxu0 %v862
    %v4567 = vpop.f32.mrb[0].mxu0
    %v4568 = vadd.f32 0.0, %v4567
    %v4569 = vpop.f32.mrb[0].mxu0
    %v4570 = vadd.f32 0.0, %v4569
    %v4571 = vpop.f32.mrb[0].mxu0
    %v4572 = vadd.f32 0.0, %v4571
    %v4573 = vpop.f32.mrb[0].mxu0
    %v4574 = vadd.f32 0.0, %v4573
    %4575 = vdwg.mxu0
    %4576 = vmatprep.subr.bf16.mxu0 %v3351
    %4577 = vmatpush1.bf16.msra.mxu0 %v3350
    %4578 = vmatprep.subr.bf16.mxu0 %v3370
    %4579 = vmatpush1.bf16.msra.mxu0 %v3369
    %4580 = vmatprep.subr.bf16.mxu0 %v3389
    %4581 = vmatpush1.bf16.msra.mxu0 %v3388
    %4582 = vmatprep.subr.bf16.mxu0 %v3408
    %4583 = vmatpush1.bf16.msra.mxu0 %v3407
    %4584 = vmatprep.subr.bf16.mxu0 %v3427
    %4585 = vmatpush1.bf16.msra.mxu0 %v3426
    %4586 = vmatprep.subr.bf16.mxu0 %v3446
    %4587 = vmatpush1.bf16.msra.mxu0 %v3445
    %4588 = vmatprep.subr.bf16.mxu0 %v3465
    %4589 = vmatpush1.bf16.msra.mxu0 %v3464
    %4590 = vmatprep.subr.bf16.mxu0 %v3484
    %4591 = vmatpush1.bf16.msra.mxu0 %v3483
    %4592 = vmatprep.subr.bf16.mxu0 %v3503
    %4593 = vmatpush1.bf16.msra.mxu0 %v3502
    %4594 = vmatprep.subr.bf16.mxu0 %v3522
    %4595 = vmatpush1.bf16.msra.mxu0 %v3521
    %4596 = vmatprep.subr.bf16.mxu0 %v3541
    %4597 = vmatpush1.bf16.msra.mxu0 %v3540
    %4598 = vmatprep.subr.bf16.mxu0 %v3560
    %4599 = vmatpush1.bf16.msra.mxu0 %v3559
    %4600 = vmatprep.subr.bf16.mxu0 %v3579
    %4601 = vmatpush1.bf16.msra.mxu0 %v3578
    %4602 = vmatprep.subr.bf16.mxu0 %v3598
    %4603 = vmatpush1.bf16.msra.mxu0 %v3597
    %4604 = vmatprep.subr.bf16.mxu0 %v3617
    %4605 = vmatpush1.bf16.msra.mxu0 %v3616
    %4606 = vmatprep.subr.bf16.mxu0 %v3636
    %4607 = vmatpush1.bf16.msra.mxu0 %v3635
    %4608 = vmatprep.mubr.bf16.mxu0 %v865
    %4609 = vmatmul.mubr.bf16.gmra.mrb[0].mxu0 %v864
    %v4610 = vpop.f32.mrb[0].mxu0
    %v4611 = vadd.f32 %v4568, %v4610
    %v4612 = vpop.f32.mrb[0].mxu0
    %v4613 = vadd.f32 %v4570, %v4612
    %v4614 = vpop.f32.mrb[0].mxu0
    %v4615 = vadd.f32 %v4572, %v4614
    %v4616 = vpop.f32.mrb[0].mxu0
    %v4617 = vadd.f32 %v4574, %v4616
    %4618 = vdwg.mxu0
    %4619 = vmatprep.subr.bf16.mxu0 %v3655
    %4620 = vmatpush1.bf16.msra.mxu0 %v3654
    %4621 = vmatprep.subr.bf16.mxu0 %v3674
    %4622 = vmatpush1.bf16.msra.mxu0 %v3673
    %4623 = vmatprep.subr.bf16.mxu0 %v3693
    %4624 = vmatpush1.bf16.msra.mxu0 %v3692
    %4625 = vmatprep.subr.bf16.mxu0 %v3712
    %4626 = vmatpush1.bf16.msra.mxu0 %v3711
    %4627 = vmatprep.subr.bf16.mxu0 %v3731
    %4628 = vmatpush1.bf16.msra.mxu0 %v3730
    %4629 = vmatprep.subr.bf16.mxu0 %v4480
    %4630 = vmatpush1.bf16.msra.mxu0 %v4477
    %4631 = vmatprep.subr.bf16.mxu0 0
    %4632 = vmatpush1.bf16.msra.mxu0 0
    %4633 = vmatprep.subr.bf16.mxu0 0
    %4634 = vmatpush1.bf16.msra.mxu0 0
    %4635 = vmatprep.subr.bf16.mxu0 0
    %4636 = vmatpush1.bf16.msra.mxu0 0
    %4637 = vmatprep.subr.bf16.mxu0 0
    %4638 = vmatpush1.bf16.msra.mxu0 0
    %4639 = vmatprep.subr.bf16.mxu0 0
    %4640 = vmatpush1.bf16.msra.mxu0 0
    %4641 = vmatprep.subr.bf16.mxu0 0
    %4642 = vmatpush1.bf16.msra.mxu0 0
    %4643 = vmatprep.subr.bf16.mxu0 0
    %4644 = vmatpush1.bf16.msra.mxu0 0
    %4645 = vmatprep.subr.bf16.mxu0 0
    %4646 = vmatpush1.bf16.msra.mxu0 0
    %4647 = vmatprep.subr.bf16.mxu0 0
    %4648 = vmatpush1.bf16.msra.mxu0 0
    %4649 = vmatprep.subr.bf16.mxu0 0
    %4650 = vmatpush1.bf16.msra.mxu0 0
    %4651 = vmatprep.mubr.bf16.mxu0 0
    %4652 = vmatmul.mubr.bf16.gmra.mrb[0].mxu0 %v4473
    %v4653 = vpop.f32.mrb[0].mxu0
    %v4654 = vadd.f32 %v4611, %v4653
    %v4655 = vpop.f32.mrb[0].mxu0
    %v4656 = vadd.f32 %v4613, %v4655
    %v4657 = vpop.f32.mrb[0].mxu0
    %v4658 = vadd.f32 %v4615, %v4657
    %v4659 = vpop.f32.mrb[0].mxu0
    %v4660 = vadd.f32 %v4617, %v4659
    %4661 = vdwg.mxu0
    %4662 = vmatprep.subr.bf16.mxu0 %v3049
    %4663 = vmatpush1.bf16.msra.mxu0 %v3048
    %4664 = vmatprep.subr.bf16.mxu0 %v3068
    %4665 = vmatpush1.bf16.msra.mxu0 %v3067
    %4666 = vmatprep.subr.bf16.mxu0 %v3087
    %4667 = vmatpush1.bf16.msra.mxu0 %v3086
    %4668 = vmatprep.subr.bf16.mxu0 %v3106
    %4669 = vmatpush1.bf16.msra.mxu0 %v3105
    %4670 = vmatprep.subr.bf16.mxu0 %v3125
    %4671 = vmatpush1.bf16.msra.mxu0 %v3124
    %4672 = vmatprep.subr.bf16.mxu0 %v3144
    %4673 = vmatpush1.bf16.msra.mxu0 %v3143
    %4674 = vmatprep.subr.bf16.mxu0 %v3163
    %4675 = vmatpush1.bf16.msra.mxu0 %v3162
    %4676 = vmatprep.subr.bf16.mxu0 %v3182
    %4677 = vmatpush1.bf16.msra.mxu0 %v3181
    %4678 = vmatprep.subr.bf16.mxu0 %v3201
    %4679 = vmatpush1.bf16.msra.mxu0 %v3200
    %4680 = vmatprep.subr.bf16.mxu0 %v3220
    %4681 = vmatpush1.bf16.msra.mxu0 %v3219
    %4682 = vmatprep.subr.bf16.mxu0 %v3239
    %4683 = vmatpush1.bf16.msra.mxu0 %v3238
    %4684 = vmatprep.subr.bf16.mxu0 %v3258
    %4685 = vmatpush1.bf16.msra.mxu0 %v3257
    %4686 = vmatprep.subr.bf16.mxu0 %v3277
    %4687 = vmatpush1.bf16.msra.mxu0 %v3276
    %4688 = vmatprep.subr.bf16.mxu0 %v3296
    %4689 = vmatpush1.bf16.msra.mxu0 %v3295
    %4690 = vmatprep.subr.bf16.mxu0 %v3315
    %4691 = vmatpush1.bf16.msra.mxu0 %v3314
    %4692 = vmatprep.subr.bf16.mxu0 %v3334
    %4693 = vmatpush1.bf16.msra.mxu0 %v3333
    %4694 = vmatprep.mubr.bf16.mxu0 %v863
    %4695 = vmatmul.mubr.bf16.gmra.mrb[0].mxu0 %v862
    %v4696 = vpop.f32.mrb[0].mxu0
    %v4697 = vadd.f32 0.0, %v4696
    %v4698 = vpop.f32.mrb[0].mxu0
    %v4699 = vadd.f32 0.0, %v4698
    %v4700 = vpop.f32.mrb[0].mxu0
    %v4701 = vadd.f32 0.0, %v4700
    %v4702 = vpop.f32.mrb[0].mxu0
    %v4703 = vadd.f32 0.0, %v4702
    %4704 = vdwg.mxu0
    %4705 = vmatprep.subr.bf16.mxu0 %v3353
    %4706 = vmatpush1.bf16.msra.mxu0 %v3352
    %4707 = vmatprep.subr.bf16.mxu0 %v3372
    %4708 = vmatpush1.bf16.msra.mxu0 %v3371
    %4709 = vmatprep.subr.bf16.mxu0 %v3391
    %4710 = vmatpush1.bf16.msra.mxu0 %v3390
    %4711 = vmatprep.subr.bf16.mxu0 %v3410
    %4712 = vmatpush1.bf16.msra.mxu0 %v3409
    %4713 = vmatprep.subr.bf16.mxu0 %v3429
    %4714 = vmatpush1.bf16.msra.mxu0 %v3428
    %4715 = vmatprep.subr.bf16.mxu0 %v3448
    %4716 = vmatpush1.bf16.msra.mxu0 %v3447
    %4717 = vmatprep.subr.bf16.mxu0 %v3467
    %4718 = vmatpush1.bf16.msra.mxu0 %v3466
    %4719 = vmatprep.subr.bf16.mxu0 %v3486
    %4720 = vmatpush1.bf16.msra.mxu0 %v3485
    %4721 = vmatprep.subr.bf16.mxu0 %v3505
    %4722 = vmatpush1.bf16.msra.mxu0 %v3504
    %4723 = vmatprep.subr.bf16.mxu0 %v3524
    %4724 = vmatpush1.bf16.msra.mxu0 %v3523
    %4725 = vmatprep.subr.bf16.mxu0 %v3543
    %4726 = vmatpush1.bf16.msra.mxu0 %v3542
    %4727 = vmatprep.subr.bf16.mxu0 %v3562
    %4728 = vmatpush1.bf16.msra.mxu0 %v3561
    %4729 = vmatprep.subr.bf16.mxu0 %v3581
    %4730 = vmatpush1.bf16.msra.mxu0 %v3580
    %4731 = vmatprep.subr.bf16.mxu0 %v3600
    %4732 = vmatpush1.bf16.msra.mxu0 %v3599
    %4733 = vmatprep.subr.bf16.mxu0 %v3619
    %4734 = vmatpush1.bf16.msra.mxu0 %v3618
    %4735 = vmatprep.subr.bf16.mxu0 %v3638
    %4736 = vmatpush1.bf16.msra.mxu0 %v3637
    %4737 = vmatprep.mubr.bf16.mxu0 %v865
    %4738 = vmatmul.mubr.bf16.gmra.mrb[0].mxu0 %v864
    %v4739 = vpop.f32.mrb[0].mxu0
    %v4740 = vadd.f32 %v4697, %v4739
    %v4741 = vpop.f32.mrb[0].mxu0
    %v4742 = vadd.f32 %v4699, %v4741
    %v4743 = vpop.f32.mrb[0].mxu0
    %v4744 = vadd.f32 %v4701, %v4743
    %v4745 = vpop.f32.mrb[0].mxu0
    %v4746 = vadd.f32 %v4703, %v4745
    %4747 = vdwg.mxu0
    %4748 = vmatprep.subr.bf16.mxu0 %v3657
    %4749 = vmatpush1.bf16.msra.mxu0 %v3656
    %4750 = vmatprep.subr.bf16.mxu0 %v3676
    %4751 = vmatpush1.bf16.msra.mxu0 %v3675
    %4752 = vmatprep.subr.bf16.mxu0 %v3695
    %4753 = vmatpush1.bf16.msra.mxu0 %v3694
    %4754 = vmatprep.subr.bf16.mxu0 %v3714
    %4755 = vmatpush1.bf16.msra.mxu0 %v3713
    %4756 = vmatprep.subr.bf16.mxu0 %v3733
    %4757 = vmatpush1.bf16.msra.mxu0 %v3732
    %4758 = vmatprep.subr.bf16.mxu0 %v4486
    %4759 = vmatpush1.bf16.msra.mxu0 %v4483
    %4760 = vmatprep.subr.bf16.mxu0 0
    %4761 = vmatpush1.bf16.msra.mxu0 0
    %4762 = vmatprep.subr.bf16.mxu0 0
    %4763 = vmatpush1.bf16.msra.mxu0 0
    %4764 = vmatprep.subr.bf16.mxu0 0
    %4765 = vmatpush1.bf16.msra.mxu0 0
    %4766 = vmatprep.subr.bf16.mxu0 0
    %4767 = vmatpush1.bf16.msra.mxu0 0
    %4768 = vmatprep.subr.bf16.mxu0 0
    %4769 = vmatpush1.bf16.msra.mxu0 0
    %4770 = vmatprep.subr.bf16.mxu0 0
    %4771 = vmatpush1.bf16.msra.mxu0 0
    %4772 = vmatprep.subr.bf16.mxu0 0
    %4773 = vmatpush1.bf16.msra.mxu0 0
    %4774 = vmatprep.subr.bf16.mxu0 0
    %4775 = vmatpush1.bf16.msra.mxu0 0
    %4776 = vmatprep.subr.bf16.mxu0 0
    %4777 = vmatpush1.bf16.msra.mxu0 0
    %4778 = vmatprep.subr.bf16.mxu0 0
    %4779 = vmatpush1.bf16.msra.mxu0 0
    %4780 = vmatprep.mubr.bf16.mxu0 0
    %4781 = vmatmul.mubr.bf16.gmra.mrb[0].mxu0 %v4473
    %v4782 = vpop.f32.mrb[0].mxu0
    %v4783 = vadd.f32 %v4740, %v4782
    %v4784 = vpop.f32.mrb[0].mxu0
    %v4785 = vadd.f32 %v4742, %v4784
    %v4786 = vpop.f32.mrb[0].mxu0
    %v4787 = vadd.f32 %v4744, %v4786
    %v4788 = vpop.f32.mrb[0].mxu0
    %v4789 = vadd.f32 %v4746, %v4788
    %4790 = vdwg.mxu0
    %4791 = vmatprep.subr.bf16.mxu0 %v3051
    %4792 = vmatpush1.bf16.msra.mxu0 %v3050
    %4793 = vmatprep.subr.bf16.mxu0 %v3070
    %4794 = vmatpush1.bf16.msra.mxu0 %v3069
    %4795 = vmatprep.subr.bf16.mxu0 %v3089
    %4796 = vmatpush1.bf16.msra.mxu0 %v3088
    %4797 = vmatprep.subr.bf16.mxu0 %v3108
    %4798 = vmatpush1.bf16.msra.mxu0 %v3107
    %4799 = vmatprep.subr.bf16.mxu0 %v3127
    %4800 = vmatpush1.bf16.msra.mxu0 %v3126
    %4801 = vmatprep.subr.bf16.mxu0 %v3146
    %4802 = vmatpush1.bf16.msra.mxu0 %v3145
    %4803 = vmatprep.subr.bf16.mxu0 %v3165
    %4804 = vmatpush1.bf16.msra.mxu0 %v3164
    %4805 = vmatprep.subr.bf16.mxu0 %v3184
    %4806 = vmatpush1.bf16.msra.mxu0 %v3183
    %4807 = vmatprep.subr.bf16.mxu0 %v3203
    %4808 = vmatpush1.bf16.msra.mxu0 %v3202
    %4809 = vmatprep.subr.bf16.mxu0 %v3222
    %4810 = vmatpush1.bf16.msra.mxu0 %v3221
    %4811 = vmatprep.subr.bf16.mxu0 %v3241
    %4812 = vmatpush1.bf16.msra.mxu0 %v3240
    %4813 = vmatprep.subr.bf16.mxu0 %v3260
    %4814 = vmatpush1.bf16.msra.mxu0 %v3259
    %4815 = vmatprep.subr.bf16.mxu0 %v3279
    %4816 = vmatpush1.bf16.msra.mxu0 %v3278
    %4817 = vmatprep.subr.bf16.mxu0 %v3298
    %4818 = vmatpush1.bf16.msra.mxu0 %v3297
    %4819 = vmatprep.subr.bf16.mxu0 %v3317
    %4820 = vmatpush1.bf16.msra.mxu0 %v3316
    %4821 = vmatprep.subr.bf16.mxu0 %v3336
    %4822 = vmatpush1.bf16.msra.mxu0 %v3335
    %4823 = vmatprep.mubr.bf16.mxu0 %v863
    %4824 = vmatmul.mubr.bf16.gmra.mrb[0].mxu0 %v862
    %v4825 = vpop.f32.mrb[0].mxu0
    %v4826 = vadd.f32 0.0, %v4825
    %v4827 = vpop.f32.mrb[0].mxu0
    %v4828 = vadd.f32 0.0, %v4827
    %v4829 = vpop.f32.mrb[0].mxu0
    %v4830 = vadd.f32 0.0, %v4829
    %v4831 = vpop.f32.mrb[0].mxu0
    %v4832 = vadd.f32 0.0, %v4831
    %4833 = vdwg.mxu0
    %4834 = vmatprep.subr.bf16.mxu0 %v3355
    %4835 = vmatpush1.bf16.msra.mxu0 %v3354
    %4836 = vmatprep.subr.bf16.mxu0 %v3374
    %4837 = vmatpush1.bf16.msra.mxu0 %v3373
    %4838 = vmatprep.subr.bf16.mxu0 %v3393
    %4839 = vmatpush1.bf16.msra.mxu0 %v3392
    %4840 = vmatprep.subr.bf16.mxu0 %v3412
    %4841 = vmatpush1.bf16.msra.mxu0 %v3411
    %4842 = vmatprep.subr.bf16.mxu0 %v3431
    %4843 = vmatpush1.bf16.msra.mxu0 %v3430
    %4844 = vmatprep.subr.bf16.mxu0 %v3450
    %4845 = vmatpush1.bf16.msra.mxu0 %v3449
    %4846 = vmatprep.subr.bf16.mxu0 %v3469
    %4847 = vmatpush1.bf16.msra.mxu0 %v3468
    %4848 = vmatprep.subr.bf16.mxu0 %v3488
    %4849 = vmatpush1.bf16.msra.mxu0 %v3487
    %4850 = vmatprep.subr.bf16.mxu0 %v3507
    %4851 = vmatpush1.bf16.msra.mxu0 %v3506
    %4852 = vmatprep.subr.bf16.mxu0 %v3526
    %4853 = vmatpush1.bf16.msra.mxu0 %v3525
    %4854 = vmatprep.subr.bf16.mxu0 %v3545
    %4855 = vmatpush1.bf16.msra.mxu0 %v3544
    %4856 = vmatprep.subr.bf16.mxu0 %v3564
    %4857 = vmatpush1.bf16.msra.mxu0 %v3563
    %4858 = vmatprep.subr.bf16.mxu0 %v3583
    %4859 = vmatpush1.bf16.msra.mxu0 %v3582
    %4860 = vmatprep.subr.bf16.mxu0 %v3602
    %4861 = vmatpush1.bf16.msra.mxu0 %v3601
    %4862 = vmatprep.subr.bf16.mxu0 %v3621
    %4863 = vmatpush1.bf16.msra.mxu0 %v3620
    %4864 = vmatprep.subr.bf16.mxu0 %v3640
    %4865 = vmatpush1.bf16.msra.mxu0 %v3639
    %4866 = vmatprep.mubr.bf16.mxu0 %v865
    %4867 = vmatmul.mubr.bf16.gmra.mrb[0].mxu0 %v864
    %v4868 = vpop.f32.mrb[0].mxu0
    %v4869 = vadd.f32 %v4826, %v4868
    %v4870 = vpop.f32.mrb[0].mxu0
    %v4871 = vadd.f32 %v4828, %v4870
    %v4872 = vpop.f32.mrb[0].mxu0
    %v4873 = vadd.f32 %v4830, %v4872
    %v4874 = vpop.f32.mrb[0].mxu0
    %v4875 = vadd.f32 %v4832, %v4874
    %4876 = vdwg.mxu0
    %4877 = vmatprep.subr.bf16.mxu0 %v3659
    %4878 = vmatpush1.bf16.msra.mxu0 %v3658
    %4879 = vmatprep.subr.bf16.mxu0 %v3678
    %4880 = vmatpush1.bf16.msra.mxu0 %v3677
    %4881 = vmatprep.subr.bf16.mxu0 %v3697
    %4882 = vmatpush1.bf16.msra.mxu0 %v3696
    %4883 = vmatprep.subr.bf16.mxu0 %v3716
    %4884 = vmatpush1.bf16.msra.mxu0 %v3715
    %4885 = vmatprep.subr.bf16.mxu0 %v3735
    %4886 = vmatpush1.bf16.msra.mxu0 %v3734
    %4887 = vmatprep.subr.bf16.mxu0 %v4492
    %4888 = vmatpush1.bf16.msra.mxu0 %v4489
    %4889 = vmatprep.subr.bf16.mxu0 0
    %4890 = vmatpush1.bf16.msra.mxu0 0
    %4891 = vmatprep.subr.bf16.mxu0 0
    %4892 = vmatpush1.bf16.msra.mxu0 0
    %4893 = vmatprep.subr.bf16.mxu0 0
    %4894 = vmatpush1.bf16.msra.mxu0 0
    %4895 = vmatprep.subr.bf16.mxu0 0
    %4896 = vmatpush1.bf16.msra.mxu0 0
    %4897 = vmatprep.subr.bf16.mxu0 0
    %4898 = vmatpush1.bf16.msra.mxu0 0
    %4899 = vmatprep.subr.bf16.mxu0 0
    %4900 = vmatpush1.bf16.msra.mxu0 0
    %4901 = vmatprep.subr.bf16.mxu0 0
    %4902 = vmatpush1.bf16.msra.mxu0 0
    %4903 = vmatprep.subr.bf16.mxu0 0
    %4904 = vmatpush1.bf16.msra.mxu0 0
    %4905 = vmatprep.subr.bf16.mxu0 0
    %4906 = vmatpush1.bf16.msra.mxu0 0
    %4907 = vmatprep.subr.bf16.mxu0 0
    %4908 = vmatpush1.bf16.msra.mxu0 0
    %4909 = vmatprep.mubr.bf16.mxu0 0
    %4910 = vmatmul.mubr.bf16.gmra.mrb[0].mxu0 %v4473
    %v4911 = vpop.f32.mrb[0].mxu0
    %v4912 = vadd.f32 %v4869, %v4911
    %v4913 = vpop.f32.mrb[0].mxu0
    %v4914 = vadd.f32 %v4871, %v4913
    %v4915 = vpop.f32.mrb[0].mxu0
    %v4916 = vadd.f32 %v4873, %v4915
    %v4917 = vpop.f32.mrb[0].mxu0
    %v4918 = vadd.f32 %v4875, %v4917
    %4919 = vdwg.mxu0
    %4920 = vmatprep.subr.bf16.mxu0 %v3053
    %4921 = vmatpush1.bf16.msra.mxu0 %v3052
    %4922 = vmatprep.subr.bf16.mxu0 %v3072
    %4923 = vmatpush1.bf16.msra.mxu0 %v3071
    %4924 = vmatprep.subr.bf16.mxu0 %v3091
    %4925 = vmatpush1.bf16.msra.mxu0 %v3090
    %4926 = vmatprep.subr.bf16.mxu0 %v3110
    %4927 = vmatpush1.bf16.msra.mxu0 %v3109
    %4928 = vmatprep.subr.bf16.mxu0 %v3129
    %4929 = vmatpush1.bf16.msra.mxu0 %v3128
    %4930 = vmatprep.subr.bf16.mxu0 %v3148
    %4931 = vmatpush1.bf16.msra.mxu0 %v3147
    %4932 = vmatprep.subr.bf16.mxu0 %v3167
    %4933 = vmatpush1.bf16.msra.mxu0 %v3166
    %4934 = vmatprep.subr.bf16.mxu0 %v3186
    %4935 = vmatpush1.bf16.msra.mxu0 %v3185
    %4936 = vmatprep.subr.bf16.mxu0 %v3205
    %4937 = vmatpush1.bf16.msra.mxu0 %v3204
    %4938 = vmatprep.subr.bf16.mxu0 %v3224
    %4939 = vmatpush1.bf16.msra.mxu0 %v3223
    %4940 = vmatprep.subr.bf16.mxu0 %v3243
    %4941 = vmatpush1.bf16.msra.mxu0 %v3242
    %4942 = vmatprep.subr.bf16.mxu0 %v3262
    %4943 = vmatpush1.bf16.msra.mxu0 %v3261
    %4944 = vmatprep.subr.bf16.mxu0 %v3281
    %4945 = vmatpush1.bf16.msra.mxu0 %v3280
    %4946 = vmatprep.subr.bf16.mxu0 %v3300
    %4947 = vmatpush1.bf16.msra.mxu0 %v3299
    %4948 = vmatprep.subr.bf16.mxu0 %v3319
    %4949 = vmatpush1.bf16.msra.mxu0 %v3318
    %4950 = vmatprep.subr.bf16.mxu0 %v3338
    %4951 = vmatpush1.bf16.msra.mxu0 %v3337
    %4952 = vmatprep.mubr.bf16.mxu0 %v863
    %4953 = vmatmul.mubr.bf16.gmra.mrb[0].mxu0 %v862
    %v4954 = vpop.f32.mrb[0].mxu0
    %v4955 = vadd.f32 0.0, %v4954
    %v4956 = vpop.f32.mrb[0].mxu0
    %v4957 = vadd.f32 0.0, %v4956
    %v4958 = vpop.f32.mrb[0].mxu0
    %v4959 = vadd.f32 0.0, %v4958
    %v4960 = vpop.f32.mrb[0].mxu0
    %v4961 = vadd.f32 0.0, %v4960
    %4962 = vdwg.mxu0
    %4963 = vmatprep.subr.bf16.mxu0 %v3357
    %4964 = vmatpush1.bf16.msra.mxu0 %v3356
    %4965 = vmatprep.subr.bf16.mxu0 %v3376
    %4966 = vmatpush1.bf16.msra.mxu0 %v3375
    %4967 = vmatprep.subr.bf16.mxu0 %v3395
    %4968 = vmatpush1.bf16.msra.mxu0 %v3394
    %4969 = vmatprep.subr.bf16.mxu0 %v3414
    %4970 = vmatpush1.bf16.msra.mxu0 %v3413
    %4971 = vmatprep.subr.bf16.mxu0 %v3433
    %4972 = vmatpush1.bf16.msra.mxu0 %v3432
    %4973 = vmatprep.subr.bf16.mxu0 %v3452
    %4974 = vmatpush1.bf16.msra.mxu0 %v3451
    %4975 = vmatprep.subr.bf16.mxu0 %v3471
    %4976 = vmatpush1.bf16.msra.mxu0 %v3470
    %4977 = vmatprep.subr.bf16.mxu0 %v3490
    %4978 = vmatpush1.bf16.msra.mxu0 %v3489
    %4979 = vmatprep.subr.bf16.mxu0 %v3509
    %4980 = vmatpush1.bf16.msra.mxu0 %v3508
    %4981 = vmatprep.subr.bf16.mxu0 %v3528
    %4982 = vmatpush1.bf16.msra.mxu0 %v3527
    %4983 = vmatprep.subr.bf16.mxu0 %v3547
    %4984 = vmatpush1.bf16.msra.mxu0 %v3546
    %4985 = vmatprep.subr.bf16.mxu0 %v3566
    %4986 = vmatpush1.bf16.msra.mxu0 %v3565
    %4987 = vmatprep.subr.bf16.mxu0 %v3585
    %4988 = vmatpush1.bf16.msra.mxu0 %v3584
    %4989 = vmatprep.subr.bf16.mxu0 %v3604
    %4990 = vmatpush1.bf16.msra.mxu0 %v3603
    %4991 = vmatprep.subr.bf16.mxu0 %v3623
    %4992 = vmatpush1.bf16.msra.mxu0 %v3622
    %4993 = vmatprep.subr.bf16.mxu0 %v3642
    %4994 = vmatpush1.bf16.msra.mxu0 %v3641
    %4995 = vmatprep.mubr.bf16.mxu0 %v865
    %4996 = vmatmul.mubr.bf16.gmra.mrb[0].mxu0 %v864
    %v4997 = vpop.f32.mrb[0].mxu0
    %v4998 = vadd.f32 %v4955, %v4997
    %v4999 = vpop.f32.mrb[0].mxu0
    %v5000 = vadd.f32 %v4957, %v4999
    %v5001 = vpop.f32.mrb[0].mxu0
    %v5002 = vadd.f32 %v4959, %v5001
    %v5003 = vpop.f32.mrb[0].mxu0
    %v5004 = vadd.f32 %v4961, %v5003
    %5005 = vdwg.mxu0
    %5006 = vmatprep.subr.bf16.mxu0 %v3661
    %5007 = vmatpush1.bf16.msra.mxu0 %v3660
    %5008 = vmatprep.subr.bf16.mxu0 %v3680
    %5009 = vmatpush1.bf16.msra.mxu0 %v3679
    %5010 = vmatprep.subr.bf16.mxu0 %v3699
    %5011 = vmatpush1.bf16.msra.mxu0 %v3698
    %5012 = vmatprep.subr.bf16.mxu0 %v3718
    %5013 = vmatpush1.bf16.msra.mxu0 %v3717
    %5014 = vmatprep.subr.bf16.mxu0 %v3737
    %5015 = vmatpush1.bf16.msra.mxu0 %v3736
    %5016 = vmatprep.subr.bf16.mxu0 %v4498
    %5017 = vmatpush1.bf16.msra.mxu0 %v4495
    %5018 = vmatprep.subr.bf16.mxu0 0
    %5019 = vmatpush1.bf16.msra.mxu0 0
    %5020 = vmatprep.subr.bf16.mxu0 0
    %5021 = vmatpush1.bf16.msra.mxu0 0
    %5022 = vmatprep.subr.bf16.mxu0 0
    %5023 = vmatpush1.bf16.msra.mxu0 0
    %5024 = vmatprep.subr.bf16.mxu0 0
    %5025 = vmatpush1.bf16.msra.mxu0 0
    %5026 = vmatprep.subr.bf16.mxu0 0
    %5027 = vmatpush1.bf16.msra.mxu0 0
    %5028 = vmatprep.subr.bf16.mxu0 0
    %5029 = vmatpush1.bf16.msra.mxu0 0
    %5030 = vmatprep.subr.bf16.mxu0 0
    %5031 = vmatpush1.bf16.msra.mxu0 0
    %5032 = vmatprep.subr.bf16.mxu0 0
    %5033 = vmatpush1.bf16.msra.mxu0 0
    %5034 = vmatprep.subr.bf16.mxu0 0
    %5035 = vmatpush1.bf16.msra.mxu0 0
    %5036 = vmatprep.subr.bf16.mxu0 0
    %5037 = vmatpush1.bf16.msra.mxu0 0
    %5038 = vmatprep.mubr.bf16.mxu0 0
    %5039 = vmatmul.mubr.bf16.gmra.mrb[0].mxu0 %v4473
    %v5040 = vpop.f32.mrb[0].mxu0
    %v5041 = vadd.f32 %v4998, %v5040
    %v5042 = vpop.f32.mrb[0].mxu0
    %v5043 = vadd.f32 %v5000, %v5042
    %v5044 = vpop.f32.mrb[0].mxu0
    %v5045 = vadd.f32 %v5002, %v5044
    %v5046 = vpop.f32.mrb[0].mxu0
    %v5047 = vadd.f32 %v5004, %v5046
    %5048 = vdwg.mxu0
    %5049 = vmatprep.subr.bf16.mxu0 %v3055
    %5050 = vmatpush1.bf16.msra.mxu0 %v3054
    %5051 = vmatprep.subr.bf16.mxu0 %v3074
    %5052 = vmatpush1.bf16.msra.mxu0 %v3073
    %5053 = vmatprep.subr.bf16.mxu0 %v3093
    %5054 = vmatpush1.bf16.msra.mxu0 %v3092
    %5055 = vmatprep.subr.bf16.mxu0 %v3112
    %5056 = vmatpush1.bf16.msra.mxu0 %v3111
    %5057 = vmatprep.subr.bf16.mxu0 %v3131
    %5058 = vmatpush1.bf16.msra.mxu0 %v3130
    %5059 = vmatprep.subr.bf16.mxu0 %v3150
    %5060 = vmatpush1.bf16.msra.mxu0 %v3149
    %5061 = vmatprep.subr.bf16.mxu0 %v3169
    %5062 = vmatpush1.bf16.msra.mxu0 %v3168
    %5063 = vmatprep.subr.bf16.mxu0 %v3188
    %5064 = vmatpush1.bf16.msra.mxu0 %v3187
    %5065 = vmatprep.subr.bf16.mxu0 %v3207
    %5066 = vmatpush1.bf16.msra.mxu0 %v3206
    %5067 = vmatprep.subr.bf16.mxu0 %v3226
    %5068 = vmatpush1.bf16.msra.mxu0 %v3225
    %5069 = vmatprep.subr.bf16.mxu0 %v3245
    %5070 = vmatpush1.bf16.msra.mxu0 %v3244
    %5071 = vmatprep.subr.bf16.mxu0 %v3264
    %5072 = vmatpush1.bf16.msra.mxu0 %v3263
    %5073 = vmatprep.subr.bf16.mxu0 %v3283
    %5074 = vmatpush1.bf16.msra.mxu0 %v3282
    %5075 = vmatprep.subr.bf16.mxu0 %v3302
    %5076 = vmatpush1.bf16.msra.mxu0 %v3301
    %5077 = vmatprep.subr.bf16.mxu0 %v3321
    %5078 = vmatpush1.bf16.msra.mxu0 %v3320
    %5079 = vmatprep.subr.bf16.mxu0 %v3340
    %5080 = vmatpush1.bf16.msra.mxu0 %v3339
    %5081 = vmatprep.mubr.bf16.mxu0 %v863
    %5082 = vmatmul.mubr.bf16.gmra.mrb[0].mxu0 %v862
    %v5083 = vpop.f32.mrb[0].mxu0
    %v5084 = vadd.f32 0.0, %v5083
    %v5085 = vpop.f32.mrb[0].mxu0
    %v5086 = vadd.f32 0.0, %v5085
    %v5087 = vpop.f32.mrb[0].mxu0
    %v5088 = vadd.f32 0.0, %v5087
    %v5089 = vpop.f32.mrb[0].mxu0
    %v5090 = vadd.f32 0.0, %v5089
    %5091 = vdwg.mxu0
    %5092 = vmatprep.subr.bf16.mxu0 %v3359
    %5093 = vmatpush1.bf16.msra.mxu0 %v3358
    %5094 = vmatprep.subr.bf16.mxu0 %v3378
    %5095 = vmatpush1.bf16.msra.mxu0 %v3377
    %5096 = vmatprep.subr.bf16.mxu0 %v3397
    %5097 = vmatpush1.bf16.msra.mxu0 %v3396
    %5098 = vmatprep.subr.bf16.mxu0 %v3416
    %5099 = vmatpush1.bf16.msra.mxu0 %v3415
    %5100 = vmatprep.subr.bf16.mxu0 %v3435
    %5101 = vmatpush1.bf16.msra.mxu0 %v3434
    %5102 = vmatprep.subr.bf16.mxu0 %v3454
    %5103 = vmatpush1.bf16.msra.mxu0 %v3453
    %5104 = vmatprep.subr.bf16.mxu0 %v3473
    %5105 = vmatpush1.bf16.msra.mxu0 %v3472
    %5106 = vmatprep.subr.bf16.mxu0 %v3492
    %5107 = vmatpush1.bf16.msra.mxu0 %v3491
    %5108 = vmatprep.subr.bf16.mxu0 %v3511
    %5109 = vmatpush1.bf16.msra.mxu0 %v3510
    %5110 = vmatprep.subr.bf16.mxu0 %v3530
    %5111 = vmatpush1.bf16.msra.mxu0 %v3529
    %5112 = vmatprep.subr.bf16.mxu0 %v3549
    %5113 = vmatpush1.bf16.msra.mxu0 %v3548
    %5114 = vmatprep.subr.bf16.mxu0 %v3568
    %5115 = vmatpush1.bf16.msra.mxu0 %v3567
    %5116 = vmatprep.subr.bf16.mxu0 %v3587
    %5117 = vmatpush1.bf16.msra.mxu0 %v3586
    %5118 = vmatprep.subr.bf16.mxu0 %v3606
    %5119 = vmatpush1.bf16.msra.mxu0 %v3605
    %5120 = vmatprep.subr.bf16.mxu0 %v3625
    %5121 = vmatpush1.bf16.msra.mxu0 %v3624
    %5122 = vmatprep.subr.bf16.mxu0 %v3644
    %5123 = vmatpush1.bf16.msra.mxu0 %v3643
    %5124 = vmatprep.mubr.bf16.mxu0 %v865
    %5125 = vmatmul.mubr.bf16.gmra.mrb[0].mxu0 %v864
    %v5126 = vpop.f32.mrb[0].mxu0
    %v5127 = vadd.f32 %v5084, %v5126
    %v5128 = vpop.f32.mrb[0].mxu0
    %v5129 = vadd.f32 %v5086, %v5128
    %v5130 = vpop.f32.mrb[0].mxu0
    %v5131 = vadd.f32 %v5088, %v5130
    %v5132 = vpop.f32.mrb[0].mxu0
    %v5133 = vadd.f32 %v5090, %v5132
    %5134 = vdwg.mxu0
    %5135 = vmatprep.subr.bf16.mxu0 %v3663
    %5136 = vmatpush1.bf16.msra.mxu0 %v3662
    %5137 = vmatprep.subr.bf16.mxu0 %v3682
    %5138 = vmatpush1.bf16.msra.mxu0 %v3681
    %5139 = vmatprep.subr.bf16.mxu0 %v3701
    %5140 = vmatpush1.bf16.msra.mxu0 %v3700
    %5141 = vmatprep.subr.bf16.mxu0 %v3720
    %5142 = vmatpush1.bf16.msra.mxu0 %v3719
    %5143 = vmatprep.subr.bf16.mxu0 %v3739
    %5144 = vmatpush1.bf16.msra.mxu0 %v3738
    %5145 = vmatprep.subr.bf16.mxu0 %v4504
    %5146 = vmatpush1.bf16.msra.mxu0 %v4501
    %5147 = vmatprep.subr.bf16.mxu0 0
    %5148 = vmatpush1.bf16.msra.mxu0 0
    %5149 = vmatprep.subr.bf16.mxu0 0
    %5150 = vmatpush1.bf16.msra.mxu0 0
    %5151 = vmatprep.subr.bf16.mxu0 0
    %5152 = vmatpush1.bf16.msra.mxu0 0
    %5153 = vmatprep.subr.bf16.mxu0 0
    %5154 = vmatpush1.bf16.msra.mxu0 0
    %5155 = vmatprep.subr.bf16.mxu0 0
    %5156 = vmatpush1.bf16.msra.mxu0 0
    %5157 = vmatprep.subr.bf16.mxu0 0
    %5158 = vmatpush1.bf16.msra.mxu0 0
    %5159 = vmatprep.subr.bf16.mxu0 0
    %5160 = vmatpush1.bf16.msra.mxu0 0
    %5161 = vmatprep.subr.bf16.mxu0 0
    %5162 = vmatpush1.bf16.msra.mxu0 0
    %5163 = vmatprep.subr.bf16.mxu0 0
    %5164 = vmatpush1.bf16.msra.mxu0 0
    %5165 = vmatprep.subr.bf16.mxu0 0
    %5166 = vmatpush1.bf16.msra.mxu0 0
    %5167 = vmatprep.mubr.bf16.mxu0 0
    %5168 = vmatmul.mubr.bf16.gmra.mrb[0].mxu0 %v4473
    %v5169 = vpop.f32.mrb[0].mxu0
    %v5170 = vadd.f32 %v5127, %v5169
    %v5171 = vpop.f32.mrb[0].mxu0
    %v5172 = vadd.f32 %v5129, %v5171
    %v5173 = vpop.f32.mrb[0].mxu0
    %v5174 = vadd.f32 %v5131, %v5173
    %v5175 = vpop.f32.mrb[0].mxu0
    %v5176 = vadd.f32 %v5133, %v5175
    %5177 = vdwg.mxu0
    %5178 = vmatprep.subr.bf16.mxu0 %v3057
    %5179 = vmatpush1.bf16.msra.mxu0 %v3056
    %5180 = vmatprep.subr.bf16.mxu0 %v3076
    %5181 = vmatpush1.bf16.msra.mxu0 %v3075
    %5182 = vmatprep.subr.bf16.mxu0 %v3095
    %5183 = vmatpush1.bf16.msra.mxu0 %v3094
    %5184 = vmatprep.subr.bf16.mxu0 %v3114
    %5185 = vmatpush1.bf16.msra.mxu0 %v3113
    %5186 = vmatprep.subr.bf16.mxu0 %v3133
    %5187 = vmatpush1.bf16.msra.mxu0 %v3132
    %5188 = vmatprep.subr.bf16.mxu0 %v3152
    %5189 = vmatpush1.bf16.msra.mxu0 %v3151
    %5190 = vmatprep.subr.bf16.mxu0 %v3171
    %5191 = vmatpush1.bf16.msra.mxu0 %v3170
    %5192 = vmatprep.subr.bf16.mxu0 %v3190
    %5193 = vmatpush1.bf16.msra.mxu0 %v3189
    %5194 = vmatprep.subr.bf16.mxu0 %v3209
    %5195 = vmatpush1.bf16.msra.mxu0 %v3208
    %5196 = vmatprep.subr.bf16.mxu0 %v3228
    %5197 = vmatpush1.bf16.msra.mxu0 %v3227
    %5198 = vmatprep.subr.bf16.mxu0 %v3247
    %5199 = vmatpush1.bf16.msra.mxu0 %v3246
    %5200 = vmatprep.subr.bf16.mxu0 %v3266
    %5201 = vmatpush1.bf16.msra.mxu0 %v3265
    %5202 = vmatprep.subr.bf16.mxu0 %v3285
    %5203 = vmatpush1.bf16.msra.mxu0 %v3284
    %5204 = vmatprep.subr.bf16.mxu0 %v3304
    %5205 = vmatpush1.bf16.msra.mxu0 %v3303
    %5206 = vmatprep.subr.bf16.mxu0 %v3323
    %5207 = vmatpush1.bf16.msra.mxu0 %v3322
    %5208 = vmatprep.subr.bf16.mxu0 %v3342
    %5209 = vmatpush1.bf16.msra.mxu0 %v3341
    %5210 = vmatprep.mubr.bf16.mxu0 %v863
    %5211 = vmatmul.mubr.bf16.gmra.mrb[0].mxu0 %v862
    %v5212 = vpop.f32.mrb[0].mxu0
    %v5213 = vadd.f32 0.0, %v5212
    %v5214 = vpop.f32.mrb[0].mxu0
    %v5215 = vadd.f32 0.0, %v5214
    %v5216 = vpop.f32.mrb[0].mxu0
    %v5217 = vadd.f32 0.0, %v5216
    %v5218 = vpop.f32.mrb[0].mxu0
    %v5219 = vadd.f32 0.0, %v5218
    %5220 = vdwg.mxu0
    %5221 = vmatprep.subr.bf16.mxu0 %v3361
    %5222 = vmatpush1.bf16.msra.mxu0 %v3360
    %5223 = vmatprep.subr.bf16.mxu0 %v3380
    %5224 = vmatpush1.bf16.msra.mxu0 %v3379
    %5225 = vmatprep.subr.bf16.mxu0 %v3399
    %5226 = vmatpush1.bf16.msra.mxu0 %v3398
    %5227 = vmatprep.subr.bf16.mxu0 %v3418
    %5228 = vmatpush1.bf16.msra.mxu0 %v3417
    %5229 = vmatprep.subr.bf16.mxu0 %v3437
    %5230 = vmatpush1.bf16.msra.mxu0 %v3436
    %5231 = vmatprep.subr.bf16.mxu0 %v3456
    %5232 = vmatpush1.bf16.msra.mxu0 %v3455
    %5233 = vmatprep.subr.bf16.mxu0 %v3475
    %5234 = vmatpush1.bf16.msra.mxu0 %v3474
    %5235 = vmatprep.subr.bf16.mxu0 %v3494
    %5236 = vmatpush1.bf16.msra.mxu0 %v3493
    %5237 = vmatprep.subr.bf16.mxu0 %v3513
    %5238 = vmatpush1.bf16.msra.mxu0 %v3512
    %5239 = vmatprep.subr.bf16.mxu0 %v3532
    %5240 = vmatpush1.bf16.msra.mxu0 %v3531
    %5241 = vmatprep.subr.bf16.mxu0 %v3551
    %5242 = vmatpush1.bf16.msra.mxu0 %v3550
    %5243 = vmatprep.subr.bf16.mxu0 %v3570
    %5244 = vmatpush1.bf16.msra.mxu0 %v3569
    %5245 = vmatprep.subr.bf16.mxu0 %v3589
    %5246 = vmatpush1.bf16.msra.mxu0 %v3588
    %5247 = vmatprep.subr.bf16.mxu0 %v3608
    %5248 = vmatpush1.bf16.msra.mxu0 %v3607
    %5249 = vmatprep.subr.bf16.mxu0 %v3627
    %5250 = vmatpush1.bf16.msra.mxu0 %v3626
    %5251 = vmatprep.subr.bf16.mxu0 %v3646
    %5252 = vmatpush1.bf16.msra.mxu0 %v3645
    %5253 = vmatprep.mubr.bf16.mxu0 %v865
    %5254 = vmatmul.mubr.bf16.gmra.mrb[0].mxu0 %v864
    %v5255 = vpop.f32.mrb[0].mxu0
    %v5256 = vadd.f32 %v5213, %v5255
    %v5257 = vpop.f32.mrb[0].mxu0
    %v5258 = vadd.f32 %v5215, %v5257
    %v5259 = vpop.f32.mrb[0].mxu0
    %v5260 = vadd.f32 %v5217, %v5259
    %v5261 = vpop.f32.mrb[0].mxu0
    %v5262 = vadd.f32 %v5219, %v5261
    %5263 = vdwg.mxu0
    %5264 = vmatprep.subr.bf16.mxu0 %v3665
    %5265 = vmatpush1.bf16.msra.mxu0 %v3664
    %5266 = vmatprep.subr.bf16.mxu0 %v3684
    %5267 = vmatpush1.bf16.msra.mxu0 %v3683
    %5268 = vmatprep.subr.bf16.mxu0 %v3703
    %5269 = vmatpush1.bf16.msra.mxu0 %v3702
    %5270 = vmatprep.subr.bf16.mxu0 %v3722
    %5271 = vmatpush1.bf16.msra.mxu0 %v3721
    %5272 = vmatprep.subr.bf16.mxu0 %v3741
    %5273 = vmatpush1.bf16.msra.mxu0 %v3740
    %5274 = vmatprep.subr.bf16.mxu0 %v4510
    %5275 = vmatpush1.bf16.msra.mxu0 %v4507
    %5276 = vmatprep.subr.bf16.mxu0 0
    %5277 = vmatpush1.bf16.msra.mxu0 0
    %5278 = vmatprep.subr.bf16.mxu0 0
    %5279 = vmatpush1.bf16.msra.mxu0 0
    %5280 = vmatprep.subr.bf16.mxu0 0
    %5281 = vmatpush1.bf16.msra.mxu0 0
    %5282 = vmatprep.subr.bf16.mxu0 0
    %5283 = vmatpush1.bf16.msra.mxu0 0
    %5284 = vmatprep.subr.bf16.mxu0 0
    %5285 = vmatpush1.bf16.msra.mxu0 0
    %5286 = vmatprep.subr.bf16.mxu0 0
    %5287 = vmatpush1.bf16.msra.mxu0 0
    %5288 = vmatprep.subr.bf16.mxu0 0
    %5289 = vmatpush1.bf16.msra.mxu0 0
    %5290 = vmatprep.subr.bf16.mxu0 0
    %5291 = vmatpush1.bf16.msra.mxu0 0
    %5292 = vmatprep.subr.bf16.mxu0 0
    %5293 = vmatpush1.bf16.msra.mxu0 0
    %5294 = vmatprep.subr.bf16.mxu0 0
    %5295 = vmatpush1.bf16.msra.mxu0 0
    %5296 = vmatprep.mubr.bf16.mxu0 0
    %5297 = vmatmul.mubr.bf16.gmra.mrb[0].mxu0 %v4473
    %v5298 = vpop.f32.mrb[0].mxu0
    %v5299 = vadd.f32 %v5256, %v5298
    %v5300 = vpop.f32.mrb[0].mxu0
    %v5301 = vadd.f32 %v5258, %v5300
    %v5302 = vpop.f32.mrb[0].mxu0
    %v5303 = vadd.f32 %v5260, %v5302
    %v5304 = vpop.f32.mrb[0].mxu0
    %v5305 = vadd.f32 %v5262, %v5304
    %5306 = vdwg.mxu0
    %5307 = vmatprep.subr.bf16.mxu0 %v3059
    %5308 = vmatpush1.bf16.msra.mxu0 %v3058
    %5309 = vmatprep.subr.bf16.mxu0 %v3078
    %5310 = vmatpush1.bf16.msra.mxu0 %v3077
    %5311 = vmatprep.subr.bf16.mxu0 %v3097
    %5312 = vmatpush1.bf16.msra.mxu0 %v3096
    %5313 = vmatprep.subr.bf16.mxu0 %v3116
    %5314 = vmatpush1.bf16.msra.mxu0 %v3115
    %5315 = vmatprep.subr.bf16.mxu0 %v3135
    %5316 = vmatpush1.bf16.msra.mxu0 %v3134
    %5317 = vmatprep.subr.bf16.mxu0 %v3154
    %5318 = vmatpush1.bf16.msra.mxu0 %v3153
    %5319 = vmatprep.subr.bf16.mxu0 %v3173
    %5320 = vmatpush1.bf16.msra.mxu0 %v3172
    %5321 = vmatprep.subr.bf16.mxu0 %v3192
    %5322 = vmatpush1.bf16.msra.mxu0 %v3191
    %5323 = vmatprep.subr.bf16.mxu0 %v3211
    %5324 = vmatpush1.bf16.msra.mxu0 %v3210
    %5325 = vmatprep.subr.bf16.mxu0 %v3230
    %5326 = vmatpush1.bf16.msra.mxu0 %v3229
    %5327 = vmatprep.subr.bf16.mxu0 %v3249
    %5328 = vmatpush1.bf16.msra.mxu0 %v3248
    %5329 = vmatprep.subr.bf16.mxu0 %v3268
    %5330 = vmatpush1.bf16.msra.mxu0 %v3267
    %5331 = vmatprep.subr.bf16.mxu0 %v3287
    %5332 = vmatpush1.bf16.msra.mxu0 %v3286
    %5333 = vmatprep.subr.bf16.mxu0 %v3306
    %5334 = vmatpush1.bf16.msra.mxu0 %v3305
    %5335 = vmatprep.subr.bf16.mxu0 %v3325
    %5336 = vmatpush1.bf16.msra.mxu0 %v3324
    %5337 = vmatprep.subr.bf16.mxu0 %v3344
    %5338 = vmatpush1.bf16.msra.mxu0 %v3343
    %5339 = vmatprep.mubr.bf16.mxu0 %v863
    %5340 = vmatmul.mubr.bf16.gmra.mrb[0].mxu0 %v862
    %v5341 = vpop.f32.mrb[0].mxu0
    %v5342 = vadd.f32 0.0, %v5341
    %v5343 = vpop.f32.mrb[0].mxu0
    %v5344 = vadd.f32 0.0, %v5343
    %v5345 = vpop.f32.mrb[0].mxu0
    %v5346 = vadd.f32 0.0, %v5345
    %v5347 = vpop.f32.mrb[0].mxu0
    %v5348 = vadd.f32 0.0, %v5347
    %5349 = vdwg.mxu0
    %5350 = vmatprep.subr.bf16.mxu0 %v3363
    %5351 = vmatpush1.bf16.msra.mxu0 %v3362
    %5352 = vmatprep.subr.bf16.mxu0 %v3382
    %5353 = vmatpush1.bf16.msra.mxu0 %v3381
    %5354 = vmatprep.subr.bf16.mxu0 %v3401
    %5355 = vmatpush1.bf16.msra.mxu0 %v3400
    %5356 = vmatprep.subr.bf16.mxu0 %v3420
    %5357 = vmatpush1.bf16.msra.mxu0 %v3419
    %5358 = vmatprep.subr.bf16.mxu0 %v3439
    %5359 = vmatpush1.bf16.msra.mxu0 %v3438
    %5360 = vmatprep.subr.bf16.mxu0 %v3458
    %5361 = vmatpush1.bf16.msra.mxu0 %v3457
    %5362 = vmatprep.subr.bf16.mxu0 %v3477
    %5363 = vmatpush1.bf16.msra.mxu0 %v3476
    %5364 = vmatprep.subr.bf16.mxu0 %v3496
    %5365 = vmatpush1.bf16.msra.mxu0 %v3495
    %5366 = vmatprep.subr.bf16.mxu0 %v3515
    %5367 = vmatpush1.bf16.msra.mxu0 %v3514
    %5368 = vmatprep.subr.bf16.mxu0 %v3534
    %5369 = vmatpush1.bf16.msra.mxu0 %v3533
    %5370 = vmatprep.subr.bf16.mxu0 %v3553
    %5371 = vmatpush1.bf16.msra.mxu0 %v3552
    %5372 = vmatprep.subr.bf16.mxu0 %v3572
    %5373 = vmatpush1.bf16.msra.mxu0 %v3571
    %5374 = vmatprep.subr.bf16.mxu0 %v3591
    %5375 = vmatpush1.bf16.msra.mxu0 %v3590
    %5376 = vmatprep.subr.bf16.mxu0 %v3610
    %5377 = vmatpush1.bf16.msra.mxu0 %v3609
    %5378 = vmatprep.subr.bf16.mxu0 %v3629
    %5379 = vmatpush1.bf16.msra.mxu0 %v3628
    %5380 = vmatprep.subr.bf16.mxu0 %v3648
    %5381 = vmatpush1.bf16.msra.mxu0 %v3647
    %5382 = vmatprep.mubr.bf16.mxu0 %v865
    %5383 = vmatmul.mubr.bf16.gmra.mrb[0].mxu0 %v864
    %v5384 = vpop.f32.mrb[0].mxu0
    %v5385 = vadd.f32 %v5342, %v5384
    %v5386 = vpop.f32.mrb[0].mxu0
    %v5387 = vadd.f32 %v5344, %v5386
    %v5388 = vpop.f32.mrb[0].mxu0
    %v5389 = vadd.f32 %v5346, %v5388
    %v5390 = vpop.f32.mrb[0].mxu0
    %v5391 = vadd.f32 %v5348, %v5390
    %5392 = vdwg.mxu0
    %5393 = vmatprep.subr.bf16.mxu0 %v3667
    %5394 = vmatpush1.bf16.msra.mxu0 %v3666
    %5395 = vmatprep.subr.bf16.mxu0 %v3686
    %5396 = vmatpush1.bf16.msra.mxu0 %v3685
    %5397 = vmatprep.subr.bf16.mxu0 %v3705
    %5398 = vmatpush1.bf16.msra.mxu0 %v3704
    %5399 = vmatprep.subr.bf16.mxu0 %v3724
    %5400 = vmatpush1.bf16.msra.mxu0 %v3723
    %5401 = vmatprep.subr.bf16.mxu0 %v3743
    %5402 = vmatpush1.bf16.msra.mxu0 %v3742
    %5403 = vmatprep.subr.bf16.mxu0 %v4516
    %5404 = vmatpush1.bf16.msra.mxu0 %v4513
    %5405 = vmatprep.subr.bf16.mxu0 0
    %5406 = vmatpush1.bf16.msra.mxu0 0
    %5407 = vmatprep.subr.bf16.mxu0 0
    %5408 = vmatpush1.bf16.msra.mxu0 0
    %5409 = vmatprep.subr.bf16.mxu0 0
    %5410 = vmatpush1.bf16.msra.mxu0 0
    %5411 = vmatprep.subr.bf16.mxu0 0
    %5412 = vmatpush1.bf16.msra.mxu0 0
    %5413 = vmatprep.subr.bf16.mxu0 0
    %5414 = vmatpush1.bf16.msra.mxu0 0
    %5415 = vmatprep.subr.bf16.mxu0 0
    %5416 = vmatpush1.bf16.msra.mxu0 0
    %5417 = vmatprep.subr.bf16.mxu0 0
    %5418 = vmatpush1.bf16.msra.mxu0 0
    %5419 = vmatprep.subr.bf16.mxu0 0
    %5420 = vmatpush1.bf16.msra.mxu0 0
    %5421 = vmatprep.subr.bf16.mxu0 0
    %5422 = vmatpush1.bf16.msra.mxu0 0
    %5423 = vmatprep.subr.bf16.mxu0 0
    %5424 = vmatpush1.bf16.msra.mxu0 0
    %5425 = vmatprep.mubr.bf16.mxu0 0
    %5426 = vmatmul.mubr.bf16.gmra.mrb[0].mxu0 %v4473
    %v5427 = vpop.f32.mrb[0].mxu0
    %v5428 = vadd.f32 %v5385, %v5427
    %v5429 = vpop.f32.mrb[0].mxu0
    %v5430 = vadd.f32 %v5387, %v5429
    %v5431 = vpop.f32.mrb[0].mxu0
    %v5432 = vadd.f32 %v5389, %v5431
    %v5433 = vpop.f32.mrb[0].mxu0
    %v5434 = vadd.f32 %v5391, %v5433
    %5435 = vdwg.mxu0
    %5436 = vmatprep.subr.bf16.mxu0 %v3061
    %5437 = vmatpush1.bf16.msra.mxu0 %v3060
    %5438 = vmatprep.subr.bf16.mxu0 %v3080
    %5439 = vmatpush1.bf16.msra.mxu0 %v3079
    %5440 = vmatprep.subr.bf16.mxu0 %v3099
    %5441 = vmatpush1.bf16.msra.mxu0 %v3098
    %5442 = vmatprep.subr.bf16.mxu0 %v3118
    %5443 = vmatpush1.bf16.msra.mxu0 %v3117
    %5444 = vmatprep.subr.bf16.mxu0 %v3137
    %5445 = vmatpush1.bf16.msra.mxu0 %v3136
    %5446 = vmatprep.subr.bf16.mxu0 %v3156
    %5447 = vmatpush1.bf16.msra.mxu0 %v3155
    %5448 = vmatprep.subr.bf16.mxu0 %v3175
    %5449 = vmatpush1.bf16.msra.mxu0 %v3174
    %5450 = vmatprep.subr.bf16.mxu0 %v3194
    %5451 = vmatpush1.bf16.msra.mxu0 %v3193
    %5452 = vmatprep.subr.bf16.mxu0 %v3213
    %5453 = vmatpush1.bf16.msra.mxu0 %v3212
    %5454 = vmatprep.subr.bf16.mxu0 %v3232
    %5455 = vmatpush1.bf16.msra.mxu0 %v3231
    %5456 = vmatprep.subr.bf16.mxu0 %v3251
    %5457 = vmatpush1.bf16.msra.mxu0 %v3250
    %5458 = vmatprep.subr.bf16.mxu0 %v3270
    %5459 = vmatpush1.bf16.msra.mxu0 %v3269
    %5460 = vmatprep.subr.bf16.mxu0 %v3289
    %5461 = vmatpush1.bf16.msra.mxu0 %v3288
    %5462 = vmatprep.subr.bf16.mxu0 %v3308
    %5463 = vmatpush1.bf16.msra.mxu0 %v3307
    %5464 = vmatprep.subr.bf16.mxu0 %v3327
    %5465 = vmatpush1.bf16.msra.mxu0 %v3326
    %5466 = vmatprep.subr.bf16.mxu0 %v3346
    %5467 = vmatpush1.bf16.msra.mxu0 %v3345
    %5468 = vmatprep.mubr.bf16.mxu0 %v863
    %5469 = vmatmul.mubr.bf16.gmra.mrb[0].mxu0 %v862
    %v5470 = vpop.f32.mrb[0].mxu0
    %v5471 = vadd.f32 0.0, %v5470
    %v5472 = vpop.f32.mrb[0].mxu0
    %v5473 = vadd.f32 0.0, %v5472
    %v5474 = vpop.f32.mrb[0].mxu0
    %v5475 = vadd.f32 0.0, %v5474
    %v5476 = vpop.f32.mrb[0].mxu0
    %v5477 = vadd.f32 0.0, %v5476
    %5478 = vdwg.mxu0
    %5479 = vmatprep.subr.bf16.mxu0 %v3365
    %5480 = vmatpush1.bf16.msra.mxu0 %v3364
    %5481 = vmatprep.subr.bf16.mxu0 %v3384
    %5482 = vmatpush1.bf16.msra.mxu0 %v3383
    %5483 = vmatprep.subr.bf16.mxu0 %v3403
    %5484 = vmatpush1.bf16.msra.mxu0 %v3402
    %5485 = vmatprep.subr.bf16.mxu0 %v3422
    %5486 = vmatpush1.bf16.msra.mxu0 %v3421
    %5487 = vmatprep.subr.bf16.mxu0 %v3441
    %5488 = vmatpush1.bf16.msra.mxu0 %v3440
    %5489 = vmatprep.subr.bf16.mxu0 %v3460
    %5490 = vmatpush1.bf16.msra.mxu0 %v3459
    %5491 = vmatprep.subr.bf16.mxu0 %v3479
    %5492 = vmatpush1.bf16.msra.mxu0 %v3478
    %5493 = vmatprep.subr.bf16.mxu0 %v3498
    %5494 = vmatpush1.bf16.msra.mxu0 %v3497
    %5495 = vmatprep.subr.bf16.mxu0 %v3517
    %5496 = vmatpush1.bf16.msra.mxu0 %v3516
    %5497 = vmatprep.subr.bf16.mxu0 %v3536
    %5498 = vmatpush1.bf16.msra.mxu0 %v3535
    %5499 = vmatprep.subr.bf16.mxu0 %v3555
    %5500 = vmatpush1.bf16.msra.mxu0 %v3554
    %5501 = vmatprep.subr.bf16.mxu0 %v3574
    %5502 = vmatpush1.bf16.msra.mxu0 %v3573
    %5503 = vmatprep.subr.bf16.mxu0 %v3593
    %5504 = vmatpush1.bf16.msra.mxu0 %v3592
    %5505 = vmatprep.subr.bf16.mxu0 %v3612
    %5506 = vmatpush1.bf16.msra.mxu0 %v3611
    %5507 = vmatprep.subr.bf16.mxu0 %v3631
    %5508 = vmatpush1.bf16.msra.mxu0 %v3630
    %5509 = vmatprep.subr.bf16.mxu0 %v3650
    %5510 = vmatpush1.bf16.msra.mxu0 %v3649
    %5511 = vmatprep.mubr.bf16.mxu0 %v865
    %5512 = vmatmul.mubr.bf16.gmra.mrb[0].mxu0 %v864
    %v5513 = vpop.f32.mrb[0].mxu0
    %v5514 = vadd.f32 %v5471, %v5513
    %v5515 = vpop.f32.mrb[0].mxu0
    %v5516 = vadd.f32 %v5473, %v5515
    %v5517 = vpop.f32.mrb[0].mxu0
    %v5518 = vadd.f32 %v5475, %v5517
    %v5519 = vpop.f32.mrb[0].mxu0
    %v5520 = vadd.f32 %v5477, %v5519
    %5521 = vdwg.mxu0
    %5522 = vmatprep.subr.bf16.mxu0 %v3669
    %5523 = vmatpush1.bf16.msra.mxu0 %v3668
    %5524 = vmatprep.subr.bf16.mxu0 %v3688
    %5525 = vmatpush1.bf16.msra.mxu0 %v3687
    %5526 = vmatprep.subr.bf16.mxu0 %v3707
    %5527 = vmatpush1.bf16.msra.mxu0 %v3706
    %5528 = vmatprep.subr.bf16.mxu0 %v3726
    %5529 = vmatpush1.bf16.msra.mxu0 %v3725
    %5530 = vmatprep.subr.bf16.mxu0 %v3745
    %5531 = vmatpush1.bf16.msra.mxu0 %v3744
    %5532 = vmatprep.subr.bf16.mxu0 %v4522
    %5533 = vmatpush1.bf16.msra.mxu0 %v4519
    %5534 = vmatprep.subr.bf16.mxu0 0
    %5535 = vmatpush1.bf16.msra.mxu0 0
    %5536 = vmatprep.subr.bf16.mxu0 0
    %5537 = vmatpush1.bf16.msra.mxu0 0
    %5538 = vmatprep.subr.bf16.mxu0 0
    %5539 = vmatpush1.bf16.msra.mxu0 0
    %5540 = vmatprep.subr.bf16.mxu0 0
    %5541 = vmatpush1.bf16.msra.mxu0 0
    %5542 = vmatprep.subr.bf16.mxu0 0
    %5543 = vmatpush1.bf16.msra.mxu0 0
    %5544 = vmatprep.subr.bf16.mxu0 0
    %5545 = vmatpush1.bf16.msra.mxu0 0
    %5546 = vmatprep.subr.bf16.mxu0 0
    %5547 = vmatpush1.bf16.msra.mxu0 0
    %5548 = vmatprep.subr.bf16.mxu0 0
    %5549 = vmatpush1.bf16.msra.mxu0 0
    %5550 = vmatprep.subr.bf16.mxu0 0
    %5551 = vmatpush1.bf16.msra.mxu0 0
    %5552 = vmatprep.subr.bf16.mxu0 0
    %5553 = vmatpush1.bf16.msra.mxu0 0
    %5554 = vmatprep.mubr.bf16.mxu0 0
    %5555 = vmatmul.mubr.bf16.gmra.mrb[0].mxu0 %v4473
    %v5556 = vpop.f32.mrb[0].mxu0
    %v5557 = vadd.f32 %v5514, %v5556
    %v5558 = vpop.f32.mrb[0].mxu0
    %v5559 = vadd.f32 %v5516, %v5558
    %v5560 = vpop.f32.mrb[0].mxu0
    %v5561 = vadd.f32 %v5518, %v5560
    %v5562 = vpop.f32.mrb[0].mxu0
    %v5563 = vadd.f32 %v5520, %v5562
    %5564 = vdwg.mxu0
    %5565 = vmatprep.subr.bf16.mxu0 %v3063
    %5566 = vmatpush1.bf16.msra.mxu0 %v3062
    %5567 = vmatprep.subr.bf16.mxu0 %v3082
    %5568 = vmatpush1.bf16.msra.mxu0 %v3081
    %5569 = vmatprep.subr.bf16.mxu0 %v3101
    %5570 = vmatpush1.bf16.msra.mxu0 %v3100
    %5571 = vmatprep.subr.bf16.mxu0 %v3120
    %5572 = vmatpush1.bf16.msra.mxu0 %v3119
    %5573 = vmatprep.subr.bf16.mxu0 %v3139
    %5574 = vmatpush1.bf16.msra.mxu0 %v3138
    %5575 = vmatprep.subr.bf16.mxu0 %v3158
    %5576 = vmatpush1.bf16.msra.mxu0 %v3157
    %5577 = vmatprep.subr.bf16.mxu0 %v3177
    %5578 = vmatpush1.bf16.msra.mxu0 %v3176
    %5579 = vmatprep.subr.bf16.mxu0 %v3196
    %5580 = vmatpush1.bf16.msra.mxu0 %v3195
    %5581 = vmatprep.subr.bf16.mxu0 %v3215
    %5582 = vmatpush1.bf16.msra.mxu0 %v3214
    %5583 = vmatprep.subr.bf16.mxu0 %v3234
    %5584 = vmatpush1.bf16.msra.mxu0 %v3233
    %5585 = vmatprep.subr.bf16.mxu0 %v3253
    %5586 = vmatpush1.bf16.msra.mxu0 %v3252
    %5587 = vmatprep.subr.bf16.mxu0 %v3272
    %5588 = vmatpush1.bf16.msra.mxu0 %v3271
    %5589 = vmatprep.subr.bf16.mxu0 %v3291
    %5590 = vmatpush1.bf16.msra.mxu0 %v3290
    %5591 = vmatprep.subr.bf16.mxu0 %v3310
    %5592 = vmatpush1.bf16.msra.mxu0 %v3309
    %5593 = vmatprep.subr.bf16.mxu0 %v3329
    %5594 = vmatpush1.bf16.msra.mxu0 %v3328
    %5595 = vmatprep.subr.bf16.mxu0 %v3348
    %5596 = vmatpush1.bf16.msra.mxu0 %v3347
    %5597 = vmatprep.mubr.bf16.mxu0 %v863
    %5598 = vmatmul.mubr.bf16.gmra.mrb[0].mxu0 %v862
    %v5599 = vpop.f32.mrb[0].mxu0
    %v5600 = vadd.f32 0.0, %v5599
    %v5601 = vpop.f32.mrb[0].mxu0
    %v5602 = vadd.f32 0.0, %v5601
    %v5603 = vpop.f32.mrb[0].mxu0
    %v5604 = vadd.f32 0.0, %v5603
    %v5605 = vpop.f32.mrb[0].mxu0
    %v5606 = vadd.f32 0.0, %v5605
    %5607 = vdwg.mxu0
    %5608 = vmatprep.subr.bf16.mxu0 %v3367
    %5609 = vmatpush1.bf16.msra.mxu0 %v3366
    %5610 = vmatprep.subr.bf16.mxu0 %v3386
    %5611 = vmatpush1.bf16.msra.mxu0 %v3385
    %5612 = vmatprep.subr.bf16.mxu0 %v3405
    %5613 = vmatpush1.bf16.msra.mxu0 %v3404
    %5614 = vmatprep.subr.bf16.mxu0 %v3424
    %5615 = vmatpush1.bf16.msra.mxu0 %v3423
    %5616 = vmatprep.subr.bf16.mxu0 %v3443
    %5617 = vmatpush1.bf16.msra.mxu0 %v3442
    %5618 = vmatprep.subr.bf16.mxu0 %v3462
    %5619 = vmatpush1.bf16.msra.mxu0 %v3461
    %5620 = vmatprep.subr.bf16.mxu0 %v3481
    %5621 = vmatpush1.bf16.msra.mxu0 %v3480
    %5622 = vmatprep.subr.bf16.mxu0 %v3500
    %5623 = vmatpush1.bf16.msra.mxu0 %v3499
    %5624 = vmatprep.subr.bf16.mxu0 %v3519
    %5625 = vmatpush1.bf16.msra.mxu0 %v3518
    %5626 = vmatprep.subr.bf16.mxu0 %v3538
    %5627 = vmatpush1.bf16.msra.mxu0 %v3537
    %5628 = vmatprep.subr.bf16.mxu0 %v3557
    %5629 = vmatpush1.bf16.msra.mxu0 %v3556
    %5630 = vmatprep.subr.bf16.mxu0 %v3576
    %5631 = vmatpush1.bf16.msra.mxu0 %v3575
    %5632 = vmatprep.subr.bf16.mxu0 %v3595
    %5633 = vmatpush1.bf16.msra.mxu0 %v3594
    %5634 = vmatprep.subr.bf16.mxu0 %v3614
    %5635 = vmatpush1.bf16.msra.mxu0 %v3613
    %5636 = vmatprep.subr.bf16.mxu0 %v3633
    %5637 = vmatpush1.bf16.msra.mxu0 %v3632
    %5638 = vmatprep.subr.bf16.mxu0 %v3652
    %5639 = vmatpush1.bf16.msra.mxu0 %v3651
    %5640 = vmatprep.mubr.bf16.mxu0 %v865
    %5641 = vmatmul.mubr.bf16.gmra.mrb[0].mxu0 %v864
    %v5642 = vpop.f32.mrb[0].mxu0
    %v5643 = vadd.f32 %v5600, %v5642
    %v5644 = vpop.f32.mrb[0].mxu0
    %v5645 = vadd.f32 %v5602, %v5644
    %v5646 = vpop.f32.mrb[0].mxu0
    %v5647 = vadd.f32 %v5604, %v5646
    %v5648 = vpop.f32.mrb[0].mxu0
    %v5649 = vadd.f32 %v5606, %v5648
    %5650 = vdwg.mxu0
    %5651 = vmatprep.subr.bf16.mxu0 %v3671
    %5652 = vmatpush1.bf16.msra.mxu0 %v3670
    %5653 = vmatprep.subr.bf16.mxu0 %v3690
    %5654 = vmatpush1.bf16.msra.mxu0 %v3689
    %5655 = vmatprep.subr.bf16.mxu0 %v3709
    %5656 = vmatpush1.bf16.msra.mxu0 %v3708
    %5657 = vmatprep.subr.bf16.mxu0 %v3728
    %5658 = vmatpush1.bf16.msra.mxu0 %v3727
    %5659 = vmatprep.subr.bf16.mxu0 %v3747
    %5660 = vmatpush1.bf16.msra.mxu0 %v3746
    %5661 = vmatprep.subr.bf16.mxu0 %v4528
    %5662 = vmatpush1.bf16.msra.mxu0 %v4525
    %5663 = vmatprep.subr.bf16.mxu0 0
    %5664 = vmatpush1.bf16.msra.mxu0 0
    %5665 = vmatprep.subr.bf16.mxu0 0
    %5666 = vmatpush1.bf16.msra.mxu0 0
    %5667 = vmatprep.subr.bf16.mxu0 0
    %5668 = vmatpush1.bf16.msra.mxu0 0
    %5669 = vmatprep.subr.bf16.mxu0 0
    %5670 = vmatpush1.bf16.msra.mxu0 0
    %5671 = vmatprep.subr.bf16.mxu0 0
    %5672 = vmatpush1.bf16.msra.mxu0 0
    %5673 = vmatprep.subr.bf16.mxu0 0
    %5674 = vmatpush1.bf16.msra.mxu0 0
    %5675 = vmatprep.subr.bf16.mxu0 0
    %5676 = vmatpush1.bf16.msra.mxu0 0
    %5677 = vmatprep.subr.bf16.mxu0 0
    %5678 = vmatpush1.bf16.msra.mxu0 0
    %5679 = vmatprep.subr.bf16.mxu0 0
    %5680 = vmatpush1.bf16.msra.mxu0 0
    %5681 = vmatprep.subr.bf16.mxu0 0
    %5682 = vmatpush1.bf16.msra.mxu0 0
    %5683 = vmatprep.mubr.bf16.mxu0 0
    %5684 = vmatmul.mubr.bf16.gmra.mrb[0].mxu0 %v4473
    %v5685 = vpop.f32.mrb[0].mxu0
    %v5686 = vadd.f32 %v5643, %v5685
    %v5687 = vpop.f32.mrb[0].mxu0
    %v5688 = vadd.f32 %v5645, %v5687
    %v5689 = vpop.f32.mrb[0].mxu0
    %v5690 = vadd.f32 %v5647, %v5689
    %v5691 = vpop.f32.mrb[0].mxu0
    %v5692 = vadd.f32 %v5649, %v5691
    %5693 = vdwg.mxu0
    %5694 = vmatprep.subr.bf16.mxu0 0
    %5695 = vmatpush1.bf16.msra.mxu0 %v3064
    %5696 = vmatprep.subr.bf16.mxu0 0
    %5697 = vmatpush1.bf16.msra.mxu0 %v3083
    %5698 = vmatprep.subr.bf16.mxu0 0
    %5699 = vmatpush1.bf16.msra.mxu0 %v3102
    %5700 = vmatprep.subr.bf16.mxu0 0
    %5701 = vmatpush1.bf16.msra.mxu0 %v3121
    %5702 = vmatprep.subr.bf16.mxu0 0
    %5703 = vmatpush1.bf16.msra.mxu0 %v3140
    %5704 = vmatprep.subr.bf16.mxu0 0
    %5705 = vmatpush1.bf16.msra.mxu0 %v3159
    %5706 = vmatprep.subr.bf16.mxu0 0
    %5707 = vmatpush1.bf16.msra.mxu0 %v3178
    %5708 = vmatprep.subr.bf16.mxu0 0
    %5709 = vmatpush1.bf16.msra.mxu0 %v3197
    %5710 = vmatprep.subr.bf16.mxu0 0
    %5711 = vmatpush1.bf16.msra.mxu0 %v3216
    %5712 = vmatprep.subr.bf16.mxu0 0
    %5713 = vmatpush1.bf16.msra.mxu0 %v3235
    %5714 = vmatprep.subr.bf16.mxu0 0
    %5715 = vmatpush1.bf16.msra.mxu0 %v3254
    %5716 = vmatprep.subr.bf16.mxu0 0
    %5717 = vmatpush1.bf16.msra.mxu0 %v3273
    %5718 = vmatprep.subr.bf16.mxu0 0
    %5719 = vmatpush1.bf16.msra.mxu0 %v3292
    %5720 = vmatprep.subr.bf16.mxu0 0
    %5721 = vmatpush1.bf16.msra.mxu0 %v3311
    %5722 = vmatprep.subr.bf16.mxu0 0
    %5723 = vmatpush1.bf16.msra.mxu0 %v3330
    %5724 = vmatprep.subr.bf16.mxu0 0
    %5725 = vmatpush1.bf16.msra.mxu0 %v3349
    %5726 = vmatprep.mubr.bf16.mxu0 %v863
    %5727 = vmatmul.mubr.bf16.gmra.mrb[0].mxu0 %v862
    %v5728 = vpop.f32.mrb[0].mxu0
    %v5729 = vadd.f32 0.0, %v5728
    %v5730 = vpop.f32.mrb[0].mxu0
    %v5731 = vpop.f32.mrb[0].mxu0
    %v5732 = vadd.f32 0.0, %v5731
    %v5733 = vpop.f32.mrb[0].mxu0
    %5734 = vdwg.mxu0
    %5735 = vmatprep.subr.bf16.mxu0 0
    %5736 = vmatpush1.bf16.msra.mxu0 %v3368
    %5737 = vmatprep.subr.bf16.mxu0 0
    %5738 = vmatpush1.bf16.msra.mxu0 %v3387
    %5739 = vmatprep.subr.bf16.mxu0 0
    %5740 = vmatpush1.bf16.msra.mxu0 %v3406
    %5741 = vmatprep.subr.bf16.mxu0 0
    %5742 = vmatpush1.bf16.msra.mxu0 %v3425
    %5743 = vmatprep.subr.bf16.mxu0 0
    %5744 = vmatpush1.bf16.msra.mxu0 %v3444
    %5745 = vmatprep.subr.bf16.mxu0 0
    %5746 = vmatpush1.bf16.msra.mxu0 %v3463
    %5747 = vmatprep.subr.bf16.mxu0 0
    %5748 = vmatpush1.bf16.msra.mxu0 %v3482
    %5749 = vmatprep.subr.bf16.mxu0 0
    %5750 = vmatpush1.bf16.msra.mxu0 %v3501
    %5751 = vmatprep.subr.bf16.mxu0 0
    %5752 = vmatpush1.bf16.msra.mxu0 %v3520
    %5753 = vmatprep.subr.bf16.mxu0 0
    %5754 = vmatpush1.bf16.msra.mxu0 %v3539
    %5755 = vmatprep.subr.bf16.mxu0 0
    %5756 = vmatpush1.bf16.msra.mxu0 %v3558
    %5757 = vmatprep.subr.bf16.mxu0 0
    %5758 = vmatpush1.bf16.msra.mxu0 %v3577
    %5759 = vmatprep.subr.bf16.mxu0 0
    %5760 = vmatpush1.bf16.msra.mxu0 %v3596
    %5761 = vmatprep.subr.bf16.mxu0 0
    %5762 = vmatpush1.bf16.msra.mxu0 %v3615
    %5763 = vmatprep.subr.bf16.mxu0 0
    %5764 = vmatpush1.bf16.msra.mxu0 %v3634
    %5765 = vmatprep.subr.bf16.mxu0 0
    %5766 = vmatpush1.bf16.msra.mxu0 %v3653
    %5767 = vmatprep.mubr.bf16.mxu0 %v865
    %5768 = vmatmul.mubr.bf16.gmra.mrb[0].mxu0 %v864
    %v5769 = vpop.f32.mrb[0].mxu0
    %v5770 = vadd.f32 %v5729, %v5769
    %v5771 = vpop.f32.mrb[0].mxu0
    %v5772 = vpop.f32.mrb[0].mxu0
    %v5773 = vadd.f32 %v5732, %v5772
    %v5774 = vpop.f32.mrb[0].mxu0
    %5775 = vdwg.mxu0
    %5776 = vmatprep.subr.bf16.mxu0 0
    %5777 = vmatpush1.bf16.msra.mxu0 %v3672
    %5778 = vmatprep.subr.bf16.mxu0 0
    %5779 = vmatpush1.bf16.msra.mxu0 %v3691
    %5780 = vmatprep.subr.bf16.mxu0 0
    %5781 = vmatpush1.bf16.msra.mxu0 %v3710
    %5782 = vmatprep.subr.bf16.mxu0 0
    %5783 = vmatpush1.bf16.msra.mxu0 %v3729
    %5784 = vmatprep.subr.bf16.mxu0 0
    %5785 = vmatpush1.bf16.msra.mxu0 %v3748
    %5786 = vmatprep.subr.bf16.mxu0 0
    %5787 = vmatpush1.bf16.msra.mxu0 %v4531
    %5788 = vmatprep.subr.bf16.mxu0 0
    %5789 = vmatpush1.bf16.msra.mxu0 0
    %5790 = vmatprep.subr.bf16.mxu0 0
    %5791 = vmatpush1.bf16.msra.mxu0 0
    %5792 = vmatprep.subr.bf16.mxu0 0
    %5793 = vmatpush1.bf16.msra.mxu0 0
    %5794 = vmatprep.subr.bf16.mxu0 0
    %5795 = vmatpush1.bf16.msra.mxu0 0
    %5796 = vmatprep.subr.bf16.mxu0 0
    %5797 = vmatpush1.bf16.msra.mxu0 0
    %5798 = vmatprep.subr.bf16.mxu0 0
    %5799 = vmatpush1.bf16.msra.mxu0 0
    %5800 = vmatprep.subr.bf16.mxu0 0
    %5801 = vmatpush1.bf16.msra.mxu0 0
    %5802 = vmatprep.subr.bf16.mxu0 0
    %5803 = vmatpush1.bf16.msra.mxu0 0
    %5804 = vmatprep.subr.bf16.mxu0 0
    %5805 = vmatpush1.bf16.msra.mxu0 0
    %5806 = vmatprep.subr.bf16.mxu0 0
    %5807 = vmatpush1.bf16.msra.mxu0 0
    %5808 = vmatprep.mubr.bf16.mxu0 0
    %5809 = vmatmul.mubr.bf16.gmra.mrb[0].mxu0 %v4473
    %v5810 = vpop.f32.mrb[0].mxu0
    %v5811 = vadd.f32 %v5770, %v5810
    %v5812 = vpop.f32.mrb[0].mxu0
    %v5813 = vpop.f32.mrb[0].mxu0
    %v5814 = vadd.f32 %v5773, %v5813
    %v5815 = vpop.f32.mrb[0].mxu0
    %5816 = vdwg.mxu0
    %v5829 = vrot.slane %v4912, 1
    %v5830 = vrot.slane %v4914, 1
    %v5831 = vrot.slane %v5041, 1
    %v5832 = vrot.slane %v5043, 1
    %v5833 = vrot.slane %v5170, 1
    %v5834 = vrot.slane %v5172, 1
    %v5835 = vrot.slane %v4916, 1
    %v5836 = vrot.slane %v4918, 1
    %v5837 = vrot.slane %v5045, 1
    %v5838 = vrot.slane %v5047, 1
    %v5839 = vrot.slane %v5174, 1
    %v5840 = vrot.slane %v5176, 1
    %5841 = vrot.lane.b32.xlu0 %v5829, 40
    %v5842 = vpop.permute.xlu0 %5841
    %5843 = vrot.lane.b32.xlu0 %v5830, 40
    %v5844 = vpop.permute.xlu0 %5843
    %5845 = vrot.lane.b32.xlu0 %v5831, 40
    %v5846 = vpop.permute.xlu0 %5845
    %5847 = vrot.lane.b32.xlu0 %v5832, 40
    %v5848 = vpop.permute.xlu0 %5847
    %5849 = vrot.lane.b32.xlu0 %v5833, 40
    %v5850 = vpop.permute.xlu0 %5849
    %5851 = vrot.lane.b32.xlu0 %v5834, 40
    %v5852 = vpop.permute.xlu0 %5851
    %5853 = vrot.lane.b32.xlu0 %v5835, 40
    %v5854 = vpop.permute.xlu0 %5853
    %5855 = vrot.lane.b32.xlu0 %v5836, 40
    %v5856 = vpop.permute.xlu0 %5855
    %5857 = vrot.lane.b32.xlu0 %v5837, 40
    %v5858 = vpop.permute.xlu0 %5857
    %5859 = vrot.lane.b32.xlu0 %v5838, 40
    %v5860 = vpop.permute.xlu0 %5859
    %5861 = vrot.lane.b32.xlu0 %v5839, 40
    %v5862 = vpop.permute.xlu0 %5861
    %5863 = vrot.lane.b32.xlu0 %v5840, 40
    %v5864 = vpop.permute.xlu0 %5863
    %vm5865 = vcmask 326656
    %v5866 = vsel %vm5865, %v5842, %v5844
    %v5867 = vsel %vm5865, %v5844, %v5846
    %v5868 = vsel %vm5865, %v5846, %v5848
    %v5869 = vsel %vm5865, %v5848, %v5850
    %v5870 = vsel %vm5865, %v5850, %v5852
    %v5871 = vsel %vm5865, %v5854, %v5856
    %v5872 = vsel %vm5865, %v5856, %v5858
    %v5873 = vsel %vm5865, %v5858, %v5860
    %v5874 = vsel %vm5865, %v5860, %v5862
    %v5875 = vsel %vm5865, %v5862, %v5864
    %v5886 = vadd.f32 %v4654, %v5866
    %v5887 = vadd.f32 %v4656, %v5867
    %v5888 = vadd.f32 %v4783, %v5868
    %v5889 = vadd.f32 %v4785, %v5869
    %v5890 = vadd.f32 %v4912, %v5870
    %v5891 = vadd.f32 %v4658, %v5871
    %v5892 = vadd.f32 %v4660, %v5872
    %v5893 = vadd.f32 %v4787, %v5873
    %v5894 = vadd.f32 %v4789, %v5874
    %v5895 = vadd.f32 %v4916, %v5875
    %v5906 = vrot.slane %v5172, 2
    %v5907 = vrot.slane %v5299, 2
    %v5908 = vrot.slane %v5301, 2
    %v5909 = vrot.slane %v5428, 2
    %v5910 = vrot.slane %v5430, 2
    %v5911 = vrot.slane %v5557, 2
    %v5912 = vrot.slane %v5176, 2
    %v5913 = vrot.slane %v5303, 2
    %v5914 = vrot.slane %v5305, 2
    %v5915 = vrot.slane %v5432, 2
    %v5916 = vrot.slane %v5434, 2
    %v5917 = vrot.slane %v5561, 2
    %5918 = vrot.lane.b32.xlu0 %v5906, 80
    %v5919 = vpop.permute.xlu0 %5918
    %5920 = vrot.lane.b32.xlu0 %v5907, 80
    %v5921 = vpop.permute.xlu0 %5920
    %5922 = vrot.lane.b32.xlu0 %v5908, 80
    %v5923 = vpop.permute.xlu0 %5922
    %5924 = vrot.lane.b32.xlu0 %v5909, 80
    %v5925 = vpop.permute.xlu0 %5924
    %5926 = vrot.lane.b32.xlu0 %v5910, 80
    %v5927 = vpop.permute.xlu0 %5926
    %5928 = vrot.lane.b32.xlu0 %v5911, 80
    %v5929 = vpop.permute.xlu0 %5928
    %5930 = vrot.lane.b32.xlu0 %v5912, 80
    %v5931 = vpop.permute.xlu0 %5930
    %5932 = vrot.lane.b32.xlu0 %v5913, 80
    %v5933 = vpop.permute.xlu0 %5932
    %5934 = vrot.lane.b32.xlu0 %v5914, 80
    %v5935 = vpop.permute.xlu0 %5934
    %5936 = vrot.lane.b32.xlu0 %v5915, 80
    %v5937 = vpop.permute.xlu0 %5936
    %5938 = vrot.lane.b32.xlu0 %v5916, 80
    %v5939 = vpop.permute.xlu0 %5938
    %5940 = vrot.lane.b32.xlu0 %v5917, 80
    %v5941 = vpop.permute.xlu0 %5940
    %vm5942 = vcmask 654336
    %v5943 = vsel %vm5942, %v5919, %v5921
    %v5944 = vsel %vm5942, %v5921, %v5923
    %v5945 = vsel %vm5942, %v5923, %v5925
    %v5946 = vsel %vm5942, %v5925, %v5927
    %v5947 = vsel %vm5942, %v5927, %v5929
    %v5948 = vsel %vm5942, %v5931, %v5933
    %v5949 = vsel %vm5942, %v5933, %v5935
    %v5950 = vsel %vm5942, %v5935, %v5937
    %v5951 = vsel %vm5942, %v5937, %v5939
    %v5952 = vsel %vm5942, %v5939, %v5941
    %v5963 = vadd.f32 %v5886, %v5943
    %v5964 = vadd.f32 %v5887, %v5944
    %v5965 = vadd.f32 %v5888, %v5945
    %v5966 = vadd.f32 %v5889, %v5946
    %v5967 = vadd.f32 %v5890, %v5947
    %v5968 = vadd.f32 %v5891, %v5948
    %v5969 = vadd.f32 %v5892, %v5949
    %v5970 = vadd.f32 %v5893, %v5950
    %v5971 = vadd.f32 %v5894, %v5951
    %v5972 = vadd.f32 %v5895, %v5952
    %v5981 = vrot.slane %v5557, 3
    %v5982 = vrot.slane %v5559, 3
    %v5983 = vrot.slane %v5686, 3
    %v5984 = vrot.slane %v5688, 3
    %v5985 = vrot.slane %v5811, 3
    %v5986 = vrot.slane %v5561, 3
    %v5987 = vrot.slane %v5563, 3
    %v5988 = vrot.slane %v5690, 3
    %v5989 = vrot.slane %v5692, 3
    %v5990 = vrot.slane %v5814, 3
    %5991 = vrot.lane.b32.xlu0 %v5981, 120
    %v5992 = vpop.permute.xlu0 %5991
    %5993 = vrot.lane.b32.xlu0 %v5982, 120
    %v5994 = vpop.permute.xlu0 %5993
    %5995 = vrot.lane.b32.xlu0 %v5983, 120
    %v5996 = vpop.permute.xlu0 %5995
    %5997 = vrot.lane.b32.xlu0 %v5984, 120
    %v5998 = vpop.permute.xlu0 %5997
    %5999 = vrot.lane.b32.xlu0 %v5985, 120
    %v6000 = vpop.permute.xlu0 %5999
    %6001 = vrot.lane.b32.xlu0 %v5986, 120
    %v6002 = vpop.permute.xlu0 %6001
    %6003 = vrot.lane.b32.xlu0 %v5987, 120
    %v6004 = vpop.permute.xlu0 %6003
    %6005 = vrot.lane.b32.xlu0 %v5988, 120
    %v6006 = vpop.permute.xlu0 %6005
    %6007 = vrot.lane.b32.xlu0 %v5989, 120
    %v6008 = vpop.permute.xlu0 %6007
    %6009 = vrot.lane.b32.xlu0 %v5990, 120
    %v6010 = vpop.permute.xlu0 %6009
    %vm6011 = vcmask 982016
    %v6012 = vsel %vm6011, %v5992, %v5994
    %v6013 = vsel %vm6011, %v5994, %v5996
    %v6014 = vsel %vm6011, %v5996, %v5998
    %v6015 = vsel %vm6011, %v5998, %v6000
    %v6016 = vsel %vm6011, %v6002, %v6004
    %v6017 = vsel %vm6011, %v6004, %v6006
    %v6018 = vsel %vm6011, %v6006, %v6008
    %v6019 = vsel %vm6011, %v6008, %v6010
    %v6030 = vadd.f32 %v5963, %v6012
    %v6031 = vadd.f32 %v5964, %v6013
    %v6032 = vadd.f32 %v5965, %v6014
    %v6033 = vadd.f32 %v5966, %v6015
    %v6034 = vadd.f32 %v5967, %v6000
    %v6035 = vadd.f32 %v5968, %v6016
    %v6036 = vadd.f32 %v5969, %v6017
    %v6037 = vadd.f32 %v5970, %v6018
    %v6038 = vadd.f32 %v5971, %v6019
    %v6039 = vadd.f32 %v5972, %v6010
    %vm6040 = vcmask 1044480
    %v6041 = vsel %vm6040, %v6030, -inf
    %v6042 = vrot.slane %v6041, 4
    %v6043 = vmax.f32 %v6041, %v6042
    %v6044 = vrot.slane %v6043, 2
    %v6045 = vmax.f32 %v6043, %v6044
    %v6046 = vrot.slane %v6045, 1
    %v6047 = vmax.f32 %v6045, %v6046
    %v6048 = vsel %vm6040, %v6031, -inf
    %v6049 = vrot.slane %v6048, 4
    %v6050 = vmax.f32 %v6048, %v6049
    %v6051 = vrot.slane %v6050, 2
    %v6052 = vmax.f32 %v6050, %v6051
    %v6053 = vrot.slane %v6052, 1
    %v6054 = vmax.f32 %v6052, %v6053
    %v6055 = vsel %vm6040, %v6032, -inf
    %v6056 = vrot.slane %v6055, 4
    %v6057 = vmax.f32 %v6055, %v6056
    %v6058 = vrot.slane %v6057, 2
    %v6059 = vmax.f32 %v6057, %v6058
    %v6060 = vrot.slane %v6059, 1
    %v6061 = vmax.f32 %v6059, %v6060
    %v6062 = vsel %vm6040, %v6033, -inf
    %v6063 = vrot.slane %v6062, 4
    %v6064 = vmax.f32 %v6062, %v6063
    %v6065 = vrot.slane %v6064, 2
    %v6066 = vmax.f32 %v6064, %v6065
    %v6067 = vrot.slane %v6066, 1
    %v6068 = vmax.f32 %v6066, %v6067
    %vm6069 = vcmask 716800
    %v6070 = vsel %vm6069, %v6034, -inf
    %v6071 = vrot.slane %v6070, 4
    %v6072 = vmax.f32 %v6070, %v6071
    %v6073 = vrot.slane %v6072, 2
    %v6074 = vmax.f32 %v6072, %v6073
    %v6075 = vrot.slane %v6074, 1
    %v6076 = vmax.f32 %v6074, %v6075
    %v6077 = vsel %vm6040, %v6035, -inf
    %v6078 = vrot.slane %v6077, 4
    %v6079 = vmax.f32 %v6077, %v6078
    %v6080 = vrot.slane %v6079, 2
    %v6081 = vmax.f32 %v6079, %v6080
    %v6082 = vrot.slane %v6081, 1
    %v6083 = vmax.f32 %v6081, %v6082
    %v6084 = vsel %vm6040, %v6036, -inf
    %v6085 = vrot.slane %v6084, 4
    %v6086 = vmax.f32 %v6084, %v6085
    %v6087 = vrot.slane %v6086, 2
    %v6088 = vmax.f32 %v6086, %v6087
    %v6089 = vrot.slane %v6088, 1
    %v6090 = vmax.f32 %v6088, %v6089
    %v6091 = vsel %vm6040, %v6037, -inf
    %v6092 = vrot.slane %v6091, 4
    %v6093 = vmax.f32 %v6091, %v6092
    %v6094 = vrot.slane %v6093, 2
    %v6095 = vmax.f32 %v6093, %v6094
    %v6096 = vrot.slane %v6095, 1
    %v6097 = vmax.f32 %v6095, %v6096
    %v6098 = vsel %vm6040, %v6038, -inf
    %v6099 = vrot.slane %v6098, 4
    %v6100 = vmax.f32 %v6098, %v6099
    %v6101 = vrot.slane %v6100, 2
    %v6102 = vmax.f32 %v6100, %v6101
    %v6103 = vrot.slane %v6102, 1
    %v6104 = vmax.f32 %v6102, %v6103
    %v6105 = vsel %vm6069, %v6039, -inf
    %v6106 = vrot.slane %v6105, 4
    %v6107 = vmax.f32 %v6105, %v6106
    %v6108 = vrot.slane %v6107, 2
    %v6109 = vmax.f32 %v6107, %v6108
    %v6110 = vrot.slane %v6109, 1
    %v6111 = vmax.f32 %v6109, %v6110
    %v6112 = vld [vmem:[#allocation7] sm:$0x1f]
    %v6114 = vlaneseq
    %v6115 = vshrl.u32 %v6114, 7
    %v6116 = vsub.s32 0, %v6115
    %v6117 = vrot.slane %v6112, %v6116
    %v6118 = vlaneseq
    %v6119 = vshrl.u32 %v6118, 7
    %v6120 = vsub.s32 1, %v6119
    %v6121 = vrot.slane %v6112, %v6120
    %v6122 = vlaneseq
    %v6123 = vshrl.u32 %v6122, 7
    %v6124 = vsub.s32 2, %v6123
    %v6125 = vrot.slane %v6112, %v6124
    %v6126 = vlaneseq
    %v6127 = vshrl.u32 %v6126, 7
    %v6128 = vsub.s32 3, %v6127
    %v6129 = vrot.slane %v6112, %v6128
    %v6130 = vlaneseq
    %v6131 = vshrl.u32 %v6130, 7
    %v6132 = vsub.s32 4, %v6131
    %v6133 = vrot.slane %v6112, %v6132
    %v6139 = vadd.f32 %v6047, %v6117
    %v6140 = vadd.f32 %v6054, %v6121
    %v6141 = vadd.f32 %v6061, %v6125
    %v6142 = vadd.f32 %v6068, %v6129
    %v6143 = vadd.f32 %v6076, %v6133
    %v6144 = vadd.f32 %v6083, %v6117
    %v6145 = vadd.f32 %v6090, %v6121
    %v6146 = vadd.f32 %v6097, %v6125
    %v6147 = vadd.f32 %v6104, %v6129
    %v6148 = vadd.f32 %v6111, %v6133
    %v6149 = vmax.f32 %v6139, 0.0
    %v6150 = vmax.f32 %v6140, 0.0
    %v6151 = vmax.f32 %v6141, 0.0
    %v6152 = vmax.f32 %v6142, 0.0
    %v6153 = vmax.f32 %v6143, 0.0
    %v6154 = vmax.f32 %v6144, 0.0
    %v6155 = vmax.f32 %v6145, 0.0
    %v6156 = vmax.f32 %v6146, 0.0
    %v6157 = vmax.f32 %v6147, 0.0
    %v6158 = vmax.f32 %v6148, 0.0
    %v6159 = vld [vmem:[%s3] sm:$0xff]
    %v6160 = vld [vmem:[%s3 + $0x8] sm:$0xff]
    %v6161 = vld [vmem:[%s3 + $0x10] sm:$0xff]
    %v6162 = vld [vmem:[%s3 + $0x18] sm:$0xff]
    %v6163 = vld [vmem:[%s3 + $0x20] sm:$0xff]
    %v6164 = vld [vmem:[%s3 + $0x28] sm:$0xff]
    %v6165 = vld [vmem:[%s3 + $0x30] sm:$0xff]
    %v6166 = vld [vmem:[%s3 + $0x38] sm:$0xff]
    %v6167 = vld [vmem:[%s3 + $0x40] sm:$0xff]
    %v6168 = vld [vmem:[%s3 + $0x48] sm:$0xff]
    %v6169 = vld [vmem:[%s3 + $0x50] sm:$0xff]
    %v6170 = vld [vmem:[%s3 + $0x58] sm:$0xff]
    %v6171 = vld [vmem:[%s3 + $0x60] sm:$0xff]
    %v6172 = vld [vmem:[%s3 + $0x68] sm:$0xff]
    %v6173 = vld [vmem:[%s3 + $0x70] sm:$0xff]
    %v6174 = vld [vmem:[%s3 + $0x78] sm:$0xff]
    %v6175 = vld [vmem:[%s3 + $0x80] sm:$0xff]
    %v6176 = vld [vmem:[%s3 + $0x88] sm:$0xff]
    %v6177 = vld [vmem:[%s3 + $0x90] sm:$0xff]
    %v6178 = vld [vmem:[%s3 + $0x98] sm:$0xff]
    %v6179 = vld [vmem:[%s3 + $0xa0] sm:$0xff]
    %v6180 = vld [vmem:[%s3 + $0xa8] sm:$0xff]
    %v6181 = vld [vmem:[%s3 + $0xb0] sm:$0xff]
    %v6182 = vld [vmem:[%s3 + $0xb8] sm:$0xff]
    %v6183 = vld [vmem:[%s3 + $0xc0] sm:$0xff]
    %v6184 = vld [vmem:[%s3 + $0xc8] sm:$0xff]
    %v6185 = vld [vmem:[%s3 + $0xd0] sm:$0xff]
    %v6186 = vld [vmem:[%s3 + $0xd8] sm:$0xff]
    %v6187 = vld [vmem:[%s3 + $0xe0] sm:$0xff]
    %v6188 = vld [vmem:[%s3 + $0xe8] sm:$0xff]
    %v6189 = vld [vmem:[%s3 + $0xf0] sm:$0xff]
    %v6190 = vld [vmem:[%s3 + $0xf8] sm:$0xff]
    %v6191 = vld [vmem:[%s3 + $0x100] sm:$0xff]
    %v6192 = vld [vmem:[%s3 + $0x108] sm:$0xff]
    %v6193 = vld [vmem:[%s3 + $0x110] sm:$0xff]
    %v6194 = vld [vmem:[%s3 + $0x118] sm:$0xff]
    %v6195 = vld [vmem:[%s3 + $0x120] sm:$0xff]
    %v6196 = vld [vmem:[%s3 + $0x128] sm:$0xff]
    %v6197 = vld [vmem:[%s3 + $0x130] sm:$0xff]
    %v6198 = vld [vmem:[%s3 + $0x138] sm:$0xff]
    %v6199 = vld [vmem:[%s3 + $0x140] sm:$0xff]
    %v6200 = vld [vmem:[%s3 + $0x148] sm:$0xff]
    %v6201 = vld [vmem:[%s3 + $0x150] sm:$0xff]
    %v6202 = vld [vmem:[%s3 + $0x158] sm:$0xff]
    %v6203 = vld [vmem:[%s3 + $0x160] sm:$0xff]
    %v6204 = vld [vmem:[%s3 + $0x168] sm:$0xff]
    %v6205 = vld [vmem:[%s3 + $0x170] sm:$0xff]
    %v6206 = vld [vmem:[%s3 + $0x178] sm:$0xff]
    %v6207 = vld [vmem:[%s3 + $0x180] sm:$0xff]
    %v6208 = vld [vmem:[%s3 + $0x188] sm:$0xff]
    %v6209 = vld [vmem:[%s3 + $0x190] sm:$0xff]
    %v6210 = vld [vmem:[%s3 + $0x198] sm:$0xff]
    %v6211 = vld [vmem:[%s3 + $0x1a0] sm:$0xff]
    %v6212 = vld [vmem:[%s3 + $0x1a8] sm:$0xff]
    %v6213 = vld [vmem:[%s3 + $0x1b0] sm:$0xff]
    %v6214 = vld [vmem:[%s3 + $0x1b8] sm:$0xff]
    %v6215 = vld [vmem:[%s3 + $0x1c0] sm:$0xff]
    %v6216 = vld [vmem:[%s3 + $0x1c8] sm:$0xff]
    %v6217 = vld [vmem:[%s3 + $0x1d0] sm:$0xff]
    %v6218 = vld [vmem:[%s3 + $0x1d8] sm:$0xff]
    %v6219 = vld [vmem:[%s3 + $0x1e0] sm:$0xff]
    %v6220 = vld [vmem:[%s3 + $0x1e8] sm:$0xff]
    %v6221 = vld [vmem:[%s3 + $0x1f0] sm:$0xff]
    %v6222 = vld [vmem:[%s3 + $0x1f8] sm:$0xff]
    %v6223 = vld [vmem:[%s3 + $0x200] sm:$0xff]
    %v6224 = vld [vmem:[%s3 + $0x208] sm:$0xff]
    %v6225 = vld [vmem:[%s3 + $0x210] sm:$0xff]
    %v6226 = vld [vmem:[%s3 + $0x218] sm:$0xff]
    %v6227 = vld [vmem:[%s3 + $0x220] sm:$0xff]
    %v6228 = vld [vmem:[%s3 + $0x228] sm:$0xff]
    %v6229 = vld [vmem:[%s3 + $0x230] sm:$0xff]
    %v6230 = vld [vmem:[%s3 + $0x238] sm:$0xff]
    %v6231 = vld [vmem:[%s3 + $0x240] sm:$0xff]
    %v6232 = vld [vmem:[%s3 + $0x248] sm:$0xff]
    %v6233 = vld [vmem:[%s3 + $0x250] sm:$0xff]
    %v6234 = vld [vmem:[#allocation8] sm:$0x1]
    %v6236 = vlaneseq
    %v6237 = vshrl.u32 %v6236, 7
    %v6238 = vsub.s32 0, %v6237
    %v6239 = vrot.slane %v6234, %v6238
    %v6251 = vrot.slane %v6154, 7
    %vm6252 = vcmask 1041409
    %v6253 = vsel %vm6252, %v6251, %v6149
    %v6254 = vrot.slane %v6155, 7
    %v6255 = vsel %vm6252, %v6254, %v6150
    %v6256 = vrot.slane %v6156, 7
    %v6257 = vsel %vm6252, %v6256, %v6151
    %v6258 = vrot.slane %v6157, 7
    %v6259 = vsel %vm6252, %v6258, %v6152
    %v6260 = vrot.slane %v6158, 7
    %v6261 = vsel %vm6252, %v6260, %v6153
    %v6266 = vsel %vm4471, %v6261, 0
    %6268 = vmatprep.subr.mxu0 0.0
    %6269 = vmatpush1.msra.mxu0 %v6159
    %6270 = vmatprep.subr.mxu0 0.0
    %6271 = vmatpush1.msra.mxu0 %v6160
    %6272 = vmatprep.subr.mxu0 0.0
    %6273 = vmatpush1.msra.mxu0 %v6161
    %6274 = vmatprep.subr.mxu0 0.0
    %6275 = vmatpush1.msra.mxu0 %v6162
    %6276 = vmatprep.subr.mxu0 0.0
    %6277 = vmatpush1.msra.mxu0 %v6163
    %6278 = vmatprep.subr.mxu0 0.0
    %6279 = vmatpush1.msra.mxu0 %v6164
    %6280 = vmatprep.subr.mxu0 0.0
    %6281 = vmatpush1.msra.mxu0 %v6165
    %6282 = vmatprep.subr.mxu0 0.0
    %6283 = vmatpush1.msra.mxu0 %v6166
    %6284 = vmatprep.subr.mxu0 0.0
    %6285 = vmatpush1.msra.mxu0 %v6167
    %6286 = vmatprep.subr.mxu0 0.0
    %6287 = vmatpush1.msra.mxu0 %v6168
    %6288 = vmatprep.subr.mxu0 0.0
    %6289 = vmatpush1.msra.mxu0 %v6169
    %6290 = vmatprep.subr.mxu0 0.0
    %6291 = vmatpush1.msra.mxu0 %v6170
    %6292 = vmatprep.subr.mxu0 0.0
    %6293 = vmatpush1.msra.mxu0 %v6171
    %6294 = vmatprep.subr.mxu0 0.0
    %6295 = vmatpush1.msra.mxu0 %v6172
    %6296 = vmatprep.subr.mxu0 0.0
    %6297 = vmatpush1.msra.mxu0 %v6173
    %6298 = vmatprep.subr.mxu0 0.0
    %6299 = vmatpush1.msra.mxu0 %v6174
    %6300 = vmatprep.subr.mxu0 0.0
    %6301 = vmatpush1.msra.mxu0 %v6175
    %6302 = vmatprep.subr.mxu0 0.0
    %6303 = vmatpush1.msra.mxu0 %v6176
    %6304 = vmatprep.subr.mxu0 0.0
    %6305 = vmatpush1.msra.mxu0 %v6177
    %6306 = vmatprep.subr.mxu0 0.0
    %6307 = vmatpush1.msra.mxu0 %v6178
    %6308 = vmatprep.subr.mxu0 0.0
    %6309 = vmatpush1.msra.mxu0 %v6179
    %6310 = vmatprep.subr.mxu0 0.0
    %6311 = vmatpush1.msra.mxu0 %v6180
    %6312 = vmatprep.subr.mxu0 0.0
    %6313 = vmatpush1.msra.mxu0 %v6181
    %6314 = vmatprep.subr.mxu0 0.0
    %6315 = vmatpush1.msra.mxu0 %v6182
    %6316 = vmatprep.subr.mxu0 0.0
    %6317 = vmatpush1.msra.mxu0 %v6183
    %6318 = vmatprep.subr.mxu0 0.0
    %6319 = vmatpush1.msra.mxu0 %v6184
    %6320 = vmatprep.subr.mxu0 0.0
    %6321 = vmatpush1.msra.mxu0 %v6185
    %6322 = vmatprep.subr.mxu0 0.0
    %6323 = vmatpush1.msra.mxu0 %v6186
    %6324 = vmatprep.subr.mxu0 0.0
    %6325 = vmatpush1.msra.mxu0 %v6187
    %6326 = vmatprep.subr.mxu0 0.0
    %6327 = vmatpush1.msra.mxu0 %v6188
    %6328 = vmatprep.subr.mxu0 0.0
    %6329 = vmatpush1.msra.mxu0 %v6189
    %6330 = vmatprep.subr.mxu0 0.0
    %6331 = vmatpush1.msra.mxu0 %v6190
    %6332 = vmatprep.mubr.f32.mxu0 %v6255
    %6333 = vmatmul.mubr.f32.gmra.mrb[0].mxu0 %v6253
    %v6334 = vpop.f32.mrb[0].mxu0
    %v6335 = vadd.f32 %v6239, %v6334
    %v6336 = vpop.f32.mrb[0].mxu0
    %6337 = vdwg.mxu0
    %6338 = vmatprep.subr.mxu0 0.0
    %6339 = vmatpush1.msra.mxu0 %v6191
    %6340 = vmatprep.subr.mxu0 0.0
    %6341 = vmatpush1.msra.mxu0 %v6192
    %6342 = vmatprep.subr.mxu0 0.0
    %6343 = vmatpush1.msra.mxu0 %v6193
    %6344 = vmatprep.subr.mxu0 0.0
    %6345 = vmatpush1.msra.mxu0 %v6194
    %6346 = vmatprep.subr.mxu0 0.0
    %6347 = vmatpush1.msra.mxu0 %v6195
    %6348 = vmatprep.subr.mxu0 0.0
    %6349 = vmatpush1.msra.mxu0 %v6196
    %6350 = vmatprep.subr.mxu0 0.0
    %6351 = vmatpush1.msra.mxu0 %v6197
    %6352 = vmatprep.subr.mxu0 0.0
    %6353 = vmatpush1.msra.mxu0 %v6198
    %6354 = vmatprep.subr.mxu0 0.0
    %6355 = vmatpush1.msra.mxu0 %v6199
    %6356 = vmatprep.subr.mxu0 0.0
    %6357 = vmatpush1.msra.mxu0 %v6200
    %6358 = vmatprep.subr.mxu0 0.0
    %6359 = vmatpush1.msra.mxu0 %v6201
    %6360 = vmatprep.subr.mxu0 0.0
    %6361 = vmatpush1.msra.mxu0 %v6202
    %6362 = vmatprep.subr.mxu0 0.0
    %6363 = vmatpush1.msra.mxu0 %v6203
    %6364 = vmatprep.subr.mxu0 0.0
    %6365 = vmatpush1.msra.mxu0 %v6204
    %6366 = vmatprep.subr.mxu0 0.0
    %6367 = vmatpush1.msra.mxu0 %v6205
    %6368 = vmatprep.subr.mxu0 0.0
    %6369 = vmatpush1.msra.mxu0 %v6206
    %6370 = vmatprep.subr.mxu0 0.0
    %6371 = vmatpush1.msra.mxu0 %v6207
    %6372 = vmatprep.subr.mxu0 0.0
    %6373 = vmatpush1.msra.mxu0 %v6208
    %6374 = vmatprep.subr.mxu0 0.0
    %6375 = vmatpush1.msra.mxu0 %v6209
    %6376 = vmatprep.subr.mxu0 0.0
    %6377 = vmatpush1.msra.mxu0 %v6210
    %6378 = vmatprep.subr.mxu0 0.0
    %6379 = vmatpush1.msra.mxu0 %v6211
    %6380 = vmatprep.subr.mxu0 0.0
    %6381 = vmatpush1.msra.mxu0 %v6212
    %6382 = vmatprep.subr.mxu0 0.0
    %6383 = vmatpush1.msra.mxu0 %v6213
    %6384 = vmatprep.subr.mxu0 0.0
    %6385 = vmatpush1.msra.mxu0 %v6214
    %6386 = vmatprep.subr.mxu0 0.0
    %6387 = vmatpush1.msra.mxu0 %v6215
    %6388 = vmatprep.subr.mxu0 0.0
    %6389 = vmatpush1.msra.mxu0 %v6216
    %6390 = vmatprep.subr.mxu0 0.0
    %6391 = vmatpush1.msra.mxu0 %v6217
    %6392 = vmatprep.subr.mxu0 0.0
    %6393 = vmatpush1.msra.mxu0 %v6218
    %6394 = vmatprep.subr.mxu0 0.0
    %6395 = vmatpush1.msra.mxu0 %v6219
    %6396 = vmatprep.subr.mxu0 0.0
    %6397 = vmatpush1.msra.mxu0 %v6220
    %6398 = vmatprep.subr.mxu0 0.0
    %6399 = vmatpush1.msra.mxu0 %v6221
    %6400 = vmatprep.subr.mxu0 0.0
    %6401 = vmatpush1.msra.mxu0 %v6222
    %6402 = vmatprep.mubr.f32.mxu0 %v6259
    %6403 = vmatmul.mubr.f32.gmra.mrb[0].mxu0 %v6257
    %v6404 = vpop.f32.mrb[0].mxu0
    %v6405 = vadd.f32 %v6335, %v6404
    %v6406 = vpop.f32.mrb[0].mxu0
    %6407 = vdwg.mxu0
    %6408 = vmatprep.subr.mxu0 0.0
    %6409 = vmatpush1.msra.mxu0 %v6223
    %6410 = vmatprep.subr.mxu0 0.0
    %6411 = vmatpush1.msra.mxu0 %v6224
    %6412 = vmatprep.subr.mxu0 0.0
    %6413 = vmatpush1.msra.mxu0 %v6225
    %6414 = vmatprep.subr.mxu0 0.0
    %6415 = vmatpush1.msra.mxu0 %v6226
    %6416 = vmatprep.subr.mxu0 0.0
    %6417 = vmatpush1.msra.mxu0 %v6227
    %6418 = vmatprep.subr.mxu0 0.0
    %6419 = vmatpush1.msra.mxu0 %v6228
    %6420 = vmatprep.subr.mxu0 0.0
    %6421 = vmatpush1.msra.mxu0 %v6229
    %6422 = vmatprep.subr.mxu0 0.0
    %6423 = vmatpush1.msra.mxu0 %v6230
    %6424 = vmatprep.subr.mxu0 0.0
    %6425 = vmatpush1.msra.mxu0 %v6231
    %6426 = vmatprep.subr.mxu0 0.0
    %6427 = vmatpush1.msra.mxu0 %v6232
    %6428 = vmatprep.subr.mxu0 0.0
    %6429 = vmatpush1.msra.mxu0 %v6233
    %6430 = vmatprep.subr.mxu0 0.0
    %6431 = vmatpush1.msra.mxu0 0.0
    %6432 = vmatprep.subr.mxu0 0.0
    %6433 = vmatpush1.msra.mxu0 0.0
    %6434 = vmatprep.subr.mxu0 0.0
    %6435 = vmatpush1.msra.mxu0 0.0
    %6436 = vmatprep.subr.mxu0 0.0
    %6437 = vmatpush1.msra.mxu0 0.0
    %6438 = vmatprep.subr.mxu0 0.0
    %6439 = vmatpush1.msra.mxu0 0.0
    %6440 = vmatprep.subr.mxu0 0.0
    %6441 = vmatpush1.msra.mxu0 0.0
    %6442 = vmatprep.subr.mxu0 0.0
    %6443 = vmatpush1.msra.mxu0 0.0
    %6444 = vmatprep.subr.mxu0 0.0
    %6445 = vmatpush1.msra.mxu0 0.0
    %6446 = vmatprep.subr.mxu0 0.0
    %6447 = vmatpush1.msra.mxu0 0.0
    %6448 = vmatprep.subr.mxu0 0.0
    %6449 = vmatpush1.msra.mxu0 0.0
    %6450 = vmatprep.subr.mxu0 0.0
    %6451 = vmatpush1.msra.mxu0 0.0
    %6452 = vmatprep.subr.mxu0 0.0
    %6453 = vmatpush1.msra.mxu0 0.0
    %6454 = vmatprep.subr.mxu0 0.0
    %6455 = vmatpush1.msra.mxu0 0.0
    %6456 = vmatprep.subr.mxu0 0.0
    %6457 = vmatpush1.msra.mxu0 0.0
    %6458 = vmatprep.subr.mxu0 0.0
    %6459 = vmatpush1.msra.mxu0 0.0
    %6460 = vmatprep.subr.mxu0 0.0
    %6461 = vmatpush1.msra.mxu0 0.0
    %6462 = vmatprep.subr.mxu0 0.0
    %6463 = vmatpush1.msra.mxu0 0.0
    %6464 = vmatprep.subr.mxu0 0.0
    %6465 = vmatpush1.msra.mxu0 0.0
    %6466 = vmatprep.subr.mxu0 0.0
    %6467 = vmatpush1.msra.mxu0 0.0
    %6468 = vmatprep.subr.mxu0 0.0
    %6469 = vmatpush1.msra.mxu0 0.0
    %6470 = vmatprep.subr.mxu0 0.0
    %6471 = vmatpush1.msra.mxu0 0.0
    %6472 = vmatprep.mubr.f32.mxu0 0.0
    %6473 = vmatmul.mubr.f32.gmra.mrb[0].mxu0 %v6266
    %v6474 = vpop.f32.mrb[0].mxu0
    %v6475 = vadd.f32 %v6405, %v6474
    %v6476 = vpop.f32.mrb[0].mxu0
    %6477 = vdwg.mxu0
    %v6478 = vmax.f32 %v6475, 0.0
    %v6479 = vld [vmem:[%s5] sm:$0xff]
    %v6480 = vld [vmem:[#allocation10] sm:$0x1]
    %v6482 = vlaneseq
    %v6483 = vshrl.u32 %v6482, 7
    %v6484 = vsub.s32 0, %v6483
    %v6485 = vrot.slane %v6480, %v6484
    %vm6487 = vcmask 64512
    %v6489 = vsel %vm6487, %v6478, 0
    %6491 = vmatprep.subr.mxu0 0.0
    %6492 = vmatpush1.msra.mxu0 %v6479
    %6493 = vmatprep.subr.mxu0 0.0
    %6494 = vmatpush1.msra.mxu0 0.0
    %6495 = vmatprep.subr.mxu0 0.0
    %6496 = vmatpush1.msra.mxu0 0.0
    %6497 = vmatprep.subr.mxu0 0.0
    %6498 = vmatpush1.msra.mxu0 0.0
    %6499 = vmatprep.subr.mxu0 0.0
    %6500 = vmatpush1.msra.mxu0 0.0
    %6501 = vmatprep.subr.mxu0 0.0
    %6502 = vmatpush1.msra.mxu0 0.0
    %6503 = vmatprep.subr.mxu0 0.0
    %6504 = vmatpush1.msra.mxu0 0.0
    %6505 = vmatprep.subr.mxu0 0.0
    %6506 = vmatpush1.msra.mxu0 0.0
    %6507 = vmatprep.subr.mxu0 0.0
    %6508 = vmatpush1.msra.mxu0 0.0
    %6509 = vmatprep.subr.mxu0 0.0
    %6510 = vmatpush1.msra.mxu0 0.0
    %6511 = vmatprep.subr.mxu0 0.0
    %6512 = vmatpush1.msra.mxu0 0.0
    %6513 = vmatprep.subr.mxu0 0.0
    %6514 = vmatpush1.msra.mxu0 0.0
    %6515 = vmatprep.subr.mxu0 0.0
    %6516 = vmatpush1.msra.mxu0 0.0
    %6517 = vmatprep.subr.mxu0 0.0
    %6518 = vmatpush1.msra.mxu0 0.0
    %6519 = vmatprep.subr.mxu0 0.0
    %6520 = vmatpush1.msra.mxu0 0.0
    %6521 = vmatprep.subr.mxu0 0.0
    %6522 = vmatpush1.msra.mxu0 0.0
    %6523 = vmatprep.subr.mxu0 0.0
    %6524 = vmatpush1.msra.mxu0 0.0
    %6525 = vmatprep.subr.mxu0 0.0
    %6526 = vmatpush1.msra.mxu0 0.0
    %6527 = vmatprep.subr.mxu0 0.0
    %6528 = vmatpush1.msra.mxu0 0.0
    %6529 = vmatprep.subr.mxu0 0.0
    %6530 = vmatpush1.msra.mxu0 0.0
    %6531 = vmatprep.subr.mxu0 0.0
    %6532 = vmatpush1.msra.mxu0 0.0
    %6533 = vmatprep.subr.mxu0 0.0
    %6534 = vmatpush1.msra.mxu0 0.0
    %6535 = vmatprep.subr.mxu0 0.0
    %6536 = vmatpush1.msra.mxu0 0.0
    %6537 = vmatprep.subr.mxu0 0.0
    %6538 = vmatpush1.msra.mxu0 0.0
    %6539 = vmatprep.subr.mxu0 0.0
    %6540 = vmatpush1.msra.mxu0 0.0
    %6541 = vmatprep.subr.mxu0 0.0
    %6542 = vmatpush1.msra.mxu0 0.0
    %6543 = vmatprep.subr.mxu0 0.0
    %6544 = vmatpush1.msra.mxu0 0.0
    %6545 = vmatprep.subr.mxu0 0.0
    %6546 = vmatpush1.msra.mxu0 0.0
    %6547 = vmatprep.subr.mxu0 0.0
    %6548 = vmatpush1.msra.mxu0 0.0
    %6549 = vmatprep.subr.mxu0 0.0
    %6550 = vmatpush1.msra.mxu0 0.0
    %6551 = vmatprep.subr.mxu0 0.0
    %6552 = vmatpush1.msra.mxu0 0.0
    %6553 = vmatprep.subr.mxu0 0.0
    %6554 = vmatpush1.msra.mxu0 0.0
    %6555 = vmatprep.mubr.f32.mxu0 0.0
    %6556 = vmatmul.mubr.f32.gmra.mrb[0].mxu0 %v6489
    %v6557 = vpop.f32.mrb[0].mxu0
    %v6558 = vadd.f32 %v6485, %v6557
    %v6559 = vpop.f32.mrb[0].mxu0
    %6560 = vdwg.mxu0
    %vm6561 = vcmask 17408
    %6562 = vst.msk [vmem:[#allocation11] sm:$0x3] %vm6561, %v6558
    // Predicated region
    $region50: #{tpu_custom_call.1} parent=1 // pred_check
      _
    $region51: #{tpu_custom_call.1} parent=1 // pred_check_branch
      %6564 = sbr.rel (0) target = $region53
    $region52: #{tpu_custom_call.1} parent=1 // pred_region
      %s6566 = ssub.s32 32, 32
      %6567 = vsyncadd [#allocation4], %s6566
      %s6569 = sshll.u32 [#allocation11], 4
      %s6570 = int_to_ptr.vmem [resolvable:$true] %s6569
      %6572 = dma.vmem_to_hbm [thread:$0]  %s6570, 32, %s7, [#allocation4]
    $region53: #{tpu_custom_call.1} parent=1 // pred_fallthru
      _
    // Predicated region
    $region54: #{tpu_custom_call.1} parent=1 // pred_check
      _
    $region55: #{tpu_custom_call.1} parent=1 // pred_check_branch
      %6574 = sbr.rel (0) target = $region57
    $region56: #{tpu_custom_call.1} parent=1 // pred_region
      %6575 = dma.done [#allocation4], 32
    $region57: #{tpu_custom_call.1} parent=1 // pred_fallthru
      _
    %6576 = vsyncpa [#allocation3], 1
    %6577 = vsyncpa [#allocation6], 1
    %6578 = vsyncpa [#allocation9], 1
    %6579 = vsyncpa [#allocation4], 1

</llo_original>
